<compile_context>
chip_gen: v7x
topology: tpu7x:2x2x1
jax: 0.10.0
libtpu: 0.0.40
codegen_flags: <defaults>
</compile_context>

<pallas_src>
import jax
import jax.numpy as jnp
from jax import lax
from jax.experimental import pallas as pl
from jax.experimental.pallas import tpu as pltpu


# ----------------------------------------------------------------------------
# Generation-aware VMEM budget.
# ----------------------------------------------------------------------------
_VMEM_LIMIT_CACHE = None


def _vmem_limit_bytes():
    global _VMEM_LIMIT_CACHE
    if _VMEM_LIMIT_CACHE is None:
        cap = 128 * 1024 * 1024
        try:
            cap = int(pltpu.get_tpu_info().vmem_capacity_bytes)
        except Exception:  # pragma: no cover - conservative fallback
            pass
        _VMEM_LIMIT_CACHE = max(32 * 1024 * 1024,
                                min(int(0.75 * cap), 100 * 1024 * 1024))
    return _VMEM_LIMIT_CACHE


def _round8(x):
    return max(8, (int(x) // 8) * 8)


def _resident_spec(arr):
    """Weight stays at block (0, ..., 0) for every grid step (resident)."""
    nd = arr.ndim
    return pl.BlockSpec(arr.shape, lambda i, _nd=nd: (0,) * _nd)


# ----------------------------------------------------------------------------
# Kernel 1: single-layer GRU over the embedded question, returns last hidden.
# Matches torch.nn.GRU(batch_first=True) semantics with h0 = 0.
# Grid: one batch tile of TB rows per step; weights resident.
# ----------------------------------------------------------------------------
def _gru_kernel(x_ref, wih_ref, whh_ref, bih_ref, bhh_ref, h_out_ref, gi_ref):
    S, TB, E = x_ref.shape
    H = h_out_ref.shape[1]
    whh = whh_ref[...]                 # [H, 3H] bf16
    bhh = bhh_ref[...]                 # [1, 3H] f32

    # Hoist the input projection out of the recurrence: one well-shaped
    # [S*TB, E] x [E, 3H] bf16 MXU matmul instead of S tiny [TB, E] matmuls.
    gi_all = (jnp.dot(x_ref[...].reshape(S * TB, E), wih_ref[...],
                      preferred_element_type=jnp.float32)
              + bih_ref[...])
    gi_ref[...] = gi_all.reshape(S, TB, 3 * H).astype(jnp.bfloat16)

    def step(t, h):
        gi = gi_ref[t]                 # [TB, 3H] bf16, dynamic leading index
        gh = jnp.dot(h.astype(jnp.bfloat16), whh,
                     preferred_element_type=jnp.float32) + bhh
        i_r, i_z, i_n = gi[:, 0:H], gi[:, H:2 * H], gi[:, 2 * H:3 * H]
        h_r, h_z, h_n = gh[:, 0:H], gh[:, H:2 * H], gh[:, 2 * H:3 * H]
        r = jax.nn.sigmoid(i_r + h_r)
        z = jax.nn.sigmoid(i_z + h_z)
        n = jnp.tanh(i_n + r * h_n)
        return (1.0 - z) * n + z * h

    h0 = jnp.zeros((TB, H), jnp.float32)
    # Short fixed trip count -> fully unroll for LLO scheduler visibility.
    h_out_ref[...] = lax.fori_loop(0, S, step, h0, unroll=True)


# ----------------------------------------------------------------------------
# Kernel 2: fused attention + pooling + q_net/v_net + classifier head.
# Runs on one batch tile of size TB per grid step; weights stay resident.
# ----------------------------------------------------------------------------
def _head_kernel(v_ref, q_ref,
                 wvp_ref, bvp_ref, wqp_ref, bqp_ref, watt_ref, batt_ref,
                 wq_ref, bq_ref, wv_ref, bv_ref,
                 wc1_ref, bc1_ref, wc2_ref, bc2_ref,
                 logits_ref):
    v = v_ref[...]                     # [TB, N, D] bf16
    q16 = q_ref[...]                   # [TB, H]    bf16
    TB, N, D = v.shape
    H = q16.shape[1]

    # ---- v_att: FCNet(v) * FCNet(q) -> row-vector reduce -> softmax over N
    v_proj = jnp.maximum(
        jnp.dot(v.reshape(TB * N, D), wvp_ref[...],
                preferred_element_type=jnp.float32)
        + bvp_ref[...], 0.0).reshape(TB, N, H)
    q_proj = jnp.maximum(
        jnp.dot(q16, wqp_ref[...], preferred_element_type=jnp.float32)
        + bqp_ref[...], 0.0)
    # Fold the attention row vector into q_proj before broadcasting: saves a
    # full [TB, N, H] VPU multiply and temporary.
    q_att = q_proj * watt_ref[...]                               # [TB, H]
    att_logits = jnp.sum(v_proj * q_att[:, None, :], axis=-1) + batt_ref[0, 0]
    att_logits = att_logits - jnp.max(att_logits, axis=1, keepdims=True)
    att_exp = jnp.exp(att_logits)
    att = att_exp * pl.reciprocal(
        jnp.sum(att_exp, axis=1, keepdims=True), approx=True)    # [TB, N]

    # ---- v_emb = (att * v).sum(1)
    v_emb = jnp.sum(att[:, :, None] * v.astype(jnp.float32), axis=1)  # [TB, D]

    # ---- q_net / v_net (FC + ReLU), joint, classifier
    q_repr = jnp.maximum(
        jnp.dot(q16, wq_ref[...], preferred_element_type=jnp.float32)
        + bq_ref[...], 0.0)
    v_repr = jnp.maximum(
        jnp.dot(v_emb.astype(jnp.bfloat16), wv_ref[...],
                preferred_element_type=jnp.float32)
        + bv_ref[...], 0.0)
    joint_repr = q_repr * v_repr

    hidden = jnp.maximum(
        jnp.dot(joint_repr.astype(jnp.bfloat16), wc1_ref[...],
                preferred_element_type=jnp.float32)
        + bc1_ref[...], 0.0)
    logits_ref[...] = (
        jnp.dot(hidden.astype(jnp.bfloat16), wc2_ref[...],
                preferred_element_type=jnp.float32)
        + bc2_ref[...])


# ----------------------------------------------------------------------------
# Wrappers
# ----------------------------------------------------------------------------
def gru_last_hidden(x_sbe, wih, whh, bih, bhh, *, batch_tile=None):
    """x_sbe: [S, B, E] (bf16) -> last hidden [B, H] (f32)."""
    x_sbe = x_sbe.astype(jnp.bfloat16)
    S, B, E = x_sbe.shape
    H = whh.shape[0]
    limit = _vmem_limit_bytes()

    if batch_tile is None:
        per_row = S * (E + 3 * H) * 2          # bf16 x row + bf16 gi row
        batch_tile = min(128, max(8, (limit // 4) // max(per_row, 1)))
    B8 = ((B + 7) // 8) * 8
    TB = max(8, min(_round8(batch_tile), B8))

    pad = (-B) % TB
    if pad:
        x_sbe = jnp.pad(x_sbe, ((0, 0), (0, pad), (0, 0)))
    Bp = B + pad

    h = pl.pallas_call(
        _gru_kernel,
        out_shape=jax.ShapeDtypeStruct((Bp, H), jnp.float32),
        grid=(Bp // TB,),
        in_specs=[pl.BlockSpec((S, TB, E), lambda i: (0, i, 0)),
                  _resident_spec(wih), _resident_spec(whh),
                  _resident_spec(bih), _resident_spec(bhh)],
        out_specs=pl.BlockSpec((TB, H), lambda i: (i, 0)),
        scratch_shapes=[pltpu.VMEM((S, TB, 3 * H), jnp.bfloat16)],
        compiler_params=pltpu.CompilerParams(
            dimension_semantics=("parallel",),
            vmem_limit_bytes=limit),
    )(x_sbe, wih, whh, bih, bhh)
    return h[:B]


def vqa_head(v, q_emb, params, *, batch_tile=None):
    """v: [B, N, D], q_emb: [B, H] -> logits [B, num_ans] (f32)."""
    B, N, D = v.shape
    H = q_emb.shape[1]

    # Lane-dense logits: pad the answer dim to a multiple of 128.
    wc2, bc2 = params["wc2"], params["bc2"]
    A = wc2.shape[1]
    A_pad = ((A + 127) // 128) * 128
    if A_pad != A:
        wc2 = jnp.pad(wc2, ((0, 0), (0, A_pad - A)))
        bc2 = jnp.pad(bc2, ((0, 0), (0, A_pad - A)))

    limit = _vmem_limit_bytes()
    if batch_tile is None:
        # Cap TB so the double-buffered bf16 v tile stays within ~1/4 budget.
        per_row = N * D * 2
        batch_tile = min(256, max(8, (limit // 4) // max(2 * per_row, 1)))
    B8 = ((B + 7) // 8) * 8
    TB = max(8, min(_round8(batch_tile), B8))

    pad = (-B) % TB
    v16 = v.astype(jnp.bfloat16)
    q16 = q_emb.astype(jnp.bfloat16)
    if pad:
        v16 = jnp.pad(v16, ((0, pad), (0, 0), (0, 0)))
        q16 = jnp.pad(q16, ((0, pad), (0, 0)))
    Bp = B + pad

    w_args = [params["wvp"], params["bvp"], params["wqp"], params["bqp"],
              params["watt_row"], params["batt"],
              params["wq"], params["bq"], params["wv"], params["bv"],
              params["wc1"], params["bc1"], wc2, bc2]
    w_specs = [_resident_spec(a) for a in w_args]
    # batt is a true scalar -> SMEM (scalar read, no vreg load / lane extract).
    w_specs[5] = pl.BlockSpec(memory_space=pltpu.MemorySpace.SMEM)

    out = pl.pallas_call(
        _head_kernel,
        out_shape=jax.ShapeDtypeStruct((Bp, A_pad), jnp.float32),
        grid=(Bp // TB,),
        in_specs=[pl.BlockSpec((TB, N, D), lambda i: (i, 0, 0)),
                  pl.BlockSpec((TB, H), lambda i: (i, 0))] + w_specs,
        out_specs=pl.BlockSpec((TB, A_pad), lambda i: (i, 0)),
        compiler_params=pltpu.CompilerParams(
            dimension_semantics=("parallel",),
            vmem_limit_bytes=limit),
    )(v16, q16, *w_args)
    return out[:B, :A]


def base_model_forward(v, q_tokens, params, *, batch_tile=None,
                       gru_batch_tile=None):
    """v: [B, N, D] float, q_tokens: [B, S] int32 -> logits [B, num_ans]."""
    # w_emb: gather directly in seq-major [S, B, E] order (only the tiny int32
    # token matrix is transposed; no HBM round trip for the embedded sequence).
    w_emb_sbe = jnp.take(params["emb_table"], q_tokens.T, axis=0)  # [S, B, E]
    # q_emb: GRU, last hidden state (Pallas kernel, batch-gridded, seq-major).
    q_emb = gru_last_hidden(w_emb_sbe, params["wih"], params["whh"],
                            params["bih"], params["bhh"],
                            batch_tile=gru_batch_tile)
    # attention + pooling + q_net/v_net + classifier (fused, batch-gridded).
    return vqa_head(v, q_emb, params, batch_tile=batch_tile)


# ----------------------------------------------------------------------------
# Deterministic parameter init + demo
# ----------------------------------------------------------------------------
def init_params(key, vocab, emb_dim, hid, obj_dim, num_ans):
    ks = jax.random.split(key, 19)
    s = 0.1

    def w(k, shape, dtype=jnp.bfloat16):
        return (s * jax.random.normal(k, shape, dtype=jnp.float32)).astype(dtype)

    return {
        # w_emb (bf16 table -> bf16 GRU inputs)
        "emb_table": w(ks[0], (vocab, emb_dim)),
        # q_emb (GRU): input-major transposed bf16 weights, f32 2-D biases
        "wih": w(ks[1], (emb_dim, 3 * hid)),
        "whh": w(ks[2], (hid, 3 * hid)),
        "bih": w(ks[3], (1, 3 * hid), jnp.float32),
        "bhh": w(ks[4], (1, 3 * hid), jnp.float32),
        # v_att (attention projection stored as a [1, hid] row vector so the
        # logit is a VPU reduce, not a width-1 matmul)
        "wvp": w(ks[5], (obj_dim, hid)),
        "bvp": w(ks[6], (1, hid), jnp.float32),
        "wqp": w(ks[7], (hid, hid)),
        "bqp": w(ks[8], (1, hid), jnp.float32),
        "watt_row": w(ks[9], (1, hid), jnp.float32),
        "batt": w(ks[10], (1, 1), jnp.float32),
        # q_net / v_net
        "wq": w(ks[11], (hid, hid)),
        "bq": w(ks[12], (1, hid), jnp.float32),
        "wv": w(ks[13], (obj_dim, hid)),
        "bv": w(ks[14], (1, hid), jnp.float32),
        # classifier: hid -> 2*hid -> num_ans
        "wc1": w(ks[15], (hid, 2 * hid)),
        "bc1": w(ks[16], (1, 2 * hid), jnp.float32),
        "wc2": w(ks[17], (2 * hid, num_ans)),
        "bc2": w(ks[18], (1, num_ans), jnp.float32),
    }


if __name__ == "__main__":
    # Small but representative demo shapes. B=48 with explicit 16-row tiles
    # exercises the multi-step batch grids; A=100 exercises the answer-dim
    # padding (lane-dense logits) path.
    B, S = 48, 8          # batch, seq_length
    VOCAB, E = 64, 128    # vocab size, word-emb dim
    H = 128               # question / joint hidden dim
    N, D = 16, 128        # num_objs, obj_dim
    A = 100               # number of answer classes (non-128-multiple on purpose)

    key = jax.random.PRNGKey(0)
    k_p, k_v, k_q = jax.random.split(key, 3)
    params = init_params(k_p, VOCAB, E, H, D, A)

    v = jax.random.normal(k_v, (B, N, D), dtype=jnp.float32)
    q_tokens = jax.random.randint(k_q, (B, S), 0, VOCAB, dtype=jnp.int32)

    fwd = jax.jit(lambda v_, q_, p_: base_model_forward(
        v_, q_, p_, batch_tile=16, gru_batch_tile=16))
    logits = fwd(v, q_tokens, params)
    jax.block_until_ready(logits)

    assert logits.shape == (B, A) and logits.dtype == jnp.float32
    assert bool(jnp.all(jnp.isfinite(logits)))
    print("KERNEL_OK")
</pallas_src>

<mosaic_0001>
module attributes {stable_mosaic.version = 11 : i64} {
  func.func @_gru_kernel(%arg0: i32, %arg1: memref<8x16x128xbf16, #tpu.memory_space<vmem>>, %arg2: memref<128x384xbf16, #tpu.memory_space<vmem>>, %arg3: memref<128x384xbf16, #tpu.memory_space<vmem>>, %arg4: memref<1x384xf32, #tpu.memory_space<vmem>>, %arg5: memref<1x384xf32, #tpu.memory_space<vmem>>, %arg6: memref<16x128xf32, #tpu.memory_space<vmem>>, %arg7: memref<8x16x384xbf16, #tpu.memory_space<vmem>>) attributes {dimension_semantics = [#tpu.dimension_semantics<parallel>], iteration_bounds = array<i64: 3>, scalar_prefetch = 0 : i64, scratch_operands = 1 : i64, tpu.core_type = #tpu.core_type<tc>, window_params = [{transform_indices = @transform_0, window_bounds = array<i64: 8, 16, 128>}, {pipeline_mode = #tpu.pipeline_mode<synchronous>, transform_indices = @transform_1, window_bounds = array<i64: 128, 384>}, {pipeline_mode = #tpu.pipeline_mode<synchronous>, transform_indices = @transform_2, window_bounds = array<i64: 128, 384>}, {pipeline_mode = #tpu.pipeline_mode<synchronous>, transform_indices = @transform_3, window_bounds = array<i64: 1, 384>}, {pipeline_mode = #tpu.pipeline_mode<synchronous>, transform_indices = @transform_4, window_bounds = array<i64: 1, 384>}, {transform_indices = @transform_5, window_bounds = array<i64: 16, 128>}]} {
    %c0 = arith.constant 0 : index
    %c0_0 = arith.constant 0 : index
    %0 = vector.load %arg3[%c0, %c0_0] : memref<128x384xbf16, #tpu.memory_space<vmem>>, vector<128x384xbf16>
    %c0_1 = arith.constant 0 : index
    %c0_2 = arith.constant 0 : index
    %1 = vector.load %arg5[%c0_1, %c0_2] : memref<1x384xf32, #tpu.memory_space<vmem>>, vector<1x384xf32>
    %c0_3 = arith.constant 0 : index
    %c0_4 = arith.constant 0 : index
    %c0_5 = arith.constant 0 : index
    %2 = vector.load %arg1[%c0_3, %c0_4, %c0_5] : memref<8x16x128xbf16, #tpu.memory_space<vmem>>, vector<8x16x128xbf16>
    %3 = vector.shape_cast %2 : vector<8x16x128xbf16> to vector<128x128xbf16>
    %c0_6 = arith.constant 0 : index
    %c0_7 = arith.constant 0 : index
    %4 = vector.load %arg2[%c0_6, %c0_7] : memref<128x384xbf16, #tpu.memory_space<vmem>>, vector<128x384xbf16>
    %cst = arith.constant dense<0.000000e+00> : vector<128x384xf32>
    %5 = tpu.matmul %3, %4, %cst {dimension_numbers = #tpu.dot_dimension_numbers<[1], [0], [0], [1], [0, 0, 1, 1], [], []>} : vector<128x128xbf16>, vector<128x384xbf16>, vector<128x384xf32> -> vector<128x384xf32>
    %c0_8 = arith.constant 0 : index
    %c0_9 = arith.constant 0 : index
    %6 = vector.load %arg4[%c0_8, %c0_9] : memref<1x384xf32, #tpu.memory_space<vmem>>, vector<1x384xf32>
    %7 = vector.broadcast %6 : vector<1x384xf32> to vector<128x384xf32>
    %8 = arith.addf %5, %7 : vector<128x384xf32>
    %9 = vector.shape_cast %8 : vector<128x384xf32> to vector<8x16x384xf32>
    %10 = arith.truncf %9 : vector<8x16x384xf32> to vector<8x16x384xbf16>
    %c0_10 = arith.constant 0 : index
    %c0_11 = arith.constant 0 : index
    %c0_12 = arith.constant 0 : index
    %11 = vector.load %arg7[%c0_10, %c0_11, %c0_12] : memref<8x16x384xbf16, #tpu.memory_space<vmem>>, vector<8x16x384xbf16>
    tpu.vector_store %arg7[%c0_10, %c0_11, %c0_12], %10 {strides = array<i32>} : memref<8x16x384xbf16, #tpu.memory_space<vmem>>, vector<8x16x384xbf16>,
    %cst_13 = arith.constant 0.000000e+00 : f32
    %12 = vector.broadcast %cst_13 : f32 to vector<16x128xf32>
    %c0_i32 = arith.constant 0 : i32
    %13 = arith.index_cast %c0_i32 : i32 to index
    %c0_14 = arith.constant 0 : index
    %c0_15 = arith.constant 0 : index
    %14 = vector.load %arg7[%13, %c0_14, %c0_15] : memref<8x16x384xbf16, #tpu.memory_space<vmem>>, vector<1x16x384xbf16>
    %15 = vector.shape_cast %14 : vector<1x16x384xbf16> to vector<16x384xbf16>
    %16 = arith.truncf %12 : vector<16x128xf32> to vector<16x128xbf16>
    %cst_16 = arith.constant dense<0.000000e+00> : vector<16x384xf32>
    %17 = tpu.matmul %16, %0, %cst_16 {dimension_numbers = #tpu.dot_dimension_numbers<[1], [0], [0], [1], [0, 0, 1, 1], [], []>} : vector<16x128xbf16>, vector<128x384xbf16>, vector<16x384xf32> -> vector<16x384xf32>
    %18 = vector.broadcast %1 : vector<1x384xf32> to vector<16x384xf32>
    %19 = arith.addf %17, %18 : vector<16x384xf32>
    %20 = vector.extract_strided_slice %15 {offsets = [0, 0], sizes = [16, 128], strides = [1, 1]} : vector<16x384xbf16> to vector<16x128xbf16>
    %21 = vector.extract_strided_slice %15 {offsets = [0, 128], sizes = [16, 128], strides = [1, 1]} : vector<16x384xbf16> to vector<16x128xbf16>
    %22 = vector.extract_strided_slice %15 {offsets = [0, 256], sizes = [16, 128], strides = [1, 1]} : vector<16x384xbf16> to vector<16x128xbf16>
    %23 = vector.extract_strided_slice %19 {offsets = [0, 0], sizes = [16, 128], strides = [1, 1]} : vector<16x384xf32> to vector<16x128xf32>
    %24 = vector.extract_strided_slice %19 {offsets = [0, 128], sizes = [16, 128], strides = [1, 1]} : vector<16x384xf32> to vector<16x128xf32>
    %25 = vector.extract_strided_slice %19 {offsets = [0, 256], sizes = [16, 128], strides = [1, 1]} : vector<16x384xf32> to vector<16x128xf32>
    %26 = arith.extf %20 : vector<16x128xbf16> to vector<16x128xf32>
    %27 = arith.addf %26, %23 : vector<16x128xf32>
    %28 = arith.negf %27 : vector<16x128xf32>
    %29 = math.exp %28 : vector<16x128xf32>
    %cst_17 = arith.constant 1.000000e+00 : f32
    %30 = vector.broadcast %cst_17 : f32 to vector<16x128xf32>
    %31 = arith.addf %30, %29 : vector<16x128xf32>
    %32 = arith.divf %30, %31 : vector<16x128xf32>
    %33 = arith.extf %21 : vector<16x128xbf16> to vector<16x128xf32>
    %34 = arith.addf %33, %24 : vector<16x128xf32>
    %35 = arith.negf %34 : vector<16x128xf32>
    %36 = math.exp %35 : vector<16x128xf32>
    %cst_18 = arith.constant 1.000000e+00 : f32
    %37 = vector.broadcast %cst_18 : f32 to vector<16x128xf32>
    %38 = arith.addf %37, %36 : vector<16x128xf32>
    %39 = arith.divf %37, %38 : vector<16x128xf32>
    %40 = arith.mulf %32, %25 : vector<16x128xf32>
    %41 = arith.extf %22 : vector<16x128xbf16> to vector<16x128xf32>
    %42 = arith.addf %41, %40 : vector<16x128xf32>
    %43 = math.tanh %42 : vector<16x128xf32>
    %cst_19 = arith.constant 1.000000e+00 : f32
    %44 = vector.broadcast %cst_19 : f32 to vector<16x128xf32>
    %45 = arith.subf %44, %39 : vector<16x128xf32>
    %46 = arith.mulf %45, %43 : vector<16x128xf32>
    %47 = arith.mulf %39, %12 : vector<16x128xf32>
    %48 = arith.addf %46, %47 : vector<16x128xf32>
    %c1_i32 = arith.constant 1 : i32
    %49 = arith.index_cast %c1_i32 : i32 to index
    %c0_20 = arith.constant 0 : index
    %c0_21 = arith.constant 0 : index
    %50 = vector.load %arg7[%49, %c0_20, %c0_21] : memref<8x16x384xbf16, #tpu.memory_space<vmem>>, vector<1x16x384xbf16>
    %51 = vector.shape_cast %50 : vector<1x16x384xbf16> to vector<16x384xbf16>
    %52 = arith.truncf %48 : vector<16x128xf32> to vector<16x128xbf16>
    %cst_22 = arith.constant dense<0.000000e+00> : vector<16x384xf32>
    %53 = tpu.matmul %52, %0, %cst_22 {dimension_numbers = #tpu.dot_dimension_numbers<[1], [0], [0], [1], [0, 0, 1, 1], [], []>} : vector<16x128xbf16>, vector<128x384xbf16>, vector<16x384xf32> -> vector<16x384xf32>
    %54 = vector.broadcast %1 : vector<1x384xf32> to vector<16x384xf32>
    %55 = arith.addf %53, %54 : vector<16x384xf32>
    %56 = vector.extract_strided_slice %51 {offsets = [0, 0], sizes = [16, 128], strides = [1, 1]} : vector<16x384xbf16> to vector<16x128xbf16>
    %57 = vector.extract_strided_slice %51 {offsets = [0, 128], sizes = [16, 128], strides = [1, 1]} : vector<16x384xbf16> to vector<16x128xbf16>
    %58 = vector.extract_strided_slice %51 {offsets = [0, 256], sizes = [16, 128], strides = [1, 1]} : vector<16x384xbf16> to vector<16x128xbf16>
    %59 = vector.extract_strided_slice %55 {offsets = [0, 0], sizes = [16, 128], strides = [1, 1]} : vector<16x384xf32> to vector<16x128xf32>
    %60 = vector.extract_strided_slice %55 {offsets = [0, 128], sizes = [16, 128], strides = [1, 1]} : vector<16x384xf32> to vector<16x128xf32>
    %61 = vector.extract_strided_slice %55 {offsets = [0, 256], sizes = [16, 128], strides = [1, 1]} : vector<16x384xf32> to vector<16x128xf32>
    %62 = arith.extf %56 : vector<16x128xbf16> to vector<16x128xf32>
    %63 = arith.addf %62, %59 : vector<16x128xf32>
    %64 = arith.negf %63 : vector<16x128xf32>
    %65 = math.exp %64 : vector<16x128xf32>
    %cst_23 = arith.constant 1.000000e+00 : f32
    %66 = vector.broadcast %cst_23 : f32 to vector<16x128xf32>
    %67 = arith.addf %66, %65 : vector<16x128xf32>
    %68 = arith.divf %66, %67 : vector<16x128xf32>
    %69 = arith.extf %57 : vector<16x128xbf16> to vector<16x128xf32>
    %70 = arith.addf %69, %60 : vector<16x128xf32>
    %71 = arith.negf %70 : vector<16x128xf32>
    %72 = math.exp %71 : vector<16x128xf32>
    %cst_24 = arith.constant 1.000000e+00 : f32
    %73 = vector.broadcast %cst_24 : f32 to vector<16x128xf32>
    %74 = arith.addf %73, %72 : vector<16x128xf32>
    %75 = arith.divf %73, %74 : vector<16x128xf32>
    %76 = arith.mulf %68, %61 : vector<16x128xf32>
    %77 = arith.extf %58 : vector<16x128xbf16> to vector<16x128xf32>
    %78 = arith.addf %77, %76 : vector<16x128xf32>
    %79 = math.tanh %78 : vector<16x128xf32>
    %cst_25 = arith.constant 1.000000e+00 : f32
    %80 = vector.broadcast %cst_25 : f32 to vector<16x128xf32>
    %81 = arith.subf %80, %75 : vector<16x128xf32>
    %82 = arith.mulf %81, %79 : vector<16x128xf32>
    %83 = arith.mulf %75, %48 : vector<16x128xf32>
    %84 = arith.addf %82, %83 : vector<16x128xf32>
    %c2_i32 = arith.constant 2 : i32
    %85 = arith.index_cast %c2_i32 : i32 to index
    %c0_26 = arith.constant 0 : index
    %c0_27 = arith.constant 0 : index
    %86 = vector.load %arg7[%85, %c0_26, %c0_27] : memref<8x16x384xbf16, #tpu.memory_space<vmem>>, vector<1x16x384xbf16>
    %87 = vector.shape_cast %86 : vector<1x16x384xbf16> to vector<16x384xbf16>
    %88 = arith.truncf %84 : vector<16x128xf32> to vector<16x128xbf16>
    %cst_28 = arith.constant dense<0.000000e+00> : vector<16x384xf32>
    %89 = tpu.matmul %88, %0, %cst_28 {dimension_numbers = #tpu.dot_dimension_numbers<[1], [0], [0], [1], [0, 0, 1, 1], [], []>} : vector<16x128xbf16>, vector<128x384xbf16>, vector<16x384xf32> -> vector<16x384xf32>
    %90 = vector.broadcast %1 : vector<1x384xf32> to vector<16x384xf32>
    %91 = arith.addf %89, %90 : vector<16x384xf32>
    %92 = vector.extract_strided_slice %87 {offsets = [0, 0], sizes = [16, 128], strides = [1, 1]} : vector<16x384xbf16> to vector<16x128xbf16>
    %93 = vector.extract_strided_slice %87 {offsets = [0, 128], sizes = [16, 128], strides = [1, 1]} : vector<16x384xbf16> to vector<16x128xbf16>
    %94 = vector.extract_strided_slice %87 {offsets = [0, 256], sizes = [16, 128], strides = [1, 1]} : vector<16x384xbf16> to vector<16x128xbf16>
    %95 = vector.extract_strided_slice %91 {offsets = [0, 0], sizes = [16, 128], strides = [1, 1]} : vector<16x384xf32> to vector<16x128xf32>
    %96 = vector.extract_strided_slice %91 {offsets = [0, 128], sizes = [16, 128], strides = [1, 1]} : vector<16x384xf32> to vector<16x128xf32>
    %97 = vector.extract_strided_slice %91 {offsets = [0, 256], sizes = [16, 128], strides = [1, 1]} : vector<16x384xf32> to vector<16x128xf32>
    %98 = arith.extf %92 : vector<16x128xbf16> to vector<16x128xf32>
    %99 = arith.addf %98, %95 : vector<16x128xf32>
    %100 = arith.negf %99 : vector<16x128xf32>
    %101 = math.exp %100 : vector<16x128xf32>
    %cst_29 = arith.constant 1.000000e+00 : f32
    %102 = vector.broadcast %cst_29 : f32 to vector<16x128xf32>
    %103 = arith.addf %102, %101 : vector<16x128xf32>
    %104 = arith.divf %102, %103 : vector<16x128xf32>
    %105 = arith.extf %93 : vector<16x128xbf16> to vector<16x128xf32>
    %106 = arith.addf %105, %96 : vector<16x128xf32>
    %107 = arith.negf %106 : vector<16x128xf32>
    %108 = math.exp %107 : vector<16x128xf32>
    %cst_30 = arith.constant 1.000000e+00 : f32
    %109 = vector.broadcast %cst_30 : f32 to vector<16x128xf32>
    %110 = arith.addf %109, %108 : vector<16x128xf32>
    %111 = arith.divf %109, %110 : vector<16x128xf32>
    %112 = arith.mulf %104, %97 : vector<16x128xf32>
    %113 = arith.extf %94 : vector<16x128xbf16> to vector<16x128xf32>
    %114 = arith.addf %113, %112 : vector<16x128xf32>
    %115 = math.tanh %114 : vector<16x128xf32>
    %cst_31 = arith.constant 1.000000e+00 : f32
    %116 = vector.broadcast %cst_31 : f32 to vector<16x128xf32>
    %117 = arith.subf %116, %111 : vector<16x128xf32>
    %118 = arith.mulf %117, %115 : vector<16x128xf32>
    %119 = arith.mulf %111, %84 : vector<16x128xf32>
    %120 = arith.addf %118, %119 : vector<16x128xf32>
    %c3_i32 = arith.constant 3 : i32
    %121 = arith.index_cast %c3_i32 : i32 to index
    %c0_32 = arith.constant 0 : index
    %c0_33 = arith.constant 0 : index
    %122 = vector.load %arg7[%121, %c0_32, %c0_33] : memref<8x16x384xbf16, #tpu.memory_space<vmem>>, vector<1x16x384xbf16>
    %123 = vector.shape_cast %122 : vector<1x16x384xbf16> to vector<16x384xbf16>
    %124 = arith.truncf %120 : vector<16x128xf32> to vector<16x128xbf16>
    %cst_34 = arith.constant dense<0.000000e+00> : vector<16x384xf32>
    %125 = tpu.matmul %124, %0, %cst_34 {dimension_numbers = #tpu.dot_dimension_numbers<[1], [0], [0], [1], [0, 0, 1, 1], [], []>} : vector<16x128xbf16>, vector<128x384xbf16>, vector<16x384xf32> -> vector<16x384xf32>
    %126 = vector.broadcast %1 : vector<1x384xf32> to vector<16x384xf32>
    %127 = arith.addf %125, %126 : vector<16x384xf32>
    %128 = vector.extract_strided_slice %123 {offsets = [0, 0], sizes = [16, 128], strides = [1, 1]} : vector<16x384xbf16> to vector<16x128xbf16>
    %129 = vector.extract_strided_slice %123 {offsets = [0, 128], sizes = [16, 128], strides = [1, 1]} : vector<16x384xbf16> to vector<16x128xbf16>
    %130 = vector.extract_strided_slice %123 {offsets = [0, 256], sizes = [16, 128], strides = [1, 1]} : vector<16x384xbf16> to vector<16x128xbf16>
    %131 = vector.extract_strided_slice %127 {offsets = [0, 0], sizes = [16, 128], strides = [1, 1]} : vector<16x384xf32> to vector<16x128xf32>
    %132 = vector.extract_strided_slice %127 {offsets = [0, 128], sizes = [16, 128], strides = [1, 1]} : vector<16x384xf32> to vector<16x128xf32>
    %133 = vector.extract_strided_slice %127 {offsets = [0, 256], sizes = [16, 128], strides = [1, 1]} : vector<16x384xf32> to vector<16x128xf32>
    %134 = arith.extf %128 : vector<16x128xbf16> to vector<16x128xf32>
    %135 = arith.addf %134, %131 : vector<16x128xf32>
    %136 = arith.negf %135 : vector<16x128xf32>
    %137 = math.exp %136 : vector<16x128xf32>
    %cst_35 = arith.constant 1.000000e+00 : f32
    %138 = vector.broadcast %cst_35 : f32 to vector<16x128xf32>
    %139 = arith.addf %138, %137 : vector<16x128xf32>
    %140 = arith.divf %138, %139 : vector<16x128xf32>
    %141 = arith.extf %129 : vector<16x128xbf16> to vector<16x128xf32>
    %142 = arith.addf %141, %132 : vector<16x128xf32>
    %143 = arith.negf %142 : vector<16x128xf32>
    %144 = math.exp %143 : vector<16x128xf32>
    %cst_36 = arith.constant 1.000000e+00 : f32
    %145 = vector.broadcast %cst_36 : f32 to vector<16x128xf32>
    %146 = arith.addf %145, %144 : vector<16x128xf32>
    %147 = arith.divf %145, %146 : vector<16x128xf32>
    %148 = arith.mulf %140, %133 : vector<16x128xf32>
    %149 = arith.extf %130 : vector<16x128xbf16> to vector<16x128xf32>
    %150 = arith.addf %149, %148 : vector<16x128xf32>
    %151 = math.tanh %150 : vector<16x128xf32>
    %cst_37 = arith.constant 1.000000e+00 : f32
    %152 = vector.broadcast %cst_37 : f32 to vector<16x128xf32>
    %153 = arith.subf %152, %147 : vector<16x128xf32>
    %154 = arith.mulf %153, %151 : vector<16x128xf32>
    %155 = arith.mulf %147, %120 : vector<16x128xf32>
    %156 = arith.addf %154, %155 : vector<16x128xf32>
    %c4_i32 = arith.constant 4 : i32
    %157 = arith.index_cast %c4_i32 : i32 to index
    %c0_38 = arith.constant 0 : index
    %c0_39 = arith.constant 0 : index
    %158 = vector.load %arg7[%157, %c0_38, %c0_39] : memref<8x16x384xbf16, #tpu.memory_space<vmem>>, vector<1x16x384xbf16>
    %159 = vector.shape_cast %158 : vector<1x16x384xbf16> to vector<16x384xbf16>
    %160 = arith.truncf %156 : vector<16x128xf32> to vector<16x128xbf16>
    %cst_40 = arith.constant dense<0.000000e+00> : vector<16x384xf32>
    %161 = tpu.matmul %160, %0, %cst_40 {dimension_numbers = #tpu.dot_dimension_numbers<[1], [0], [0], [1], [0, 0, 1, 1], [], []>} : vector<16x128xbf16>, vector<128x384xbf16>, vector<16x384xf32> -> vector<16x384xf32>
    %162 = vector.broadcast %1 : vector<1x384xf32> to vector<16x384xf32>
    %163 = arith.addf %161, %162 : vector<16x384xf32>
    %164 = vector.extract_strided_slice %159 {offsets = [0, 0], sizes = [16, 128], strides = [1, 1]} : vector<16x384xbf16> to vector<16x128xbf16>
    %165 = vector.extract_strided_slice %159 {offsets = [0, 128], sizes = [16, 128], strides = [1, 1]} : vector<16x384xbf16> to vector<16x128xbf16>
    %166 = vector.extract_strided_slice %159 {offsets = [0, 256], sizes = [16, 128], strides = [1, 1]} : vector<16x384xbf16> to vector<16x128xbf16>
    %167 = vector.extract_strided_slice %163 {offsets = [0, 0], sizes = [16, 128], strides = [1, 1]} : vector<16x384xf32> to vector<16x128xf32>
    %168 = vector.extract_strided_slice %163 {offsets = [0, 128], sizes = [16, 128], strides = [1, 1]} : vector<16x384xf32> to vector<16x128xf32>
    %169 = vector.extract_strided_slice %163 {offsets = [0, 256], sizes = [16, 128], strides = [1, 1]} : vector<16x384xf32> to vector<16x128xf32>
    %170 = arith.extf %164 : vector<16x128xbf16> to vector<16x128xf32>
    %171 = arith.addf %170, %167 : vector<16x128xf32>
    %172 = arith.negf %171 : vector<16x128xf32>
    %173 = math.exp %172 : vector<16x128xf32>
    %cst_41 = arith.constant 1.000000e+00 : f32
    %174 = vector.broadcast %cst_41 : f32 to vector<16x128xf32>
    %175 = arith.addf %174, %173 : vector<16x128xf32>
    %176 = arith.divf %174, %175 : vector<16x128xf32>
    %177 = arith.extf %165 : vector<16x128xbf16> to vector<16x128xf32>
    %178 = arith.addf %177, %168 : vector<16x128xf32>
    %179 = arith.negf %178 : vector<16x128xf32>
    %180 = math.exp %179 : vector<16x128xf32>
    %cst_42 = arith.constant 1.000000e+00 : f32
    %181 = vector.broadcast %cst_42 : f32 to vector<16x128xf32>
    %182 = arith.addf %181, %180 : vector<16x128xf32>
    %183 = arith.divf %181, %182 : vector<16x128xf32>
    %184 = arith.mulf %176, %169 : vector<16x128xf32>
    %185 = arith.extf %166 : vector<16x128xbf16> to vector<16x128xf32>
    %186 = arith.addf %185, %184 : vector<16x128xf32>
    %187 = math.tanh %186 : vector<16x128xf32>
    %cst_43 = arith.constant 1.000000e+00 : f32
    %188 = vector.broadcast %cst_43 : f32 to vector<16x128xf32>
    %189 = arith.subf %188, %183 : vector<16x128xf32>
    %190 = arith.mulf %189, %187 : vector<16x128xf32>
    %191 = arith.mulf %183, %156 : vector<16x128xf32>
    %192 = arith.addf %190, %191 : vector<16x128xf32>
    %c5_i32 = arith.constant 5 : i32
    %193 = arith.index_cast %c5_i32 : i32 to index
    %c0_44 = arith.constant 0 : index
    %c0_45 = arith.constant 0 : index
    %194 = vector.load %arg7[%193, %c0_44, %c0_45] : memref<8x16x384xbf16, #tpu.memory_space<vmem>>, vector<1x16x384xbf16>
    %195 = vector.shape_cast %194 : vector<1x16x384xbf16> to vector<16x384xbf16>
    %196 = arith.truncf %192 : vector<16x128xf32> to vector<16x128xbf16>
    %cst_46 = arith.constant dense<0.000000e+00> : vector<16x384xf32>
    %197 = tpu.matmul %196, %0, %cst_46 {dimension_numbers = #tpu.dot_dimension_numbers<[1], [0], [0], [1], [0, 0, 1, 1], [], []>} : vector<16x128xbf16>, vector<128x384xbf16>, vector<16x384xf32> -> vector<16x384xf32>
    %198 = vector.broadcast %1 : vector<1x384xf32> to vector<16x384xf32>
    %199 = arith.addf %197, %198 : vector<16x384xf32>
    %200 = vector.extract_strided_slice %195 {offsets = [0, 0], sizes = [16, 128], strides = [1, 1]} : vector<16x384xbf16> to vector<16x128xbf16>
    %201 = vector.extract_strided_slice %195 {offsets = [0, 128], sizes = [16, 128], strides = [1, 1]} : vector<16x384xbf16> to vector<16x128xbf16>
    %202 = vector.extract_strided_slice %195 {offsets = [0, 256], sizes = [16, 128], strides = [1, 1]} : vector<16x384xbf16> to vector<16x128xbf16>
    %203 = vector.extract_strided_slice %199 {offsets = [0, 0], sizes = [16, 128], strides = [1, 1]} : vector<16x384xf32> to vector<16x128xf32>
    %204 = vector.extract_strided_slice %199 {offsets = [0, 128], sizes = [16, 128], strides = [1, 1]} : vector<16x384xf32> to vector<16x128xf32>
    %205 = vector.extract_strided_slice %199 {offsets = [0, 256], sizes = [16, 128], strides = [1, 1]} : vector<16x384xf32> to vector<16x128xf32>
    %206 = arith.extf %200 : vector<16x128xbf16> to vector<16x128xf32>
    %207 = arith.addf %206, %203 : vector<16x128xf32>
    %208 = arith.negf %207 : vector<16x128xf32>
    %209 = math.exp %208 : vector<16x128xf32>
    %cst_47 = arith.constant 1.000000e+00 : f32
    %210 = vector.broadcast %cst_47 : f32 to vector<16x128xf32>
    %211 = arith.addf %210, %209 : vector<16x128xf32>
    %212 = arith.divf %210, %211 : vector<16x128xf32>
    %213 = arith.extf %201 : vector<16x128xbf16> to vector<16x128xf32>
    %214 = arith.addf %213, %204 : vector<16x128xf32>
    %215 = arith.negf %214 : vector<16x128xf32>
    %216 = math.exp %215 : vector<16x128xf32>
    %cst_48 = arith.constant 1.000000e+00 : f32
    %217 = vector.broadcast %cst_48 : f32 to vector<16x128xf32>
    %218 = arith.addf %217, %216 : vector<16x128xf32>
    %219 = arith.divf %217, %218 : vector<16x128xf32>
    %220 = arith.mulf %212, %205 : vector<16x128xf32>
    %221 = arith.extf %202 : vector<16x128xbf16> to vector<16x128xf32>
    %222 = arith.addf %221, %220 : vector<16x128xf32>
    %223 = math.tanh %222 : vector<16x128xf32>
    %cst_49 = arith.constant 1.000000e+00 : f32
    %224 = vector.broadcast %cst_49 : f32 to vector<16x128xf32>
    %225 = arith.subf %224, %219 : vector<16x128xf32>
    %226 = arith.mulf %225, %223 : vector<16x128xf32>
    %227 = arith.mulf %219, %192 : vector<16x128xf32>
    %228 = arith.addf %226, %227 : vector<16x128xf32>
    %c6_i32 = arith.constant 6 : i32
    %229 = arith.index_cast %c6_i32 : i32 to index
    %c0_50 = arith.constant 0 : index
    %c0_51 = arith.constant 0 : index
    %230 = vector.load %arg7[%229, %c0_50, %c0_51] : memref<8x16x384xbf16, #tpu.memory_space<vmem>>, vector<1x16x384xbf16>
    %231 = vector.shape_cast %230 : vector<1x16x384xbf16> to vector<16x384xbf16>
    %232 = arith.truncf %228 : vector<16x128xf32> to vector<16x128xbf16>
    %cst_52 = arith.constant dense<0.000000e+00> : vector<16x384xf32>
    %233 = tpu.matmul %232, %0, %cst_52 {dimension_numbers = #tpu.dot_dimension_numbers<[1], [0], [0], [1], [0, 0, 1, 1], [], []>} : vector<16x128xbf16>, vector<128x384xbf16>, vector<16x384xf32> -> vector<16x384xf32>
    %234 = vector.broadcast %1 : vector<1x384xf32> to vector<16x384xf32>
    %235 = arith.addf %233, %234 : vector<16x384xf32>
    %236 = vector.extract_strided_slice %231 {offsets = [0, 0], sizes = [16, 128], strides = [1, 1]} : vector<16x384xbf16> to vector<16x128xbf16>
    %237 = vector.extract_strided_slice %231 {offsets = [0, 128], sizes = [16, 128], strides = [1, 1]} : vector<16x384xbf16> to vector<16x128xbf16>
    %238 = vector.extract_strided_slice %231 {offsets = [0, 256], sizes = [16, 128], strides = [1, 1]} : vector<16x384xbf16> to vector<16x128xbf16>
    %239 = vector.extract_strided_slice %235 {offsets = [0, 0], sizes = [16, 128], strides = [1, 1]} : vector<16x384xf32> to vector<16x128xf32>
    %240 = vector.extract_strided_slice %235 {offsets = [0, 128], sizes = [16, 128], strides = [1, 1]} : vector<16x384xf32> to vector<16x128xf32>
    %241 = vector.extract_strided_slice %235 {offsets = [0, 256], sizes = [16, 128], strides = [1, 1]} : vector<16x384xf32> to vector<16x128xf32>
    %242 = arith.extf %236 : vector<16x128xbf16> to vector<16x128xf32>
    %243 = arith.addf %242, %239 : vector<16x128xf32>
    %244 = arith.negf %243 : vector<16x128xf32>
    %245 = math.exp %244 : vector<16x128xf32>
    %cst_53 = arith.constant 1.000000e+00 : f32
    %246 = vector.broadcast %cst_53 : f32 to vector<16x128xf32>
    %247 = arith.addf %246, %245 : vector<16x128xf32>
    %248 = arith.divf %246, %247 : vector<16x128xf32>
    %249 = arith.extf %237 : vector<16x128xbf16> to vector<16x128xf32>
    %250 = arith.addf %249, %240 : vector<16x128xf32>
    %251 = arith.negf %250 : vector<16x128xf32>
    %252 = math.exp %251 : vector<16x128xf32>
    %cst_54 = arith.constant 1.000000e+00 : f32
    %253 = vector.broadcast %cst_54 : f32 to vector<16x128xf32>
    %254 = arith.addf %253, %252 : vector<16x128xf32>
    %255 = arith.divf %253, %254 : vector<16x128xf32>
    %256 = arith.mulf %248, %241 : vector<16x128xf32>
    %257 = arith.extf %238 : vector<16x128xbf16> to vector<16x128xf32>
    %258 = arith.addf %257, %256 : vector<16x128xf32>
    %259 = math.tanh %258 : vector<16x128xf32>
    %cst_55 = arith.constant 1.000000e+00 : f32
    %260 = vector.broadcast %cst_55 : f32 to vector<16x128xf32>
    %261 = arith.subf %260, %255 : vector<16x128xf32>
    %262 = arith.mulf %261, %259 : vector<16x128xf32>
    %263 = arith.mulf %255, %228 : vector<16x128xf32>
    %264 = arith.addf %262, %263 : vector<16x128xf32>
    %c7_i32 = arith.constant 7 : i32
    %265 = arith.index_cast %c7_i32 : i32 to index
    %c0_56 = arith.constant 0 : index
    %c0_57 = arith.constant 0 : index
    %266 = vector.load %arg7[%265, %c0_56, %c0_57] : memref<8x16x384xbf16, #tpu.memory_space<vmem>>, vector<1x16x384xbf16>
    %267 = vector.shape_cast %266 : vector<1x16x384xbf16> to vector<16x384xbf16>
    %268 = arith.truncf %264 : vector<16x128xf32> to vector<16x128xbf16>
    %cst_58 = arith.constant dense<0.000000e+00> : vector<16x384xf32>
    %269 = tpu.matmul %268, %0, %cst_58 {dimension_numbers = #tpu.dot_dimension_numbers<[1], [0], [0], [1], [0, 0, 1, 1], [], []>} : vector<16x128xbf16>, vector<128x384xbf16>, vector<16x384xf32> -> vector<16x384xf32>
    %270 = vector.broadcast %1 : vector<1x384xf32> to vector<16x384xf32>
    %271 = arith.addf %269, %270 : vector<16x384xf32>
    %272 = vector.extract_strided_slice %267 {offsets = [0, 0], sizes = [16, 128], strides = [1, 1]} : vector<16x384xbf16> to vector<16x128xbf16>
    %273 = vector.extract_strided_slice %267 {offsets = [0, 128], sizes = [16, 128], strides = [1, 1]} : vector<16x384xbf16> to vector<16x128xbf16>
    %274 = vector.extract_strided_slice %267 {offsets = [0, 256], sizes = [16, 128], strides = [1, 1]} : vector<16x384xbf16> to vector<16x128xbf16>
    %275 = vector.extract_strided_slice %271 {offsets = [0, 0], sizes = [16, 128], strides = [1, 1]} : vector<16x384xf32> to vector<16x128xf32>
    %276 = vector.extract_strided_slice %271 {offsets = [0, 128], sizes = [16, 128], strides = [1, 1]} : vector<16x384xf32> to vector<16x128xf32>
    %277 = vector.extract_strided_slice %271 {offsets = [0, 256], sizes = [16, 128], strides = [1, 1]} : vector<16x384xf32> to vector<16x128xf32>
    %278 = arith.extf %272 : vector<16x128xbf16> to vector<16x128xf32>
    %279 = arith.addf %278, %275 : vector<16x128xf32>
    %280 = arith.negf %279 : vector<16x128xf32>
    %281 = math.exp %280 : vector<16x128xf32>
    %cst_59 = arith.constant 1.000000e+00 : f32
    %282 = vector.broadcast %cst_59 : f32 to vector<16x128xf32>
    %283 = arith.addf %282, %281 : vector<16x128xf32>
    %284 = arith.divf %282, %283 : vector<16x128xf32>
    %285 = arith.extf %273 : vector<16x128xbf16> to vector<16x128xf32>
    %286 = arith.addf %285, %276 : vector<16x128xf32>
    %287 = arith.negf %286 : vector<16x128xf32>
    %288 = math.exp %287 : vector<16x128xf32>
    %cst_60 = arith.constant 1.000000e+00 : f32
    %289 = vector.broadcast %cst_60 : f32 to vector<16x128xf32>
    %290 = arith.addf %289, %288 : vector<16x128xf32>
    %291 = arith.divf %289, %290 : vector<16x128xf32>
    %292 = arith.mulf %284, %277 : vector<16x128xf32>
    %293 = arith.extf %274 : vector<16x128xbf16> to vector<16x128xf32>
    %294 = arith.addf %293, %292 : vector<16x128xf32>
    %295 = math.tanh %294 : vector<16x128xf32>
    %cst_61 = arith.constant 1.000000e+00 : f32
    %296 = vector.broadcast %cst_61 : f32 to vector<16x128xf32>
    %297 = arith.subf %296, %291 : vector<16x128xf32>
    %298 = arith.mulf %297, %295 : vector<16x128xf32>
    %299 = arith.mulf %291, %264 : vector<16x128xf32>
    %300 = arith.addf %298, %299 : vector<16x128xf32>
    %c8_i32 = arith.constant 8 : i32
    %c0_62 = arith.constant 0 : index
    %c0_63 = arith.constant 0 : index
    %301 = vector.load %arg6[%c0_62, %c0_63] : memref<16x128xf32, #tpu.memory_space<vmem>>, vector<16x128xf32>
    tpu.vector_store %arg6[%c0_62, %c0_63], %300 {strides = array<i32>} : memref<16x128xf32, #tpu.memory_space<vmem>>, vector<16x128xf32>,
    return
  }
  func.func @transform_0(%arg0: i32) -> (i32, i32, i32) {
    %c0_i32 = arith.constant 0 : i32
    %c0_i32_0 = arith.constant 0 : i32
    %c0_i32_1 = arith.constant 0 : i32
    return %c0_i32, %arg0, %c0_i32_0 : i32, i32, i32
  }
  func.func @transform_1(%arg0: i32) -> (i32, i32) {
    %c0_i32 = arith.constant 0 : i32
    %c0_i32_0 = arith.constant 0 : i32
    %c0_i32_1 = arith.constant 0 : i32
    return %c0_i32, %c0_i32_0 : i32, i32
  }
  func.func @transform_2(%arg0: i32) -> (i32, i32) {
    %c0_i32 = arith.constant 0 : i32
    %c0_i32_0 = arith.constant 0 : i32
    %c0_i32_1 = arith.constant 0 : i32
    return %c0_i32, %c0_i32_0 : i32, i32
  }
  func.func @transform_3(%arg0: i32) -> (i32, i32) {
    %c0_i32 = arith.constant 0 : i32
    %c0_i32_0 = arith.constant 0 : i32
    %c0_i32_1 = arith.constant 0 : i32
    return %c0_i32, %c0_i32_0 : i32, i32
  }
  func.func @transform_4(%arg0: i32) -> (i32, i32) {
    %c0_i32 = arith.constant 0 : i32
    %c0_i32_0 = arith.constant 0 : i32
    %c0_i32_1 = arith.constant 0 : i32
    return %c0_i32, %c0_i32_0 : i32, i32
  }
  func.func @transform_5(%arg0: i32) -> (i32, i32) {
    %c0_i32 = arith.constant 0 : i32
    %c0_i32_0 = arith.constant 0 : i32
    return %arg0, %c0_i32 : i32, i32
  }
}

module attributes {stable_mosaic.version = 11 : i64} {
  func.func @_head_kernel(%arg0: i32, %arg1: memref<16x16x128xbf16, #tpu.memory_space<vmem>>, %arg2: memref<16x128xbf16, #tpu.memory_space<vmem>>, %arg3: memref<128x128xbf16, #tpu.memory_space<vmem>>, %arg4: memref<1x128xf32, #tpu.memory_space<vmem>>, %arg5: memref<128x128xbf16, #tpu.memory_space<vmem>>, %arg6: memref<1x128xf32, #tpu.memory_space<vmem>>, %arg7: memref<1x128xf32, #tpu.memory_space<vmem>>, %arg8: memref<1x1xf32, #tpu.memory_space<smem>>, %arg9: memref<128x128xbf16, #tpu.memory_space<vmem>>, %arg10: memref<1x128xf32, #tpu.memory_space<vmem>>, %arg11: memref<128x128xbf16, #tpu.memory_space<vmem>>, %arg12: memref<1x128xf32, #tpu.memory_space<vmem>>, %arg13: memref<128x256xbf16, #tpu.memory_space<vmem>>, %arg14: memref<1x256xf32, #tpu.memory_space<vmem>>, %arg15: memref<256x128xbf16, #tpu.memory_space<vmem>>, %arg16: memref<1x128xf32, #tpu.memory_space<vmem>>, %arg17: memref<16x128xf32, #tpu.memory_space<vmem>>) attributes {dimension_semantics = [#tpu.dimension_semantics<parallel>], iteration_bounds = array<i64: 3>, scalar_prefetch = 0 : i64, scratch_operands = 0 : i64, tpu.core_type = #tpu.core_type<tc>, window_params = [{transform_indices = @transform_0, window_bounds = array<i64: 16, 16, 128>}, {transform_indices = @transform_1, window_bounds = array<i64: 16, 128>}, {pipeline_mode = #tpu.pipeline_mode<synchronous>, transform_indices = @transform_2, window_bounds = array<i64: 128, 128>}, {pipeline_mode = #tpu.pipeline_mode<synchronous>, transform_indices = @transform_3, window_bounds = array<i64: 1, 128>}, {pipeline_mode = #tpu.pipeline_mode<synchronous>, transform_indices = @transform_4, window_bounds = array<i64: 128, 128>}, {pipeline_mode = #tpu.pipeline_mode<synchronous>, transform_indices = @transform_5, window_bounds = array<i64: 1, 128>}, {pipeline_mode = #tpu.pipeline_mode<synchronous>, transform_indices = @transform_6, window_bounds = array<i64: 1, 128>}, {transform_indices = @transform_7, window_bounds = array<i64: 1, 1>}, {pipeline_mode = #tpu.pipeline_mode<synchronous>, transform_indices = @transform_8, window_bounds = array<i64: 128, 128>}, {pipeline_mode = #tpu.pipeline_mode<synchronous>, transform_indices = @transform_9, window_bounds = array<i64: 1, 128>}, {pipeline_mode = #tpu.pipeline_mode<synchronous>, transform_indices = @transform_10, window_bounds = array<i64: 128, 128>}, {pipeline_mode = #tpu.pipeline_mode<synchronous>, transform_indices = @transform_11, window_bounds = array<i64: 1, 128>}, {pipeline_mode = #tpu.pipeline_mode<synchronous>, transform_indices = @transform_12, window_bounds = array<i64: 128, 256>}, {pipeline_mode = #tpu.pipeline_mode<synchronous>, transform_indices = @transform_13, window_bounds = array<i64: 1, 256>}, {pipeline_mode = #tpu.pipeline_mode<synchronous>, transform_indices = @transform_14, window_bounds = array<i64: 256, 128>}, {pipeline_mode = #tpu.pipeline_mode<synchronous>, transform_indices = @transform_15, window_bounds = array<i64: 1, 128>}, {transform_indices = @transform_16, window_bounds = array<i64: 16, 128>}]} {
    %c0 = arith.constant 0 : index
    %c0_0 = arith.constant 0 : index
    %c0_1 = arith.constant 0 : index
    %0 = vector.load %arg1[%c0, %c0_0, %c0_1] : memref<16x16x128xbf16, #tpu.memory_space<vmem>>, vector<16x16x128xbf16>
    %c0_2 = arith.constant 0 : index
    %c0_3 = arith.constant 0 : index
    %1 = vector.load %arg2[%c0_2, %c0_3] : memref<16x128xbf16, #tpu.memory_space<vmem>>, vector<16x128xbf16>
    %2 = vector.shape_cast %0 : vector<16x16x128xbf16> to vector<256x128xbf16>
    %c0_4 = arith.constant 0 : index
    %c0_5 = arith.constant 0 : index
    %3 = vector.load %arg3[%c0_4, %c0_5] : memref<128x128xbf16, #tpu.memory_space<vmem>>, vector<128x128xbf16>
    %cst = arith.constant dense<0.000000e+00> : vector<256x128xf32>
    %4 = tpu.matmul %2, %3, %cst {dimension_numbers = #tpu.dot_dimension_numbers<[1], [0], [0], [1], [0, 0, 1, 1], [], []>} : vector<256x128xbf16>, vector<128x128xbf16>, vector<256x128xf32> -> vector<256x128xf32>
    %c0_6 = arith.constant 0 : index
    %c0_7 = arith.constant 0 : index
    %5 = vector.load %arg4[%c0_6, %c0_7] : memref<1x128xf32, #tpu.memory_space<vmem>>, vector<1x128xf32>
    %6 = vector.broadcast %5 : vector<1x128xf32> to vector<256x128xf32>
    %7 = arith.addf %4, %6 : vector<256x128xf32>
    %cst_8 = arith.constant 0.000000e+00 : f32
    %8 = vector.broadcast %cst_8 : f32 to vector<256x128xf32>
    %9 = arith.maximumf %7, %8 : vector<256x128xf32>
    %10 = vector.shape_cast %9 : vector<256x128xf32> to vector<16x16x128xf32>
    %c0_9 = arith.constant 0 : index
    %c0_10 = arith.constant 0 : index
    %11 = vector.load %arg5[%c0_9, %c0_10] : memref<128x128xbf16, #tpu.memory_space<vmem>>, vector<128x128xbf16>
    %cst_11 = arith.constant dense<0.000000e+00> : vector<16x128xf32>
    %12 = tpu.matmul %1, %11, %cst_11 {dimension_numbers = #tpu.dot_dimension_numbers<[1], [0], [0], [1], [0, 0, 1, 1], [], []>} : vector<16x128xbf16>, vector<128x128xbf16>, vector<16x128xf32> -> vector<16x128xf32>
    %c0_12 = arith.constant 0 : index
    %c0_13 = arith.constant 0 : index
    %13 = vector.load %arg6[%c0_12, %c0_13] : memref<1x128xf32, #tpu.memory_space<vmem>>, vector<1x128xf32>
    %14 = vector.broadcast %13 : vector<1x128xf32> to vector<16x128xf32>
    %15 = arith.addf %12, %14 : vector<16x128xf32>
    %cst_14 = arith.constant 0.000000e+00 : f32
    %16 = vector.broadcast %cst_14 : f32 to vector<16x128xf32>
    %17 = arith.maximumf %15, %16 : vector<16x128xf32>
    %c0_15 = arith.constant 0 : index
    %c0_16 = arith.constant 0 : index
    %18 = vector.load %arg7[%c0_15, %c0_16] : memref<1x128xf32, #tpu.memory_space<vmem>>, vector<1x128xf32>
    %19 = vector.broadcast %18 : vector<1x128xf32> to vector<16x128xf32>
    %20 = arith.mulf %17, %19 : vector<16x128xf32>
    %21 = vector.shape_cast %20 : vector<16x128xf32> to vector<16x1x128xf32>
    %22 = vector.broadcast %21 : vector<16x1x128xf32> to vector<16x16x128xf32>
    %23 = arith.mulf %10, %22 : vector<16x16x128xf32>
    %cst_17 = arith.constant dense<0.000000e+00> : vector<16x16xf32>
    %24 = vector.multi_reduction <add>, %23, %cst_17 [2] : vector<16x16x128xf32> to vector<16x16xf32>
    %c0_18 = arith.constant 0 : index
    %c0_19 = arith.constant 0 : index
    %25 = memref.load %arg8[%c0_18, %c0_19] : memref<1x1xf32, #tpu.memory_space<smem>>
    %26 = vector.broadcast %25 : f32 to vector<16x16xf32>
    %27 = arith.addf %24, %26 : vector<16x16xf32>
    %cst_20 = arith.constant dense<0xFF800000> : vector<16xf32>
    %28 = vector.multi_reduction <maximumf>, %27, %cst_20 [1] : vector<16x16xf32> to vector<16xf32>
    %29 = vector.shape_cast %28 : vector<16xf32> to vector<16x1xf32>
    %30 = vector.broadcast %29 : vector<16x1xf32> to vector<16x16xf32>
    %31 = arith.subf %27, %30 : vector<16x16xf32>
    %32 = math.exp %31 : vector<16x16xf32>
    %cst_21 = arith.constant dense<0.000000e+00> : vector<16xf32>
    %33 = vector.multi_reduction <add>, %32, %cst_21 [1] : vector<16x16xf32> to vector<16xf32>
    %34 = vector.shape_cast %33 : vector<16xf32> to vector<16x1xf32>
    %35 = tpu.reciprocal %34 {approx = true} : vector<16x1xf32> -> vector<16x1xf32>
    %36 = vector.broadcast %35 : vector<16x1xf32> to vector<16x16xf32>
    %37 = arith.mulf %32, %36 : vector<16x16xf32>
    %38 = vector.shape_cast %37 : vector<16x16xf32> to vector<16x16x1xf32>
    %39 = arith.extf %0 : vector<16x16x128xbf16> to vector<16x16x128xf32>
    %40 = vector.broadcast %38 : vector<16x16x1xf32> to vector<16x16x128xf32>
    %41 = arith.mulf %40, %39 : vector<16x16x128xf32>
    %cst_22 = arith.constant dense<0.000000e+00> : vector<16x128xf32>
    %42 = vector.multi_reduction <add>, %41, %cst_22 [1] : vector<16x16x128xf32> to vector<16x128xf32>
    %c0_23 = arith.constant 0 : index
    %c0_24 = arith.constant 0 : index
    %43 = vector.load %arg9[%c0_23, %c0_24] : memref<128x128xbf16, #tpu.memory_space<vmem>>, vector<128x128xbf16>
    %cst_25 = arith.constant dense<0.000000e+00> : vector<16x128xf32>
    %44 = tpu.matmul %1, %43, %cst_25 {dimension_numbers = #tpu.dot_dimension_numbers<[1], [0], [0], [1], [0, 0, 1, 1], [], []>} : vector<16x128xbf16>, vector<128x128xbf16>, vector<16x128xf32> -> vector<16x128xf32>
    %c0_26 = arith.constant 0 : index
    %c0_27 = arith.constant 0 : index
    %45 = vector.load %arg10[%c0_26, %c0_27] : memref<1x128xf32, #tpu.memory_space<vmem>>, vector<1x128xf32>
    %46 = vector.broadcast %45 : vector<1x128xf32> to vector<16x128xf32>
    %47 = arith.addf %44, %46 : vector<16x128xf32>
    %cst_28 = arith.constant 0.000000e+00 : f32
    %48 = vector.broadcast %cst_28 : f32 to vector<16x128xf32>
    %49 = arith.maximumf %47, %48 : vector<16x128xf32>
    %50 = arith.truncf %42 : vector<16x128xf32> to vector<16x128xbf16>
    %c0_29 = arith.constant 0 : index
    %c0_30 = arith.constant 0 : index
    %51 = vector.load %arg11[%c0_29, %c0_30] : memref<128x128xbf16, #tpu.memory_space<vmem>>, vector<128x128xbf16>
    %cst_31 = arith.constant dense<0.000000e+00> : vector<16x128xf32>
    %52 = tpu.matmul %50, %51, %cst_31 {dimension_numbers = #tpu.dot_dimension_numbers<[1], [0], [0], [1], [0, 0, 1, 1], [], []>} : vector<16x128xbf16>, vector<128x128xbf16>, vector<16x128xf32> -> vector<16x128xf32>
    %c0_32 = arith.constant 0 : index
    %c0_33 = arith.constant 0 : index
    %53 = vector.load %arg12[%c0_32, %c0_33] : memref<1x128xf32, #tpu.memory_space<vmem>>, vector<1x128xf32>
    %54 = vector.broadcast %53 : vector<1x128xf32> to vector<16x128xf32>
    %55 = arith.addf %52, %54 : vector<16x128xf32>
    %cst_34 = arith.constant 0.000000e+00 : f32
    %56 = vector.broadcast %cst_34 : f32 to vector<16x128xf32>
    %57 = arith.maximumf %55, %56 : vector<16x128xf32>
    %58 = arith.mulf %49, %57 : vector<16x128xf32>
    %59 = arith.truncf %58 : vector<16x128xf32> to vector<16x128xbf16>
    %c0_35 = arith.constant 0 : index
    %c0_36 = arith.constant 0 : index
    %60 = vector.load %arg13[%c0_35, %c0_36] : memref<128x256xbf16, #tpu.memory_space<vmem>>, vector<128x256xbf16>
    %cst_37 = arith.constant dense<0.000000e+00> : vector<16x256xf32>
    %61 = tpu.matmul %59, %60, %cst_37 {dimension_numbers = #tpu.dot_dimension_numbers<[1], [0], [0], [1], [0, 0, 1, 1], [], []>} : vector<16x128xbf16>, vector<128x256xbf16>, vector<16x256xf32> -> vector<16x256xf32>
    %c0_38 = arith.constant 0 : index
    %c0_39 = arith.constant 0 : index
    %62 = vector.load %arg14[%c0_38, %c0_39] : memref<1x256xf32, #tpu.memory_space<vmem>>, vector<1x256xf32>
    %63 = vector.broadcast %62 : vector<1x256xf32> to vector<16x256xf32>
    %64 = arith.addf %61, %63 : vector<16x256xf32>
    %cst_40 = arith.constant 0.000000e+00 : f32
    %65 = vector.broadcast %cst_40 : f32 to vector<16x256xf32>
    %66 = arith.maximumf %64, %65 : vector<16x256xf32>
    %67 = arith.truncf %66 : vector<16x256xf32> to vector<16x256xbf16>
    %c0_41 = arith.constant 0 : index
    %c0_42 = arith.constant 0 : index
    %68 = vector.load %arg15[%c0_41, %c0_42] : memref<256x128xbf16, #tpu.memory_space<vmem>>, vector<256x128xbf16>
    %cst_43 = arith.constant dense<0.000000e+00> : vector<16x128xf32>
    %69 = tpu.matmul %67, %68, %cst_43 {dimension_numbers = #tpu.dot_dimension_numbers<[1], [0], [0], [1], [0, 0, 1, 1], [], []>} : vector<16x256xbf16>, vector<256x128xbf16>, vector<16x128xf32> -> vector<16x128xf32>
    %c0_44 = arith.constant 0 : index
    %c0_45 = arith.constant 0 : index
    %70 = vector.load %arg16[%c0_44, %c0_45] : memref<1x128xf32, #tpu.memory_space<vmem>>, vector<1x128xf32>
    %71 = vector.broadcast %70 : vector<1x128xf32> to vector<16x128xf32>
    %72 = arith.addf %69, %71 : vector<16x128xf32>
    %c0_46 = arith.constant 0 : index
    %c0_47 = arith.constant 0 : index
    %73 = vector.load %arg17[%c0_46, %c0_47] : memref<16x128xf32, #tpu.memory_space<vmem>>, vector<16x128xf32>
    tpu.vector_store %arg17[%c0_46, %c0_47], %72 {strides = array<i32>} : memref<16x128xf32, #tpu.memory_space<vmem>>, vector<16x128xf32>,
    return
  }
  func.func @transform_0(%arg0: i32) -> (i32, i32, i32) {
    %c0_i32 = arith.constant 0 : i32
    %c0_i32_0 = arith.constant 0 : i32
    %c0_i32_1 = arith.constant 0 : i32
    return %arg0, %c0_i32, %c0_i32_0 : i32, i32, i32
  }
  func.func @transform_1(%arg0: i32) -> (i32, i32) {
    %c0_i32 = arith.constant 0 : i32
    %c0_i32_0 = arith.constant 0 : i32
    return %arg0, %c0_i32 : i32, i32
  }
  func.func @transform_2(%arg0: i32) -> (i32, i32) {
    %c0_i32 = arith.constant 0 : i32
    %c0_i32_0 = arith.constant 0 : i32
    %c0_i32_1 = arith.constant 0 : i32
    return %c0_i32, %c0_i32_0 : i32, i32
  }
  func.func @transform_3(%arg0: i32) -> (i32, i32) {
    %c0_i32 = arith.constant 0 : i32
    %c0_i32_0 = arith.constant 0 : i32
    %c0_i32_1 = arith.constant 0 : i32
    return %c0_i32, %c0_i32_0 : i32, i32
  }
  func.func @transform_4(%arg0: i32) -> (i32, i32) {
    %c0_i32 = arith.constant 0 : i32
    %c0_i32_0 = arith.constant 0 : i32
    %c0_i32_1 = arith.constant 0 : i32
    return %c0_i32, %c0_i32_0 : i32, i32
  }
  func.func @transform_5(%arg0: i32) -> (i32, i32) {
    %c0_i32 = arith.constant 0 : i32
    %c0_i32_0 = arith.constant 0 : i32
    %c0_i32_1 = arith.constant 0 : i32
    return %c0_i32, %c0_i32_0 : i32, i32
  }
  func.func @transform_6(%arg0: i32) -> (i32, i32) {
    %c0_i32 = arith.constant 0 : i32
    %c0_i32_0 = arith.constant 0 : i32
    %c0_i32_1 = arith.constant 0 : i32
    return %c0_i32, %c0_i32_0 : i32, i32
  }
  func.func @transform_7(%arg0: i32) -> (i32, i32) {
    %c0_i32 = arith.constant 0 : i32
    %c0_i32_0 = arith.constant 0 : i32
    %c0_i32_1 = arith.constant 0 : i32
    return %c0_i32, %c0_i32_0 : i32, i32
  }
  func.func @transform_8(%arg0: i32) -> (i32, i32) {
    %c0_i32 = arith.constant 0 : i32
    %c0_i32_0 = arith.constant 0 : i32
    %c0_i32_1 = arith.constant 0 : i32
    return %c0_i32, %c0_i32_0 : i32, i32
  }
  func.func @transform_9(%arg0: i32) -> (i32, i32) {
    %c0_i32 = arith.constant 0 : i32
    %c0_i32_0 = arith.constant 0 : i32
    %c0_i32_1 = arith.constant 0 : i32
    return %c0_i32, %c0_i32_0 : i32, i32
  }
  func.func @transform_10(%arg0: i32) -> (i32, i32) {
    %c0_i32 = arith.constant 0 : i32
    %c0_i32_0 = arith.constant 0 : i32
    %c0_i32_1 = arith.constant 0 : i32
    return %c0_i32, %c0_i32_0 : i32, i32
  }
  func.func @transform_11(%arg0: i32) -> (i32, i32) {
    %c0_i32 = arith.constant 0 : i32
    %c0_i32_0 = arith.constant 0 : i32
    %c0_i32_1 = arith.constant 0 : i32
    return %c0_i32, %c0_i32_0 : i32, i32
  }
  func.func @transform_12(%arg0: i32) -> (i32, i32) {
    %c0_i32 = arith.constant 0 : i32
    %c0_i32_0 = arith.constant 0 : i32
    %c0_i32_1 = arith.constant 0 : i32
    return %c0_i32, %c0_i32_0 : i32, i32
  }
  func.func @transform_13(%arg0: i32) -> (i32, i32) {
    %c0_i32 = arith.constant 0 : i32
    %c0_i32_0 = arith.constant 0 : i32
    %c0_i32_1 = arith.constant 0 : i32
    return %c0_i32, %c0_i32_0 : i32, i32
  }
  func.func @transform_14(%arg0: i32) -> (i32, i32) {
    %c0_i32 = arith.constant 0 : i32
    %c0_i32_0 = arith.constant 0 : i32
    %c0_i32_1 = arith.constant 0 : i32
    return %c0_i32, %c0_i32_0 : i32, i32
  }
  func.func @transform_15(%arg0: i32) -> (i32, i32) {
    %c0_i32 = arith.constant 0 : i32
    %c0_i32_0 = arith.constant 0 : i32
    %c0_i32_1 = arith.constant 0 : i32
    return %c0_i32, %c0_i32_0 : i32, i32
  }
  func.func @transform_16(%arg0: i32) -> (i32, i32) {
    %c0_i32 = arith.constant 0 : i32
    %c0_i32_0 = arith.constant 0 : i32
    return %arg0, %c0_i32 : i32, i32
  }
}

</mosaic_0001>

<llo_original>
// kernel: _lambda_.2
$region0: #{_lambda_.2}
  #allocation0 [shape = 'u32[]', space=smem, size = 0x4, offset = 0x4, fixed_abs, tag = 'smem constant byte address 0x4 - core index']
  #allocation1 [shape = 'u32[144,128]{1,0:T(1,128)}', space=vmem, size = 0x12000, scoped, tag = 'internal scratch']
  #allocation2 [shape = 'bf16[8,16,384]{2,1,0:T(16,128)(2,1)}', space=vmem, size = 0x18000, scoped, tag = 'scratch operand']
  #allocation13 [shape = 's32[]', space=sflag, size = 0x4, offset = 0, fixed_abs, tag = 'sflag constant byte address 0x0 - dummy sync flag']
  %s0 = inlined_call_operand.hbm [shape: bf16[8,48,128], index: 0, kind: input, shape index: {}]
  %s1 = inlined_call_operand.hbm [shape: bf16[128,384], index: 1, kind: input, shape index: {}]
  %s2 = inlined_call_operand.hbm [shape: bf16[128,384], index: 2, kind: input, shape index: {}]
  %s3 = inlined_call_operand.hbm [shape: f32[1,384], index: 3, kind: input, shape index: {}]
  %s4 = inlined_call_operand.hbm [shape: f32[1,384], index: 4, kind: input, shape index: {}]
  %s5 = inlined_call_operand.hbm [shape: f32[48,128], index: 5, kind: output, shape index: {}]
  %s6 = sld [smem:[#allocation0]]
  $region73: #{_lambda_.2} parent=0
    _
  %s8 = ssub.s32 1, %s6
  %s9 = scalar_select 0, %s8, %s6
  $region1: #{_lambda_.2} parent=0
    #allocation3 [shape = 'u8[65536]{0}', space=vmem, size = 0x10000, scoped, tag = 'input window, operand 0']
    #allocation4 [shape = 's32[2]{0}', space=sflag, size = 0x8, scoped, tag = 'scoped memory for _lambda_.2']
    #allocation5 [shape = 's32[2]{0}', space=sflag, size = 0x8, scoped, tag = 'scoped memory for _lambda_.2']
    #allocation6 [shape = 'u8[98304]{0}', space=vmem, size = 0x18000, scoped, tag = 'input window, operand 1, single buffered']
    #allocation7 [shape = 's32[1]{0}', space=sflag, size = 0x4, scoped, tag = 'scoped memory for _lambda_.2']
    #allocation8 [shape = 'u8[98304]{0}', space=vmem, size = 0x18000, scoped, tag = 'input window, operand 2, single buffered']
    #allocation9 [shape = 'u8[1536]{0}', space=vmem, size = 0x800, scoped, tag = 'input window, operand 3, single buffered']
    #allocation10 [shape = 's32[1]{0}', space=sflag, size = 0x4, scoped, tag = 'scoped memory for _lambda_.2']
    #allocation11 [shape = 'u8[1536]{0}', space=vmem, size = 0x800, scoped, tag = 'input window, operand 4, single buffered']
    #allocation12 [shape = 'u8[16384]{0}', space=vmem, size = 0x4000, scoped, tag = 'output window, operand 0']
    %10 = vsyncpa [#allocation4], 0
    %s11 = scalar_lea.sflag [#allocation4], 1
    %12 = vsyncpa %s11, 0
    %13 = vsyncpa [#allocation7], 0
    %14 = vsyncpa [#allocation10], 0
    %15 = vsyncpa [#allocation5], 0
    %s16 = scalar_lea.sflag [#allocation5], 1
    %17 = vsyncpa %s16, 0
    loop: start=0, step=1, limit=5
    $region2: #{_lambda_.2} parent=1 // loop_pre_header
      _
    $region3: #{_lambda_.2} parent=1 // loop_header
      %s19 = sphi 0, %s23
      %p20 = scmp.ge.s32.totalorder %s19, 5
      %s29 = sphi 0, %s31
      %s32 = sphi 0, %s29
      %s33 = sphi 0, %s32
      %s49 = sphi 0, %s33
      %s53 = sphi 0, %s53
      %s55 = sphi 0, %s53
      %s56 = sphi 0, %s55
      %s70 = sphi 0, %s56
      %s74 = sphi 0, %s74
      %s76 = sphi 0, %s74
      %s77 = sphi 0, %s76
      %s91 = sphi 0, %s77
      %s95 = sphi 0, %s95
      %s97 = sphi 0, %s95
      %s98 = sphi 0, %s97
      %s112 = sphi 0, %s98
      %s116 = sphi 0, %s116
      %s118 = sphi 0, %s116
      %s119 = sphi 0, %s118
      %s133 = sphi 0, %s119
      %s139 = sphi 0, %s141
      %s142 = sphi 0, %s139
      %s143 = sphi 0, %s142
      %s159 = sphi 0, %s143
    $region4: #{_lambda_.2} parent=1 // loop_header_branch
      %22 = sbr.rel (%p20) target = $region8
    $region5: #{_lambda_.2} parent=1 // loop_body
      %s24 = ssub.s32 %s19, 1
      %s25 = ssub.s32 %s19, 2
      %s26 = sadd.s32 %s19, 1
      %s27 = ssub.s32 %s19, %s26
      %p28 = scmp.eq.s32.totalorder %s27, 0
      %s30 = sadd.s32 %s29, 1
      %s31 = scalar_select %p28, %s29, %s30
      %p34 = pneg %p28
      %p35 = scmp.eq.s32.totalorder %s19, 2
      %p36 = por %p34, %p35
      %p37 = scmp.ne.s32.totalorder %s29, %s32
      %p38 = scmp.eq.s32.totalorder %s19, 0
      %p39 = por %p37, %p38
      %p40 = scmp.ne.s32.totalorder %s29, %s32
      %p41 = scmp.eq.s32.totalorder %s24, 2
      %p42 = por %p40, %p41
      %p43 = scmp.ne.s32.totalorder %s32, %s33
      %p44 = scmp.eq.s32.totalorder %s24, 0
      %p45 = por %p43, %p44
      %p46 = scmp.ne.s32.totalorder %s32, %s33
      %p47 = scmp.eq.s32.totalorder %s25, 2
      %p48 = por %p46, %p47
      %p50 = scmp.ne.s32.totalorder %s33, %s49
      %p51 = scmp.eq.s32.totalorder %s25, 0
      %p52 = por %p50, %p51
      %s54 = sadd.s32 %s53, 1
      %p57 = scmp.eq.s32.totalorder %s19, 2
      %p58 = scmp.ne.s32.totalorder %s53, %s55
      %p59 = scmp.eq.s32.totalorder %s19, 0
      %p60 = por %p58, %p59
      %p61 = scmp.ne.s32.totalorder %s53, %s55
      %p62 = scmp.eq.s32.totalorder %s24, 2
      %p63 = por %p61, %p62
      %p64 = scmp.ne.s32.totalorder %s55, %s56
      %p65 = scmp.eq.s32.totalorder %s24, 0
      %p66 = por %p64, %p65
      %p67 = scmp.ne.s32.totalorder %s55, %s56
      %p68 = scmp.eq.s32.totalorder %s25, 2
      %p69 = por %p67, %p68
      %p71 = scmp.ne.s32.totalorder %s56, %s70
      %p72 = scmp.eq.s32.totalorder %s25, 0
      %p73 = por %p71, %p72
      %s75 = sadd.s32 %s74, 1
      %p78 = scmp.eq.s32.totalorder %s19, 2
      %p79 = scmp.ne.s32.totalorder %s74, %s76
      %p80 = scmp.eq.s32.totalorder %s19, 0
      %p81 = por %p79, %p80
      %p82 = scmp.ne.s32.totalorder %s74, %s76
      %p83 = scmp.eq.s32.totalorder %s24, 2
      %p84 = por %p82, %p83
      %p85 = scmp.ne.s32.totalorder %s76, %s77
      %p86 = scmp.eq.s32.totalorder %s24, 0
      %p87 = por %p85, %p86
      %p88 = scmp.ne.s32.totalorder %s76, %s77
      %p89 = scmp.eq.s32.totalorder %s25, 2
      %p90 = por %p88, %p89
      %p92 = scmp.ne.s32.totalorder %s77, %s91
      %p93 = scmp.eq.s32.totalorder %s25, 0
      %p94 = por %p92, %p93
      %s96 = sadd.s32 %s95, 1
      %p99 = scmp.eq.s32.totalorder %s19, 2
      %p100 = scmp.ne.s32.totalorder %s95, %s97
      %p101 = scmp.eq.s32.totalorder %s19, 0
      %p102 = por %p100, %p101
      %p103 = scmp.ne.s32.totalorder %s95, %s97
      %p104 = scmp.eq.s32.totalorder %s24, 2
      %p105 = por %p103, %p104
      %p106 = scmp.ne.s32.totalorder %s97, %s98
      %p107 = scmp.eq.s32.totalorder %s24, 0
      %p108 = por %p106, %p107
      %p109 = scmp.ne.s32.totalorder %s97, %s98
      %p110 = scmp.eq.s32.totalorder %s25, 2
      %p111 = por %p109, %p110
      %p113 = scmp.ne.s32.totalorder %s98, %s112
      %p114 = scmp.eq.s32.totalorder %s25, 0
      %p115 = por %p113, %p114
      %s117 = sadd.s32 %s116, 1
      %p120 = scmp.eq.s32.totalorder %s19, 2
      %p121 = scmp.ne.s32.totalorder %s116, %s118
      %p122 = scmp.eq.s32.totalorder %s19, 0
      %p123 = por %p121, %p122
      %p124 = scmp.ne.s32.totalorder %s116, %s118
      %p125 = scmp.eq.s32.totalorder %s24, 2
      %p126 = por %p124, %p125
      %p127 = scmp.ne.s32.totalorder %s118, %s119
      %p128 = scmp.eq.s32.totalorder %s24, 0
      %p129 = por %p127, %p128
      %p130 = scmp.ne.s32.totalorder %s118, %s119
      %p131 = scmp.eq.s32.totalorder %s25, 2
      %p132 = por %p130, %p131
      %p134 = scmp.ne.s32.totalorder %s119, %s133
      %p135 = scmp.eq.s32.totalorder %s25, 0
      %p136 = por %p134, %p135
      %s137 = ssub.s32 %s19, %s26
      %p138 = scmp.eq.s32.totalorder %s137, 0
      %s140 = sadd.s32 %s139, 1
      %s141 = scalar_select %p138, %s139, %s140
      %p144 = pneg %p138
      %p145 = scmp.eq.s32.totalorder %s19, 2
      %p146 = por %p144, %p145
      %p147 = scmp.ne.s32.totalorder %s139, %s142
      %p148 = scmp.eq.s32.totalorder %s19, 0
      %p149 = por %p147, %p148
      %p150 = scmp.ne.s32.totalorder %s139, %s142
      %p151 = scmp.eq.s32.totalorder %s24, 2
      %p152 = por %p150, %p151
      %p153 = scmp.ne.s32.totalorder %s142, %s143
      %p154 = scmp.eq.s32.totalorder %s24, 0
      %p155 = por %p153, %p154
      %p156 = scmp.ne.s32.totalorder %s142, %s143
      %p157 = scmp.eq.s32.totalorder %s25, 2
      %p158 = por %p156, %p157
      %p160 = scmp.ne.s32.totalorder %s143, %s159
      %p161 = scmp.eq.s32.totalorder %s25, 0
      %p162 = por %p160, %p161
      %p163 = scmp.le.s32.totalorder 1, %s19
      %p164 = scmp.lt.s32.totalorder %s19, 4
      %p165 = pnand %p163, %p164
      %p166 = pneg %p165
      // Predicated region
      $region9: #{_lambda_.2} parent=5 // pred_check
        _
      $region10: #{_lambda_.2} parent=5 // pred_check_branch
        %168 = sbr.rel (%p165) target = $region12
      $region11: #{_lambda_.2} parent=5 // pred_region
        %s169 = ssub.s32 %s19, 1
        // Predicated region
        $region13: #{_lambda_.2} parent=11 // pred_check
          %p170 = pneg %p66
        $region14: #{_lambda_.2} parent=11 // pred_check_branch
          %172 = sbr.rel (%p170) target = $region16
        $region15: #{_lambda_.2} parent=11 // pred_region
          %s174 = ssub.s32 3072, 3072
          %175 = vsyncadd [#allocation7], %s174
          %s176 = sshll.u32 [#allocation6], 4
          %s177 = int_to_ptr.vmem [resolvable:$true] %s176
          %182 = dma.hbm_to_vmem [thread:$0]  %s1, 3072, %s177, [#allocation7], 192, 192, 12
        $region16: #{_lambda_.2} parent=11 // pred_fallthru
          _
        // Predicated region
        $region17: #{_lambda_.2} parent=11 // pred_check
          %p183 = pneg %p87
        $region18: #{_lambda_.2} parent=11 // pred_check_branch
          %185 = sbr.rel (%p183) target = $region20
        $region19: #{_lambda_.2} parent=11 // pred_region
          %s187 = ssub.s32 3072, 3072
          %188 = vsyncadd [#allocation7], %s187
          %s189 = sshll.u32 [#allocation8], 4
          %s190 = int_to_ptr.vmem [resolvable:$true] %s189
          %195 = dma.hbm_to_vmem [thread:$0]  %s2, 3072, %s190, [#allocation7], 192, 192, 12
        $region20: #{_lambda_.2} parent=11 // pred_fallthru
          _
        // Predicated region
        $region21: #{_lambda_.2} parent=11 // pred_check
          %p196 = pneg %p108
        $region22: #{_lambda_.2} parent=11 // pred_check_branch
          %198 = sbr.rel (%p196) target = $region24
        $region23: #{_lambda_.2} parent=11 // pred_region
          %s200 = ssub.s32 48, 48
          %201 = vsyncadd [#allocation10], %s200
          %s203 = sshll.u32 [#allocation9], 4
          %s204 = int_to_ptr.vmem [resolvable:$true] %s203
          %206 = dma.hbm_to_vmem [thread:$0]  %s3, 48, %s204, [#allocation10]
        $region24: #{_lambda_.2} parent=11 // pred_fallthru
          _
        // Predicated region
        $region25: #{_lambda_.2} parent=11 // pred_check
          %p207 = pneg %p129
        $region26: #{_lambda_.2} parent=11 // pred_check_branch
          %209 = sbr.rel (%p207) target = $region28
        $region27: #{_lambda_.2} parent=11 // pred_region
          %s211 = ssub.s32 48, 48
          %212 = vsyncadd [#allocation10], %s211
          %s214 = sshll.u32 [#allocation11], 4
          %s215 = int_to_ptr.vmem [resolvable:$true] %s214
          %217 = dma.hbm_to_vmem [thread:$0]  %s4, 48, %s215, [#allocation10]
        $region28: #{_lambda_.2} parent=11 // pred_fallthru
          _
      $region12: #{_lambda_.2} parent=5 // pred_fallthru
        _
      %p218 = scmp.lt.s32.totalorder %s19, 3
      // Predicated region
      $region29: #{_lambda_.2} parent=5 // pred_check
        %p219 = pneg %p218
      $region30: #{_lambda_.2} parent=5 // pred_check_branch
        %221 = sbr.rel (%p219) target = $region32
      $region31: #{_lambda_.2} parent=5 // pred_region
        // Predicated region
        $region33: #{_lambda_.2} parent=31 // pred_check
          %p222 = pneg %p39
        $region34: #{_lambda_.2} parent=31 // pred_check_branch
          %224 = sbr.rel (%p222) target = $region36
        $region35: #{_lambda_.2} parent=31 // pred_region
          #allocation14 [shape = 'u32[6]{0}', space=smem, size = 0x18, scoped, tag = 'DMA stride descriptor']
          %s225 = sand.u32 %s29, 1
          %s226 = scalar_lea.sflag [#allocation4], %s225
          %s227 = sand.u32 %s29, 1
          %s228 = smul.addr %s227, 64
          %s229 = scalar_lea.vmem [#allocation3], %s228
          %s230 = smul.u32 2, %s19
          %s232 = ssub.s32 1024, 1024
          %233 = vsyncadd %s226, %s232
          %s234 = smul.addr %s230, 64
          %s235 = scalar_lea.hbm %s0, %s234
          %s237 = sshll.u32 1, 14
          %s238 = sxor.u32 4294967295, %s237
          %s240 = sld [smem:[#allocation0]]
          %s241 = sadd.s32 2, %s240
          %s243 = sshll.u32 7, 26
          %s244 = sxor.u32 4294967295, %s243
          %s245 = sand.u32 0, %s244
          %s246 = sshll.u32 %s241, 26
          %s247 = sor.u32 %s245, %s246
          %s248 = sshll.u32 %s229, 4
          %s249 = int_to_ptr.vmem [resolvable:$true] %s248
          %255 = sst [smem:[#allocation14]] 384
          %s256 = scalar_lea.smem [#allocation14], 1
          %257 = sst [smem:[%s256]] 128
          %s258 = scalar_lea.smem [#allocation14], 2
          %259 = sst [smem:[%s258]] 2
          %s260 = scalar_lea.smem [#allocation14], 3
          %261 = sst [smem:[%s260]] 64
          %s262 = scalar_lea.smem [#allocation14], 4
          %263 = sst [smem:[%s262]] 64
          %s264 = scalar_lea.smem [#allocation14], 5
          %265 = sst [smem:[%s264]] 4
          %267 = dma.general %s235, 1024, %s249, %s226, [#allocation13], [#allocation14], %s247, 0
        $region36: #{_lambda_.2} parent=31 // pred_fallthru
          _
      $region32: #{_lambda_.2} parent=5 // pred_fallthru
        _
      %p268 = scmp.le.s32.totalorder 1, %s19
      %p269 = scmp.lt.s32.totalorder %s19, 4
      %p270 = pnand %p268, %p269
      %p271 = pneg %p270
      // Predicated region
      $region37: #{_lambda_.2} parent=5 // pred_check
        _
      $region38: #{_lambda_.2} parent=5 // pred_check_branch
        %273 = sbr.rel (%p270) target = $region40
      $region39: #{_lambda_.2} parent=5 // pred_region
        %s274 = ssub.s32 %s19, 1
        %s275 = sand.u32 %s32, 1
        %s276 = scalar_lea.sflag [#allocation4], %s275
        %s277 = sand.u32 %s32, 1
        %s278 = smul.addr %s277, 64
        %s279 = scalar_lea.vmem [#allocation3], %s278
        // Predicated region
        $region41: #{_lambda_.2} parent=39 // pred_check
          %p280 = pneg %p45
        $region42: #{_lambda_.2} parent=39 // pred_check_branch
          %282 = sbr.rel (%p280) target = $region44
        $region43: #{_lambda_.2} parent=39 // pred_region
          %283 = dma.done %s276, 1024
        $region44: #{_lambda_.2} parent=39 // pred_fallthru
          _
        // Predicated region
        $region45: #{_lambda_.2} parent=39 // pred_check
          %p284 = pneg %p66
        $region46: #{_lambda_.2} parent=39 // pred_check_branch
          %286 = sbr.rel (%p284) target = $region48
        $region47: #{_lambda_.2} parent=39 // pred_region
          %287 = dma.done [#allocation7], 3072
        $region48: #{_lambda_.2} parent=39 // pred_fallthru
          _
        // Predicated region
        $region49: #{_lambda_.2} parent=39 // pred_check
          %p288 = pneg %p87
        $region50: #{_lambda_.2} parent=39 // pred_check_branch
          %290 = sbr.rel (%p288) target = $region52
        $region51: #{_lambda_.2} parent=39 // pred_region
          %291 = dma.done [#allocation7], 3072
        $region52: #{_lambda_.2} parent=39 // pred_fallthru
          _
        // Predicated region
        $region53: #{_lambda_.2} parent=39 // pred_check
          %p292 = pneg %p108
        $region54: #{_lambda_.2} parent=39 // pred_check_branch
          %294 = sbr.rel (%p292) target = $region56
        $region55: #{_lambda_.2} parent=39 // pred_region
          %295 = dma.done [#allocation10], 48
        $region56: #{_lambda_.2} parent=39 // pred_fallthru
          _
        // Predicated region
        $region57: #{_lambda_.2} parent=39 // pred_check
          %p296 = pneg %p129
        $region58: #{_lambda_.2} parent=39 // pred_check_branch
          %298 = sbr.rel (%p296) target = $region60
        $region59: #{_lambda_.2} parent=39 // pred_region
          %299 = dma.done [#allocation10], 48
        $region60: #{_lambda_.2} parent=39 // pred_fallthru
          _
        %s300 = sand.u32 %s32, 1
        %s301 = scalar_lea.sflag [#allocation4], %s300
        %s302 = sand.u32 %s32, 1
        %s303 = smul.addr %s302, 64
        %s304 = scalar_lea.vmem [#allocation3], %s303
        %p305 = pneg %p45
        %p306 = pneg %p42
        %p307 = pneg %p66
        %p308 = pneg %p63
        %p309 = pneg %p87
        %p310 = pneg %p84
        %p311 = pneg %p108
        %p312 = pneg %p105
        %p313 = pneg %p129
        %p314 = pneg %p126
        %p315 = pneg %p155
        %p316 = pneg %p152
        %s317 = sand.u32 %s142, 1
        %s318 = scalar_lea.sflag [#allocation5], %s317
        %s319 = sand.u32 %s142, 1
        %s320 = smul.addr %s319, 16
        %s321 = scalar_lea.vmem [#allocation12], %s320
        %s322 = smul.u32 2, %s24
        %s323 = smul.u32 2, %s24
        %v325 = vld [vmem:[#allocation8] sm:$0xff]
        %v326 = vld [vmem:[#allocation8 + $0x8] sm:$0xf]
        %v327 = vld [vmem:[#allocation8 + $0xc] sm:$0xff]
        %v328 = vld [vmem:[#allocation8 + $0x14] sm:$0xf]
        %v329 = vld [vmem:[#allocation8 + $0x18] sm:$0xff]
        %v330 = vld [vmem:[#allocation8 + $0x20] sm:$0xf]
        %v331 = vld [vmem:[#allocation8 + $0x24] sm:$0xff]
        %v332 = vld [vmem:[#allocation8 + $0x2c] sm:$0xf]
        %v333 = vld [vmem:[#allocation8 + $0x30] sm:$0xff]
        %v334 = vld [vmem:[#allocation8 + $0x38] sm:$0xf]
        %v335 = vld [vmem:[#allocation8 + $0x3c] sm:$0xff]
        %v336 = vld [vmem:[#allocation8 + $0x44] sm:$0xf]
        %v337 = vld [vmem:[#allocation8 + $0x48] sm:$0xff]
        %v338 = vld [vmem:[#allocation8 + $0x50] sm:$0xf]
        %v339 = vld [vmem:[#allocation8 + $0x54] sm:$0xff]
        %v340 = vld [vmem:[#allocation8 + $0x5c] sm:$0xf]
        %v341 = vld [vmem:[#allocation8 + $0x60] sm:$0xff]
        %v342 = vld [vmem:[#allocation8 + $0x68] sm:$0xf]
        %v343 = vld [vmem:[#allocation8 + $0x6c] sm:$0xff]
        %v344 = vld [vmem:[#allocation8 + $0x74] sm:$0xf]
        %v345 = vld [vmem:[#allocation8 + $0x78] sm:$0xff]
        %v346 = vld [vmem:[#allocation8 + $0x80] sm:$0xf]
        %v347 = vld [vmem:[#allocation8 + $0x84] sm:$0xff]
        %v348 = vld [vmem:[#allocation8 + $0x8c] sm:$0xf]
        %v349 = vld [vmem:[#allocation8 + $0x90] sm:$0xff]
        %v350 = vld [vmem:[#allocation8 + $0x98] sm:$0xf]
        %v351 = vld [vmem:[#allocation8 + $0x9c] sm:$0xff]
        %v352 = vld [vmem:[#allocation8 + $0xa4] sm:$0xf]
        %v353 = vld [vmem:[#allocation8 + $0xa8] sm:$0xff]
        %v354 = vld [vmem:[#allocation8 + $0xb0] sm:$0xf]
        %v355 = vld [vmem:[#allocation8 + $0xb4] sm:$0xff]
        %v356 = vld [vmem:[#allocation8 + $0xbc] sm:$0xf]
        %v357 = vld [vmem:[#allocation11] sm:$0x7]
        %v358 = vld [vmem:[%s279] sm:$0xf]
        %v359 = vld [vmem:[%s279 + $0x4] sm:$0xf]
        %v360 = vld [vmem:[%s279 + $0x8] sm:$0xf]
        %v361 = vld [vmem:[%s279 + $0xc] sm:$0xf]
        %v362 = vld [vmem:[%s279 + $0x10] sm:$0xf]
        %v363 = vld [vmem:[%s279 + $0x14] sm:$0xf]
        %v364 = vld [vmem:[%s279 + $0x18] sm:$0xf]
        %v365 = vld [vmem:[%s279 + $0x1c] sm:$0xf]
        %v366 = vld [vmem:[%s279 + $0x20] sm:$0xf]
        %v367 = vld [vmem:[%s279 + $0x24] sm:$0xf]
        %v368 = vld [vmem:[%s279 + $0x28] sm:$0xf]
        %v369 = vld [vmem:[%s279 + $0x2c] sm:$0xf]
        %v370 = vld [vmem:[%s279 + $0x30] sm:$0xf]
        %v371 = vld [vmem:[%s279 + $0x34] sm:$0xf]
        %v372 = vld [vmem:[%s279 + $0x38] sm:$0xf]
        %v373 = vld [vmem:[%s279 + $0x3c] sm:$0xf]
        %v374 = vld [vmem:[#allocation6] sm:$0xff]
        %v375 = vld [vmem:[#allocation6 + $0x8] sm:$0xf]
        %v376 = vld [vmem:[#allocation6 + $0xc] sm:$0xff]
        %v377 = vld [vmem:[#allocation6 + $0x14] sm:$0xf]
        %v378 = vld [vmem:[#allocation6 + $0x18] sm:$0xff]
        %v379 = vld [vmem:[#allocation6 + $0x20] sm:$0xf]
        %v380 = vld [vmem:[#allocation6 + $0x24] sm:$0xff]
        %v381 = vld [vmem:[#allocation6 + $0x2c] sm:$0xf]
        %v382 = vld [vmem:[#allocation6 + $0x30] sm:$0xff]
        %v383 = vld [vmem:[#allocation6 + $0x38] sm:$0xf]
        %v384 = vld [vmem:[#allocation6 + $0x3c] sm:$0xff]
        %v385 = vld [vmem:[#allocation6 + $0x44] sm:$0xf]
        %v386 = vld [vmem:[#allocation6 + $0x48] sm:$0xff]
        %v387 = vld [vmem:[#allocation6 + $0x50] sm:$0xf]
        %v388 = vld [vmem:[#allocation6 + $0x54] sm:$0xff]
        %v389 = vld [vmem:[#allocation6 + $0x5c] sm:$0xf]
        %v390 = vld [vmem:[#allocation6 + $0x60] sm:$0xff]
        %v391 = vld [vmem:[#allocation6 + $0x68] sm:$0xf]
        %v392 = vld [vmem:[#allocation6 + $0x6c] sm:$0xff]
        %v393 = vld [vmem:[#allocation6 + $0x74] sm:$0xf]
        %v394 = vld [vmem:[#allocation6 + $0x78] sm:$0xff]
        %v395 = vld [vmem:[#allocation6 + $0x80] sm:$0xf]
        %v396 = vld [vmem:[#allocation6 + $0x84] sm:$0xff]
        %v397 = vld [vmem:[#allocation6 + $0x8c] sm:$0xf]
        %v398 = vld [vmem:[#allocation6 + $0x90] sm:$0xff]
        %v399 = vld [vmem:[#allocation6 + $0x98] sm:$0xf]
        %v400 = vld [vmem:[#allocation6 + $0x9c] sm:$0xff]
        %v401 = vld [vmem:[#allocation6 + $0xa4] sm:$0xf]
        %v402 = vld [vmem:[#allocation6 + $0xa8] sm:$0xff]
        %v403 = vld [vmem:[#allocation6 + $0xb0] sm:$0xf]
        %v404 = vld [vmem:[#allocation6 + $0xb4] sm:$0xff]
        %v405 = vld [vmem:[#allocation6 + $0xbc] sm:$0xf]
        %v406 = vld [vmem:[#allocation9] sm:$0x7]
        %v408 = vlaneseq
        %v409 = vshrl.u32 %v408, 7
        %v410 = vsub.s32 0, %v409
        %v411 = vrot.slane %v406, %v410
        %v412 = vlaneseq
        %v413 = vshrl.u32 %v412, 7
        %v414 = vsub.s32 1, %v413
        %v415 = vrot.slane %v406, %v414
        %v416 = vlaneseq
        %v417 = vshrl.u32 %v416, 7
        %v418 = vsub.s32 2, %v417
        %v419 = vrot.slane %v406, %v418
        %v439 = vunpack.c.l.b16 %v358
        %v440 = vunpack.c.l.b16 %v359
        %v441 = vunpack.c.l.b16 %v360
        %v442 = vunpack.c.l.b16 %v361
        %v443 = vunpack.c.l.b16 %v362
        %v444 = vunpack.c.l.b16 %v363
        %v445 = vunpack.c.l.b16 %v364
        %v446 = vunpack.c.l.b16 %v365
        %v447 = vunpack.c.l.b16 %v366
        %v448 = vunpack.c.l.b16 %v367
        %v449 = vunpack.c.l.b16 %v368
        %v450 = vunpack.c.l.b16 %v369
        %v451 = vunpack.c.l.b16 %v370
        %v452 = vunpack.c.l.b16 %v371
        %v453 = vunpack.c.l.b16 %v372
        %v454 = vunpack.c.l.b16 %v373
        %v455 = vpack.c.b16 %v440, %v439
        %v456 = vpack.c.b16 %v442, %v441
        %v457 = vpack.c.b16 %v444, %v443
        %v458 = vpack.c.b16 %v446, %v445
        %v459 = vpack.c.b16 %v448, %v447
        %v460 = vpack.c.b16 %v450, %v449
        %v461 = vpack.c.b16 %v452, %v451
        %v462 = vpack.c.b16 %v454, %v453
        %v503 = vunpack.c.l.b16 %v374
        %v504 = vunpack.c.h.b16 %v374
        %v505 = vunpack.c.l.b16 %v375
        %v506 = vunpack.c.l.b16 %v376
        %v507 = vunpack.c.h.b16 %v376
        %v508 = vunpack.c.l.b16 %v377
        %v509 = vunpack.c.l.b16 %v378
        %v510 = vunpack.c.h.b16 %v378
        %v511 = vunpack.c.l.b16 %v379
        %v512 = vunpack.c.l.b16 %v380
        %v513 = vunpack.c.h.b16 %v380
        %v514 = vunpack.c.l.b16 %v381
        %v515 = vunpack.c.l.b16 %v382
        %v516 = vunpack.c.h.b16 %v382
        %v517 = vunpack.c.l.b16 %v383
        %v518 = vunpack.c.l.b16 %v384
        %v519 = vunpack.c.h.b16 %v384
        %v520 = vunpack.c.l.b16 %v385
        %v521 = vunpack.c.l.b16 %v386
        %v522 = vunpack.c.h.b16 %v386
        %v523 = vunpack.c.l.b16 %v387
        %v524 = vunpack.c.l.b16 %v388
        %v525 = vunpack.c.h.b16 %v388
        %v526 = vunpack.c.l.b16 %v389
        %v527 = vunpack.c.l.b16 %v390
        %v528 = vunpack.c.h.b16 %v390
        %v529 = vunpack.c.l.b16 %v391
        %v530 = vunpack.c.l.b16 %v392
        %v531 = vunpack.c.h.b16 %v392
        %v532 = vunpack.c.l.b16 %v393
        %v533 = vunpack.c.l.b16 %v394
        %v534 = vunpack.c.h.b16 %v394
        %v535 = vunpack.c.l.b16 %v395
        %v536 = vunpack.c.l.b16 %v396
        %v537 = vunpack.c.h.b16 %v396
        %v538 = vunpack.c.l.b16 %v397
        %v539 = vunpack.c.l.b16 %v398
        %v540 = vunpack.c.h.b16 %v398
        %v541 = vunpack.c.l.b16 %v399
        %v542 = vunpack.c.l.b16 %v400
        %v543 = vunpack.c.h.b16 %v400
        %v544 = vunpack.c.l.b16 %v401
        %v545 = vunpack.c.l.b16 %v402
        %v546 = vunpack.c.h.b16 %v402
        %v547 = vunpack.c.l.b16 %v403
        %v548 = vunpack.c.l.b16 %v404
        %v549 = vunpack.c.h.b16 %v404
        %v550 = vunpack.c.l.b16 %v405
        %v551 = vpack.c.b16 %v506, %v503
        %v552 = vpack.c.b16 %v507, %v504
        %v553 = vpack.c.b16 %v508, %v505
        %v554 = vpack.c.b16 %v512, %v509
        %v555 = vpack.c.b16 %v513, %v510
        %v556 = vpack.c.b16 %v514, %v511
        %v557 = vpack.c.b16 %v518, %v515
        %v558 = vpack.c.b16 %v519, %v516
        %v559 = vpack.c.b16 %v520, %v517
        %v560 = vpack.c.b16 %v524, %v521
        %v561 = vpack.c.b16 %v525, %v522
        %v562 = vpack.c.b16 %v526, %v523
        %v563 = vpack.c.b16 %v530, %v527
        %v564 = vpack.c.b16 %v531, %v528
        %v565 = vpack.c.b16 %v532, %v529
        %v566 = vpack.c.b16 %v536, %v533
        %v567 = vpack.c.b16 %v537, %v534
        %v568 = vpack.c.b16 %v538, %v535
        %v569 = vpack.c.b16 %v542, %v539
        %v570 = vpack.c.b16 %v543, %v540
        %v571 = vpack.c.b16 %v544, %v541
        %v572 = vpack.c.b16 %v548, %v545
        %v573 = vpack.c.b16 %v549, %v546
        %v574 = vpack.c.b16 %v550, %v547
        %599 = vmatprep.subr.bf16.mxu0 %v552
        %600 = vmatpush1.bf16.msra.mxu0 %v551
        %601 = vmatprep.subr.bf16.mxu0 %v555
        %602 = vmatpush1.bf16.msra.mxu0 %v554
        %603 = vmatprep.subr.bf16.mxu0 %v558
        %604 = vmatpush1.bf16.msra.mxu0 %v557
        %605 = vmatprep.subr.bf16.mxu0 %v561
        %606 = vmatpush1.bf16.msra.mxu0 %v560
        %607 = vmatprep.subr.bf16.mxu0 %v564
        %608 = vmatpush1.bf16.msra.mxu0 %v563
        %609 = vmatprep.subr.bf16.mxu0 %v567
        %610 = vmatpush1.bf16.msra.mxu0 %v566
        %611 = vmatprep.subr.bf16.mxu0 %v570
        %612 = vmatpush1.bf16.msra.mxu0 %v569
        %613 = vmatprep.subr.bf16.mxu0 %v573
        %614 = vmatpush1.bf16.msra.mxu0 %v572
        %615 = vmatprep.subr.bf16.mxu0 0
        %616 = vmatpush1.bf16.msra.mxu0 0
        %617 = vmatprep.subr.bf16.mxu0 0
        %618 = vmatpush1.bf16.msra.mxu0 0
        %619 = vmatprep.subr.bf16.mxu0 0
        %620 = vmatpush1.bf16.msra.mxu0 0
        %621 = vmatprep.subr.bf16.mxu0 0
        %622 = vmatpush1.bf16.msra.mxu0 0
        %623 = vmatprep.subr.bf16.mxu0 0
        %624 = vmatpush1.bf16.msra.mxu0 0
        %625 = vmatprep.subr.bf16.mxu0 0
        %626 = vmatpush1.bf16.msra.mxu0 0
        %627 = vmatprep.subr.bf16.mxu0 0
        %628 = vmatpush1.bf16.msra.mxu0 0
        %629 = vmatprep.subr.bf16.mxu0 0
        %630 = vmatpush1.bf16.msra.mxu0 0
        %631 = vmatprep.mubr.bf16.mxu0 0
        %632 = vmatmul.mubr.bf16.gmra.mrb[0].mxu0 %v455
        %v633 = vpop.f32.mrb[0].mxu0
        %v634 = vadd.f32 %v411, %v633
        %v635 = vpop.f32.mrb[0].mxu0
        %v636 = vadd.f32 %v415, %v635
        %v637 = vpop.f32.mrb[0].mxu0
        %v638 = vadd.f32 %v411, %v637
        %v639 = vpop.f32.mrb[0].mxu0
        %v640 = vadd.f32 %v415, %v639
        %641 = vmatprep.mubr.bf16.mxu0 0
        %642 = vmatmul.mubr.bf16.gmra.mrb[0].mxu0 %v456
        %v643 = vpop.f32.mrb[0].mxu0
        %v644 = vadd.f32 %v411, %v643
        %v645 = vpop.f32.mrb[0].mxu0
        %v646 = vadd.f32 %v415, %v645
        %v647 = vpop.f32.mrb[0].mxu0
        %v648 = vadd.f32 %v411, %v647
        %v649 = vpop.f32.mrb[0].mxu0
        %v650 = vadd.f32 %v415, %v649
        %651 = vmatprep.mubr.bf16.mxu0 0
        %652 = vmatmul.mubr.bf16.gmra.mrb[0].mxu0 %v457
        %v653 = vpop.f32.mrb[0].mxu0
        %v654 = vadd.f32 %v411, %v653
        %v655 = vpop.f32.mrb[0].mxu0
        %v656 = vadd.f32 %v415, %v655
        %v657 = vpop.f32.mrb[0].mxu0
        %v658 = vadd.f32 %v411, %v657
        %v659 = vpop.f32.mrb[0].mxu0
        %v660 = vadd.f32 %v415, %v659
        %661 = vmatprep.mubr.bf16.mxu0 0
        %662 = vmatmul.mubr.bf16.gmra.mrb[0].mxu0 %v458
        %v663 = vpop.f32.mrb[0].mxu0
        %v664 = vadd.f32 %v411, %v663
        %v665 = vpop.f32.mrb[0].mxu0
        %v666 = vadd.f32 %v415, %v665
        %v667 = vpop.f32.mrb[0].mxu0
        %v668 = vadd.f32 %v411, %v667
        %v669 = vpop.f32.mrb[0].mxu0
        %v670 = vadd.f32 %v415, %v669
        %671 = vmatprep.mubr.bf16.mxu0 0
        %672 = vmatmul.mubr.bf16.gmra.mrb[0].mxu0 %v459
        %v673 = vpop.f32.mrb[0].mxu0
        %v674 = vadd.f32 %v411, %v673
        %v675 = vpop.f32.mrb[0].mxu0
        %v676 = vadd.f32 %v415, %v675
        %v677 = vpop.f32.mrb[0].mxu0
        %v678 = vadd.f32 %v411, %v677
        %v679 = vpop.f32.mrb[0].mxu0
        %v680 = vadd.f32 %v415, %v679
        %681 = vmatprep.mubr.bf16.mxu0 0
        %682 = vmatmul.mubr.bf16.gmra.mrb[0].mxu0 %v460
        %v683 = vpop.f32.mrb[0].mxu0
        %v684 = vadd.f32 %v411, %v683
        %v685 = vpop.f32.mrb[0].mxu0
        %v686 = vadd.f32 %v415, %v685
        %v687 = vpop.f32.mrb[0].mxu0
        %v688 = vadd.f32 %v411, %v687
        %v689 = vpop.f32.mrb[0].mxu0
        %v690 = vadd.f32 %v415, %v689
        %691 = vmatprep.mubr.bf16.mxu0 0
        %692 = vmatmul.mubr.bf16.gmra.mrb[0].mxu0 %v461
        %v693 = vpop.f32.mrb[0].mxu0
        %v694 = vadd.f32 %v411, %v693
        %v695 = vpop.f32.mrb[0].mxu0
        %v696 = vadd.f32 %v415, %v695
        %v697 = vpop.f32.mrb[0].mxu0
        %v698 = vadd.f32 %v411, %v697
        %v699 = vpop.f32.mrb[0].mxu0
        %v700 = vadd.f32 %v415, %v699
        %701 = vmatprep.mubr.bf16.mxu0 0
        %702 = vmatmul.mubr.bf16.gmra.mrb[0].mxu0 %v462
        %v703 = vpop.f32.mrb[0].mxu0
        %v704 = vadd.f32 %v411, %v703
        %v705 = vpop.f32.mrb[0].mxu0
        %v706 = vadd.f32 %v415, %v705
        %v707 = vpop.f32.mrb[0].mxu0
        %v708 = vadd.f32 %v411, %v707
        %v709 = vpop.f32.mrb[0].mxu0
        %v710 = vadd.f32 %v415, %v709
        %711 = vdwg.mxu0
        %712 = vmatprep.subr.bf16.mxu0 0
        %713 = vmatpush1.bf16.msra.mxu0 %v553
        %714 = vmatprep.subr.bf16.mxu0 0
        %715 = vmatpush1.bf16.msra.mxu0 %v556
        %716 = vmatprep.subr.bf16.mxu0 0
        %717 = vmatpush1.bf16.msra.mxu0 %v559
        %718 = vmatprep.subr.bf16.mxu0 0
        %719 = vmatpush1.bf16.msra.mxu0 %v562
        %720 = vmatprep.subr.bf16.mxu0 0
        %721 = vmatpush1.bf16.msra.mxu0 %v565
        %722 = vmatprep.subr.bf16.mxu0 0
        %723 = vmatpush1.bf16.msra.mxu0 %v568
        %724 = vmatprep.subr.bf16.mxu0 0
        %725 = vmatpush1.bf16.msra.mxu0 %v571
        %726 = vmatprep.subr.bf16.mxu0 0
        %727 = vmatpush1.bf16.msra.mxu0 %v574
        %728 = vmatprep.subr.bf16.mxu0 0
        %729 = vmatpush1.bf16.msra.mxu0 0
        %730 = vmatprep.subr.bf16.mxu0 0
        %731 = vmatpush1.bf16.msra.mxu0 0
        %732 = vmatprep.subr.bf16.mxu0 0
        %733 = vmatpush1.bf16.msra.mxu0 0
        %734 = vmatprep.subr.bf16.mxu0 0
        %735 = vmatpush1.bf16.msra.mxu0 0
        %736 = vmatprep.subr.bf16.mxu0 0
        %737 = vmatpush1.bf16.msra.mxu0 0
        %738 = vmatprep.subr.bf16.mxu0 0
        %739 = vmatpush1.bf16.msra.mxu0 0
        %740 = vmatprep.subr.bf16.mxu0 0
        %741 = vmatpush1.bf16.msra.mxu0 0
        %742 = vmatprep.subr.bf16.mxu0 0
        %743 = vmatpush1.bf16.msra.mxu0 0
        %744 = vmatprep.mubr.bf16.mxu0 0
        %745 = vmatmul.mubr.bf16.gmra.mrb[0].mxu0 %v455
        %v746 = vpop.f32.mrb[0].mxu0
        %v747 = vadd.f32 %v419, %v746
        %v748 = vpop.f32.mrb[0].mxu0
        %v749 = vpop.f32.mrb[0].mxu0
        %v750 = vadd.f32 %v419, %v749
        %v751 = vpop.f32.mrb[0].mxu0
        %752 = vmatprep.mubr.bf16.mxu0 0
        %753 = vmatmul.mubr.bf16.gmra.mrb[0].mxu0 %v456
        %v754 = vpop.f32.mrb[0].mxu0
        %v755 = vadd.f32 %v419, %v754
        %v756 = vpop.f32.mrb[0].mxu0
        %v757 = vpop.f32.mrb[0].mxu0
        %v758 = vadd.f32 %v419, %v757
        %v759 = vpop.f32.mrb[0].mxu0
        %760 = vmatprep.mubr.bf16.mxu0 0
        %761 = vmatmul.mubr.bf16.gmra.mrb[0].mxu0 %v457
        %v762 = vpop.f32.mrb[0].mxu0
        %v763 = vadd.f32 %v419, %v762
        %v764 = vpop.f32.mrb[0].mxu0
        %v765 = vpop.f32.mrb[0].mxu0
        %v766 = vadd.f32 %v419, %v765
        %v767 = vpop.f32.mrb[0].mxu0
        %768 = vmatprep.mubr.bf16.mxu0 0
        %769 = vmatmul.mubr.bf16.gmra.mrb[0].mxu0 %v458
        %v770 = vpop.f32.mrb[0].mxu0
        %v771 = vadd.f32 %v419, %v770
        %v772 = vpop.f32.mrb[0].mxu0
        %v773 = vpop.f32.mrb[0].mxu0
        %v774 = vadd.f32 %v419, %v773
        %v775 = vpop.f32.mrb[0].mxu0
        %776 = vmatprep.mubr.bf16.mxu0 0
        %777 = vmatmul.mubr.bf16.gmra.mrb[0].mxu0 %v459
        %v778 = vpop.f32.mrb[0].mxu0
        %v779 = vadd.f32 %v419, %v778
        %v780 = vpop.f32.mrb[0].mxu0
        %v781 = vpop.f32.mrb[0].mxu0
        %v782 = vadd.f32 %v419, %v781
        %v783 = vpop.f32.mrb[0].mxu0
        %784 = vmatprep.mubr.bf16.mxu0 0
        %785 = vmatmul.mubr.bf16.gmra.mrb[0].mxu0 %v460
        %v786 = vpop.f32.mrb[0].mxu0
        %v787 = vadd.f32 %v419, %v786
        %v788 = vpop.f32.mrb[0].mxu0
        %v789 = vpop.f32.mrb[0].mxu0
        %v790 = vadd.f32 %v419, %v789
        %v791 = vpop.f32.mrb[0].mxu0
        %792 = vmatprep.mubr.bf16.mxu0 0
        %793 = vmatmul.mubr.bf16.gmra.mrb[0].mxu0 %v461
        %v794 = vpop.f32.mrb[0].mxu0
        %v795 = vadd.f32 %v419, %v794
        %v796 = vpop.f32.mrb[0].mxu0
        %v797 = vpop.f32.mrb[0].mxu0
        %v798 = vadd.f32 %v419, %v797
        %v799 = vpop.f32.mrb[0].mxu0
        %800 = vmatprep.mubr.bf16.mxu0 0
        %801 = vmatmul.mubr.bf16.gmra.mrb[0].mxu0 %v462
        %v802 = vpop.f32.mrb[0].mxu0
        %v803 = vadd.f32 %v419, %v802
        %v804 = vpop.f32.mrb[0].mxu0
        %v805 = vpop.f32.mrb[0].mxu0
        %v806 = vadd.f32 %v419, %v805
        %v807 = vpop.f32.mrb[0].mxu0
        %808 = vdwg.mxu0
        %v809 = vpack.c.bf16 %v638, %v634
        %v810 = vpack.c.bf16 %v640, %v636
        %v811 = vpack.c.bf16 %v750, %v747
        %v812 = vpack.c.bf16 %v648, %v644
        %v813 = vpack.c.bf16 %v650, %v646
        %v814 = vpack.c.bf16 %v758, %v755
        %v815 = vpack.c.bf16 %v658, %v654
        %v816 = vpack.c.bf16 %v660, %v656
        %v817 = vpack.c.bf16 %v766, %v763
        %v818 = vpack.c.bf16 %v668, %v664
        %v819 = vpack.c.bf16 %v670, %v666
        %v820 = vpack.c.bf16 %v774, %v771
        %v821 = vpack.c.bf16 %v678, %v674
        %v822 = vpack.c.bf16 %v680, %v676
        %v823 = vpack.c.bf16 %v782, %v779
        %v824 = vpack.c.bf16 %v688, %v684
        %v825 = vpack.c.bf16 %v690, %v686
        %v826 = vpack.c.bf16 %v790, %v787
        %v827 = vpack.c.bf16 %v698, %v694
        %v828 = vpack.c.bf16 %v700, %v696
        %v829 = vpack.c.bf16 %v798, %v795
        %v830 = vpack.c.bf16 %v708, %v704
        %v831 = vpack.c.bf16 %v710, %v706
        %v832 = vpack.c.bf16 %v806, %v803
        %833 = vst [vmem:[#allocation2] sm:$0xff] %v809
        %834 = vst [vmem:[#allocation2 + $0x8] sm:$0xff] %v810
        %835 = vst [vmem:[#allocation2 + $0x10] sm:$0xff] %v811
        %836 = vst [vmem:[#allocation2 + $0x18] sm:$0xff] %v812
        %837 = vst [vmem:[#allocation2 + $0x20] sm:$0xff] %v813
        %838 = vst [vmem:[#allocation2 + $0x28] sm:$0xff] %v814
        %839 = vst [vmem:[#allocation2 + $0x30] sm:$0xff] %v815
        %840 = vst [vmem:[#allocation2 + $0x38] sm:$0xff] %v816
        %841 = vst [vmem:[#allocation2 + $0x40] sm:$0xff] %v817
        %842 = vst [vmem:[#allocation2 + $0x48] sm:$0xff] %v818
        %843 = vst [vmem:[#allocation2 + $0x50] sm:$0xff] %v819
        %844 = vst [vmem:[#allocation2 + $0x58] sm:$0xff] %v820
        %845 = vst [vmem:[#allocation2 + $0x60] sm:$0xff] %v821
        %846 = vst [vmem:[#allocation2 + $0x68] sm:$0xff] %v822
        %847 = vst [vmem:[#allocation2 + $0x70] sm:$0xff] %v823
        %848 = vst [vmem:[#allocation2 + $0x78] sm:$0xff] %v824
        %849 = vst [vmem:[#allocation2 + $0x80] sm:$0xff] %v825
        %850 = vst [vmem:[#allocation2 + $0x88] sm:$0xff] %v826
        %851 = vst [vmem:[#allocation2 + $0x90] sm:$0xff] %v827
        %852 = vst [vmem:[#allocation2 + $0x98] sm:$0xff] %v828
        %853 = vst [vmem:[#allocation2 + $0xa0] sm:$0xff] %v829
        %854 = vst [vmem:[#allocation2 + $0xa8] sm:$0xff] %v830
        %855 = vst [vmem:[#allocation2 + $0xb0] sm:$0xff] %v831
        %856 = vst [vmem:[#allocation2 + $0xb8] sm:$0xff] %v832
        %v857 = vld [vmem:[#allocation2] sm:$0xff]
        %v858 = vld [vmem:[#allocation2 + $0x8] sm:$0xff]
        %v859 = vld [vmem:[#allocation2 + $0x10] sm:$0xff]
        %v861 = vlaneseq
        %v862 = vshrl.u32 %v861, 7
        %v863 = vsub.s32 0, %v862
        %v864 = vrot.slane %v357, %v863
        %v865 = vlaneseq
        %v866 = vshrl.u32 %v865, 7
        %v867 = vsub.s32 1, %v866
        %v868 = vrot.slane %v357, %v867
        %v869 = vlaneseq
        %v870 = vshrl.u32 %v869, 7
        %v871 = vsub.s32 2, %v870
        %v872 = vrot.slane %v357, %v871
        %v908 = vunpack.c.l.b16 %v325
        %v909 = vunpack.c.h.b16 %v325
        %v910 = vunpack.c.l.b16 %v326
        %v911 = vunpack.c.l.b16 %v327
        %v912 = vunpack.c.h.b16 %v327
        %v913 = vunpack.c.l.b16 %v328
        %v914 = vunpack.c.l.b16 %v329
        %v915 = vunpack.c.h.b16 %v329
        %v916 = vunpack.c.l.b16 %v330
        %v917 = vunpack.c.l.b16 %v331
        %v918 = vunpack.c.h.b16 %v331
        %v919 = vunpack.c.l.b16 %v332
        %v920 = vunpack.c.l.b16 %v333
        %v921 = vunpack.c.h.b16 %v333
        %v922 = vunpack.c.l.b16 %v334
        %v923 = vunpack.c.l.b16 %v335
        %v924 = vunpack.c.h.b16 %v335
        %v925 = vunpack.c.l.b16 %v336
        %v926 = vunpack.c.l.b16 %v337
        %v927 = vunpack.c.h.b16 %v337
        %v928 = vunpack.c.l.b16 %v338
        %v929 = vunpack.c.l.b16 %v339
        %v930 = vunpack.c.h.b16 %v339
        %v931 = vunpack.c.l.b16 %v340
        %v932 = vunpack.c.l.b16 %v341
        %v933 = vunpack.c.h.b16 %v341
        %v934 = vunpack.c.l.b16 %v342
        %v935 = vunpack.c.l.b16 %v343
        %v936 = vunpack.c.h.b16 %v343
        %v937 = vunpack.c.l.b16 %v344
        %v938 = vunpack.c.l.b16 %v345
        %v939 = vunpack.c.h.b16 %v345
        %v940 = vunpack.c.l.b16 %v346
        %v941 = vunpack.c.l.b16 %v347
        %v942 = vunpack.c.h.b16 %v347
        %v943 = vunpack.c.l.b16 %v348
        %v944 = vunpack.c.l.b16 %v349
        %v945 = vunpack.c.h.b16 %v349
        %v946 = vunpack.c.l.b16 %v350
        %v947 = vunpack.c.l.b16 %v351
        %v948 = vunpack.c.h.b16 %v351
        %v949 = vunpack.c.l.b16 %v352
        %v950 = vunpack.c.l.b16 %v353
        %v951 = vunpack.c.h.b16 %v353
        %v952 = vunpack.c.l.b16 %v354
        %v953 = vunpack.c.l.b16 %v355
        %v954 = vunpack.c.h.b16 %v355
        %v955 = vunpack.c.l.b16 %v356
        %v956 = vpack.c.b16 %v911, %v908
        %v957 = vpack.c.b16 %v912, %v909
        %v958 = vpack.c.b16 %v913, %v910
        %v959 = vpack.c.b16 %v917, %v914
        %v960 = vpack.c.b16 %v918, %v915
        %v961 = vpack.c.b16 %v919, %v916
        %v962 = vpack.c.b16 %v923, %v920
        %v963 = vpack.c.b16 %v924, %v921
        %v964 = vpack.c.b16 %v925, %v922
        %v965 = vpack.c.b16 %v929, %v926
        %v966 = vpack.c.b16 %v930, %v927
        %v967 = vpack.c.b16 %v931, %v928
        %v968 = vpack.c.b16 %v935, %v932
        %v969 = vpack.c.b16 %v936, %v933
        %v970 = vpack.c.b16 %v937, %v934
        %v971 = vpack.c.b16 %v941, %v938
        %v972 = vpack.c.b16 %v942, %v939
        %v973 = vpack.c.b16 %v943, %v940
        %v974 = vpack.c.b16 %v947, %v944
        %v975 = vpack.c.b16 %v948, %v945
        %v976 = vpack.c.b16 %v949, %v946
        %v977 = vpack.c.b16 %v953, %v950
        %v978 = vpack.c.b16 %v954, %v951
        %v979 = vpack.c.b16 %v955, %v952
        %1004 = vmatprep.subr.bf16.mxu0 %v957
        %1005 = vmatpush1.bf16.msra.mxu0 %v956
        %1006 = vmatprep.subr.bf16.mxu0 %v960
        %1007 = vmatpush1.bf16.msra.mxu0 %v959
        %1008 = vmatprep.subr.bf16.mxu0 %v963
        %1009 = vmatpush1.bf16.msra.mxu0 %v962
        %1010 = vmatprep.subr.bf16.mxu0 %v966
        %1011 = vmatpush1.bf16.msra.mxu0 %v965
        %1012 = vmatprep.subr.bf16.mxu0 %v969
        %1013 = vmatpush1.bf16.msra.mxu0 %v968
        %1014 = vmatprep.subr.bf16.mxu0 %v972
        %1015 = vmatpush1.bf16.msra.mxu0 %v971
        %1016 = vmatprep.subr.bf16.mxu0 %v975
        %1017 = vmatpush1.bf16.msra.mxu0 %v974
        %1018 = vmatprep.subr.bf16.mxu0 %v978
        %1019 = vmatpush1.bf16.msra.mxu0 %v977
        %1020 = vmatprep.subr.bf16.mxu0 0
        %1021 = vmatpush1.bf16.msra.mxu0 0
        %1022 = vmatprep.subr.bf16.mxu0 0
        %1023 = vmatpush1.bf16.msra.mxu0 0
        %1024 = vmatprep.subr.bf16.mxu0 0
        %1025 = vmatpush1.bf16.msra.mxu0 0
        %1026 = vmatprep.subr.bf16.mxu0 0
        %1027 = vmatpush1.bf16.msra.mxu0 0
        %1028 = vmatprep.subr.bf16.mxu0 0
        %1029 = vmatpush1.bf16.msra.mxu0 0
        %1030 = vmatprep.subr.bf16.mxu0 0
        %1031 = vmatpush1.bf16.msra.mxu0 0
        %1032 = vmatprep.subr.bf16.mxu0 0
        %1033 = vmatpush1.bf16.msra.mxu0 0
        %1034 = vmatprep.subr.bf16.mxu0 0
        %1035 = vmatpush1.bf16.msra.mxu0 0
        %1036 = vmatprep.mubr.bf16.mxu0 0
        %1037 = vmatmul.mubr.bf16.gmra.mrb[0].mxu0 0
        %v1038 = vpop.f32.mrb[0].mxu0
        %v1039 = vadd.f32 %v864, %v1038
        %v1040 = vpop.f32.mrb[0].mxu0
        %v1041 = vadd.f32 %v868, %v1040
        %v1042 = vpop.f32.mrb[0].mxu0
        %v1043 = vadd.f32 %v864, %v1042
        %v1044 = vpop.f32.mrb[0].mxu0
        %v1045 = vadd.f32 %v868, %v1044
        %1046 = vdwg.mxu0
        %1047 = vmatprep.subr.bf16.mxu0 0
        %1048 = vmatpush1.bf16.msra.mxu0 %v958
        %1049 = vmatprep.subr.bf16.mxu0 0
        %1050 = vmatpush1.bf16.msra.mxu0 %v961
        %1051 = vmatprep.subr.bf16.mxu0 0
        %1052 = vmatpush1.bf16.msra.mxu0 %v964
        %1053 = vmatprep.subr.bf16.mxu0 0
        %1054 = vmatpush1.bf16.msra.mxu0 %v967
        %1055 = vmatprep.subr.bf16.mxu0 0
        %1056 = vmatpush1.bf16.msra.mxu0 %v970
        %1057 = vmatprep.subr.bf16.mxu0 0
        %1058 = vmatpush1.bf16.msra.mxu0 %v973
        %1059 = vmatprep.subr.bf16.mxu0 0
        %1060 = vmatpush1.bf16.msra.mxu0 %v976
        %1061 = vmatprep.subr.bf16.mxu0 0
        %1062 = vmatpush1.bf16.msra.mxu0 %v979
        %1063 = vmatprep.subr.bf16.mxu0 0
        %1064 = vmatpush1.bf16.msra.mxu0 0
        %1065 = vmatprep.subr.bf16.mxu0 0
        %1066 = vmatpush1.bf16.msra.mxu0 0
        %1067 = vmatprep.subr.bf16.mxu0 0
        %1068 = vmatpush1.bf16.msra.mxu0 0
        %1069 = vmatprep.subr.bf16.mxu0 0
        %1070 = vmatpush1.bf16.msra.mxu0 0
        %1071 = vmatprep.subr.bf16.mxu0 0
        %1072 = vmatpush1.bf16.msra.mxu0 0
        %1073 = vmatprep.subr.bf16.mxu0 0
        %1074 = vmatpush1.bf16.msra.mxu0 0
        %1075 = vmatprep.subr.bf16.mxu0 0
        %1076 = vmatpush1.bf16.msra.mxu0 0
        %1077 = vmatprep.subr.bf16.mxu0 0
        %1078 = vmatpush1.bf16.msra.mxu0 0
        %1079 = vmatprep.mubr.bf16.mxu0 0
        %1080 = vmatmul.mubr.bf16.gmra.mrb[0].mxu0 0
        %v1081 = vpop.f32.mrb[0].mxu0
        %v1082 = vadd.f32 %v872, %v1081
        %v1083 = vpop.f32.mrb[0].mxu0
        %v1084 = vpop.f32.mrb[0].mxu0
        %v1085 = vadd.f32 %v872, %v1084
        %v1086 = vpop.f32.mrb[0].mxu0
        %1087 = vdwg.mxu0
        %v1088 = vunpack.c.l.bf16 %v857
        %v1089 = vunpack.c.h.bf16 %v857
        %v1090 = vadd.f32 %v1088, %v1039
        %v1091 = vadd.f32 %v1089, %v1043
        %v1092 = vxor.u32 %v1090, 2147483648
        %v1093 = vxor.u32 %v1091, 2147483648
        %v1094 = vmul.f32 %v1092, 1.442695
        %v1095 = vpow.pop %v1094
        %v1096 = vmul.f32 %v1093, 1.442695
        %v1097 = vpow.pop %v1096
        %v1098 = vadd.f32 %v1095, 1.0
        %v1099 = vadd.f32 %v1097, 1.0
        %v1100 = vrcp.pop %v1098
        %v1101 = vmul.f32 1.0, %v1100
        %v1102 = vrcp.pop %v1099
        %v1103 = vmul.f32 1.0, %v1102
        %v1104 = vunpack.c.l.bf16 %v858
        %v1105 = vunpack.c.h.bf16 %v858
        %v1106 = vadd.f32 %v1104, %v1041
        %v1107 = vadd.f32 %v1105, %v1045
        %v1108 = vxor.u32 %v1106, 2147483648
        %v1109 = vxor.u32 %v1107, 2147483648
        %v1110 = vmul.f32 %v1108, 1.442695
        %v1111 = vpow.pop %v1110
        %v1112 = vmul.f32 %v1109, 1.442695
        %v1113 = vpow.pop %v1112
        %v1114 = vadd.f32 %v1111, 1.0
        %v1115 = vadd.f32 %v1113, 1.0
        %v1116 = vrcp.pop %v1114
        %v1117 = vmul.f32 1.0, %v1116
        %v1118 = vrcp.pop %v1115
        %v1119 = vmul.f32 1.0, %v1118
        %v1120 = vmul.f32 %v1101, %v1082
        %v1121 = vmul.f32 %v1103, %v1085
        %v1122 = vunpack.c.l.bf16 %v859
        %v1123 = vunpack.c.h.bf16 %v859
        %v1124 = vadd.f32 %v1122, %v1120
        %v1125 = vadd.f32 %v1123, %v1121
        %v1126 = vtanh.pop %v1124
        %v1127 = vtanh.pop %v1125
        %v1128 = vsub.f32 1.0, %v1117
        %v1129 = vsub.f32 1.0, %v1119
        %v1130 = vmul.f32 %v1128, %v1126
        %v1131 = vmul.f32 %v1129, %v1127
        %v1132 = vmul.f32 %v1117, 0.0
        %v1133 = vmul.f32 %v1119, 0.0
        %v1134 = vadd.f32 %v1130, %v1132
        %v1135 = vadd.f32 %v1131, %v1133
        %s1136 = scalar_lea.vmem [#allocation2], 24
        %v1137 = vld [vmem:[%s1136] sm:$0xff]
        %v1138 = vld [vmem:[%s1136 + $0x8] sm:$0xff]
        %v1139 = vld [vmem:[%s1136 + $0x10] sm:$0xff]
        %v1140 = vpack.c.bf16 %v1135, %v1134
        %1141 = vmatprep.subr.bf16.mxu0 %v957
        %1142 = vmatpush1.bf16.msra.mxu0 %v956
        %1143 = vmatprep.subr.bf16.mxu0 %v960
        %1144 = vmatpush1.bf16.msra.mxu0 %v959
        %1145 = vmatprep.subr.bf16.mxu0 %v963
        %1146 = vmatpush1.bf16.msra.mxu0 %v962
        %1147 = vmatprep.subr.bf16.mxu0 %v966
        %1148 = vmatpush1.bf16.msra.mxu0 %v965
        %1149 = vmatprep.subr.bf16.mxu0 %v969
        %1150 = vmatpush1.bf16.msra.mxu0 %v968
        %1151 = vmatprep.subr.bf16.mxu0 %v972
        %1152 = vmatpush1.bf16.msra.mxu0 %v971
        %1153 = vmatprep.subr.bf16.mxu0 %v975
        %1154 = vmatpush1.bf16.msra.mxu0 %v974
        %1155 = vmatprep.subr.bf16.mxu0 %v978
        %1156 = vmatpush1.bf16.msra.mxu0 %v977
        %1157 = vmatprep.subr.bf16.mxu0 0
        %1158 = vmatpush1.bf16.msra.mxu0 0
        %1159 = vmatprep.subr.bf16.mxu0 0
        %1160 = vmatpush1.bf16.msra.mxu0 0
        %1161 = vmatprep.subr.bf16.mxu0 0
        %1162 = vmatpush1.bf16.msra.mxu0 0
        %1163 = vmatprep.subr.bf16.mxu0 0
        %1164 = vmatpush1.bf16.msra.mxu0 0
        %1165 = vmatprep.subr.bf16.mxu0 0
        %1166 = vmatpush1.bf16.msra.mxu0 0
        %1167 = vmatprep.subr.bf16.mxu0 0
        %1168 = vmatpush1.bf16.msra.mxu0 0
        %1169 = vmatprep.subr.bf16.mxu0 0
        %1170 = vmatpush1.bf16.msra.mxu0 0
        %1171 = vmatprep.subr.bf16.mxu0 0
        %1172 = vmatpush1.bf16.msra.mxu0 0
        %1173 = vmatprep.mubr.bf16.mxu0 0
        %1174 = vmatmul.mubr.bf16.gmra.mrb[0].mxu0 %v1140
        %v1175 = vpop.f32.mrb[0].mxu0
        %v1176 = vadd.f32 %v864, %v1175
        %v1177 = vpop.f32.mrb[0].mxu0
        %v1178 = vadd.f32 %v868, %v1177
        %v1179 = vpop.f32.mrb[0].mxu0
        %v1180 = vadd.f32 %v864, %v1179
        %v1181 = vpop.f32.mrb[0].mxu0
        %v1182 = vadd.f32 %v868, %v1181
        %1183 = vdwg.mxu0
        %1184 = vmatprep.subr.bf16.mxu0 0
        %1185 = vmatpush1.bf16.msra.mxu0 %v958
        %1186 = vmatprep.subr.bf16.mxu0 0
        %1187 = vmatpush1.bf16.msra.mxu0 %v961
        %1188 = vmatprep.subr.bf16.mxu0 0
        %1189 = vmatpush1.bf16.msra.mxu0 %v964
        %1190 = vmatprep.subr.bf16.mxu0 0
        %1191 = vmatpush1.bf16.msra.mxu0 %v967
        %1192 = vmatprep.subr.bf16.mxu0 0
        %1193 = vmatpush1.bf16.msra.mxu0 %v970
        %1194 = vmatprep.subr.bf16.mxu0 0
        %1195 = vmatpush1.bf16.msra.mxu0 %v973
        %1196 = vmatprep.subr.bf16.mxu0 0
        %1197 = vmatpush1.bf16.msra.mxu0 %v976
        %1198 = vmatprep.subr.bf16.mxu0 0
        %1199 = vmatpush1.bf16.msra.mxu0 %v979
        %1200 = vmatprep.subr.bf16.mxu0 0
        %1201 = vmatpush1.bf16.msra.mxu0 0
        %1202 = vmatprep.subr.bf16.mxu0 0
        %1203 = vmatpush1.bf16.msra.mxu0 0
        %1204 = vmatprep.subr.bf16.mxu0 0
        %1205 = vmatpush1.bf16.msra.mxu0 0
        %1206 = vmatprep.subr.bf16.mxu0 0
        %1207 = vmatpush1.bf16.msra.mxu0 0
        %1208 = vmatprep.subr.bf16.mxu0 0
        %1209 = vmatpush1.bf16.msra.mxu0 0
        %1210 = vmatprep.subr.bf16.mxu0 0
        %1211 = vmatpush1.bf16.msra.mxu0 0
        %1212 = vmatprep.subr.bf16.mxu0 0
        %1213 = vmatpush1.bf16.msra.mxu0 0
        %1214 = vmatprep.subr.bf16.mxu0 0
        %1215 = vmatpush1.bf16.msra.mxu0 0
        %1216 = vmatprep.mubr.bf16.mxu0 0
        %1217 = vmatmul.mubr.bf16.gmra.mrb[0].mxu0 %v1140
        %v1218 = vpop.f32.mrb[0].mxu0
        %v1219 = vadd.f32 %v872, %v1218
        %v1220 = vpop.f32.mrb[0].mxu0
        %v1221 = vpop.f32.mrb[0].mxu0
        %v1222 = vadd.f32 %v872, %v1221
        %v1223 = vpop.f32.mrb[0].mxu0
        %1224 = vdwg.mxu0
        %v1225 = vunpack.c.l.bf16 %v1137
        %v1226 = vunpack.c.h.bf16 %v1137
        %v1227 = vadd.f32 %v1225, %v1176
        %v1228 = vadd.f32 %v1226, %v1180
        %v1229 = vxor.u32 %v1227, 2147483648
        %v1230 = vxor.u32 %v1228, 2147483648
        %v1231 = vmul.f32 %v1229, 1.442695
        %v1232 = vpow.pop %v1231
        %v1233 = vmul.f32 %v1230, 1.442695
        %v1234 = vpow.pop %v1233
        %v1235 = vadd.f32 %v1232, 1.0
        %v1236 = vadd.f32 %v1234, 1.0
        %v1237 = vrcp.pop %v1235
        %v1238 = vmul.f32 1.0, %v1237
        %v1239 = vrcp.pop %v1236
        %v1240 = vmul.f32 1.0, %v1239
        %v1241 = vunpack.c.l.bf16 %v1138
        %v1242 = vunpack.c.h.bf16 %v1138
        %v1243 = vadd.f32 %v1241, %v1178
        %v1244 = vadd.f32 %v1242, %v1182
        %v1245 = vxor.u32 %v1243, 2147483648
        %v1246 = vxor.u32 %v1244, 2147483648
        %v1247 = vmul.f32 %v1245, 1.442695
        %v1248 = vpow.pop %v1247
        %v1249 = vmul.f32 %v1246, 1.442695
        %v1250 = vpow.pop %v1249
        %v1251 = vadd.f32 %v1248, 1.0
        %v1252 = vadd.f32 %v1250, 1.0
        %v1253 = vrcp.pop %v1251
        %v1254 = vmul.f32 1.0, %v1253
        %v1255 = vrcp.pop %v1252
        %v1256 = vmul.f32 1.0, %v1255
        %v1257 = vmul.f32 %v1238, %v1219
        %v1258 = vmul.f32 %v1240, %v1222
        %v1259 = vunpack.c.l.bf16 %v1139
        %v1260 = vunpack.c.h.bf16 %v1139
        %v1261 = vadd.f32 %v1259, %v1257
        %v1262 = vadd.f32 %v1260, %v1258
        %v1263 = vtanh.pop %v1261
        %v1264 = vtanh.pop %v1262
        %v1265 = vsub.f32 1.0, %v1254
        %v1266 = vsub.f32 1.0, %v1256
        %v1267 = vmul.f32 %v1265, %v1263
        %v1268 = vmul.f32 %v1266, %v1264
        %v1269 = vmul.f32 %v1254, %v1134
        %v1270 = vmul.f32 %v1256, %v1135
        %v1271 = vadd.f32 %v1267, %v1269
        %v1272 = vadd.f32 %v1268, %v1270
        %s1273 = scalar_lea.vmem [#allocation2], 48
        %v1274 = vld [vmem:[%s1273] sm:$0xff]
        %v1275 = vld [vmem:[%s1273 + $0x8] sm:$0xff]
        %v1276 = vld [vmem:[%s1273 + $0x10] sm:$0xff]
        %v1277 = vpack.c.bf16 %v1272, %v1271
        %1278 = vmatprep.subr.bf16.mxu0 %v957
        %1279 = vmatpush1.bf16.msra.mxu0 %v956
        %1280 = vmatprep.subr.bf16.mxu0 %v960
        %1281 = vmatpush1.bf16.msra.mxu0 %v959
        %1282 = vmatprep.subr.bf16.mxu0 %v963
        %1283 = vmatpush1.bf16.msra.mxu0 %v962
        %1284 = vmatprep.subr.bf16.mxu0 %v966
        %1285 = vmatpush1.bf16.msra.mxu0 %v965
        %1286 = vmatprep.subr.bf16.mxu0 %v969
        %1287 = vmatpush1.bf16.msra.mxu0 %v968
        %1288 = vmatprep.subr.bf16.mxu0 %v972
        %1289 = vmatpush1.bf16.msra.mxu0 %v971
        %1290 = vmatprep.subr.bf16.mxu0 %v975
        %1291 = vmatpush1.bf16.msra.mxu0 %v974
        %1292 = vmatprep.subr.bf16.mxu0 %v978
        %1293 = vmatpush1.bf16.msra.mxu0 %v977
        %1294 = vmatprep.subr.bf16.mxu0 0
        %1295 = vmatpush1.bf16.msra.mxu0 0
        %1296 = vmatprep.subr.bf16.mxu0 0
        %1297 = vmatpush1.bf16.msra.mxu0 0
        %1298 = vmatprep.subr.bf16.mxu0 0
        %1299 = vmatpush1.bf16.msra.mxu0 0
        %1300 = vmatprep.subr.bf16.mxu0 0
        %1301 = vmatpush1.bf16.msra.mxu0 0
        %1302 = vmatprep.subr.bf16.mxu0 0
        %1303 = vmatpush1.bf16.msra.mxu0 0
        %1304 = vmatprep.subr.bf16.mxu0 0
        %1305 = vmatpush1.bf16.msra.mxu0 0
        %1306 = vmatprep.subr.bf16.mxu0 0
        %1307 = vmatpush1.bf16.msra.mxu0 0
        %1308 = vmatprep.subr.bf16.mxu0 0
        %1309 = vmatpush1.bf16.msra.mxu0 0
        %1310 = vmatprep.mubr.bf16.mxu0 0
        %1311 = vmatmul.mubr.bf16.gmra.mrb[0].mxu0 %v1277
        %v1312 = vpop.f32.mrb[0].mxu0
        %v1313 = vadd.f32 %v864, %v1312
        %v1314 = vpop.f32.mrb[0].mxu0
        %v1315 = vadd.f32 %v868, %v1314
        %v1316 = vpop.f32.mrb[0].mxu0
        %v1317 = vadd.f32 %v864, %v1316
        %v1318 = vpop.f32.mrb[0].mxu0
        %v1319 = vadd.f32 %v868, %v1318
        %1320 = vdwg.mxu0
        %1321 = vmatprep.subr.bf16.mxu0 0
        %1322 = vmatpush1.bf16.msra.mxu0 %v958
        %1323 = vmatprep.subr.bf16.mxu0 0
        %1324 = vmatpush1.bf16.msra.mxu0 %v961
        %1325 = vmatprep.subr.bf16.mxu0 0
        %1326 = vmatpush1.bf16.msra.mxu0 %v964
        %1327 = vmatprep.subr.bf16.mxu0 0
        %1328 = vmatpush1.bf16.msra.mxu0 %v967
        %1329 = vmatprep.subr.bf16.mxu0 0
        %1330 = vmatpush1.bf16.msra.mxu0 %v970
        %1331 = vmatprep.subr.bf16.mxu0 0
        %1332 = vmatpush1.bf16.msra.mxu0 %v973
        %1333 = vmatprep.subr.bf16.mxu0 0
        %1334 = vmatpush1.bf16.msra.mxu0 %v976
        %1335 = vmatprep.subr.bf16.mxu0 0
        %1336 = vmatpush1.bf16.msra.mxu0 %v979
        %1337 = vmatprep.subr.bf16.mxu0 0
        %1338 = vmatpush1.bf16.msra.mxu0 0
        %1339 = vmatprep.subr.bf16.mxu0 0
        %1340 = vmatpush1.bf16.msra.mxu0 0
        %1341 = vmatprep.subr.bf16.mxu0 0
        %1342 = vmatpush1.bf16.msra.mxu0 0
        %1343 = vmatprep.subr.bf16.mxu0 0
        %1344 = vmatpush1.bf16.msra.mxu0 0
        %1345 = vmatprep.subr.bf16.mxu0 0
        %1346 = vmatpush1.bf16.msra.mxu0 0
        %1347 = vmatprep.subr.bf16.mxu0 0
        %1348 = vmatpush1.bf16.msra.mxu0 0
        %1349 = vmatprep.subr.bf16.mxu0 0
        %1350 = vmatpush1.bf16.msra.mxu0 0
        %1351 = vmatprep.subr.bf16.mxu0 0
        %1352 = vmatpush1.bf16.msra.mxu0 0
        %1353 = vmatprep.mubr.bf16.mxu0 0
        %1354 = vmatmul.mubr.bf16.gmra.mrb[0].mxu0 %v1277
        %v1355 = vpop.f32.mrb[0].mxu0
        %v1356 = vadd.f32 %v872, %v1355
        %v1357 = vpop.f32.mrb[0].mxu0
        %v1358 = vpop.f32.mrb[0].mxu0
        %v1359 = vadd.f32 %v872, %v1358
        %v1360 = vpop.f32.mrb[0].mxu0
        %1361 = vdwg.mxu0
        %v1362 = vunpack.c.l.bf16 %v1274
        %v1363 = vunpack.c.h.bf16 %v1274
        %v1364 = vadd.f32 %v1362, %v1313
        %v1365 = vadd.f32 %v1363, %v1317
        %v1366 = vxor.u32 %v1364, 2147483648
        %v1367 = vxor.u32 %v1365, 2147483648
        %v1368 = vmul.f32 %v1366, 1.442695
        %v1369 = vpow.pop %v1368
        %v1370 = vmul.f32 %v1367, 1.442695
        %v1371 = vpow.pop %v1370
        %v1372 = vadd.f32 %v1369, 1.0
        %v1373 = vadd.f32 %v1371, 1.0
        %v1374 = vrcp.pop %v1372
        %v1375 = vmul.f32 1.0, %v1374
        %v1376 = vrcp.pop %v1373
        %v1377 = vmul.f32 1.0, %v1376
        %v1378 = vunpack.c.l.bf16 %v1275
        %v1379 = vunpack.c.h.bf16 %v1275
        %v1380 = vadd.f32 %v1378, %v1315
        %v1381 = vadd.f32 %v1379, %v1319
        %v1382 = vxor.u32 %v1380, 2147483648
        %v1383 = vxor.u32 %v1381, 2147483648
        %v1384 = vmul.f32 %v1382, 1.442695
        %v1385 = vpow.pop %v1384
        %v1386 = vmul.f32 %v1383, 1.442695
        %v1387 = vpow.pop %v1386
        %v1388 = vadd.f32 %v1385, 1.0
        %v1389 = vadd.f32 %v1387, 1.0
        %v1390 = vrcp.pop %v1388
        %v1391 = vmul.f32 1.0, %v1390
        %v1392 = vrcp.pop %v1389
        %v1393 = vmul.f32 1.0, %v1392
        %v1394 = vmul.f32 %v1375, %v1356
        %v1395 = vmul.f32 %v1377, %v1359
        %v1396 = vunpack.c.l.bf16 %v1276
        %v1397 = vunpack.c.h.bf16 %v1276
        %v1398 = vadd.f32 %v1396, %v1394
        %v1399 = vadd.f32 %v1397, %v1395
        %v1400 = vtanh.pop %v1398
        %v1401 = vtanh.pop %v1399
        %v1402 = vsub.f32 1.0, %v1391
        %v1403 = vsub.f32 1.0, %v1393
        %v1404 = vmul.f32 %v1402, %v1400
        %v1405 = vmul.f32 %v1403, %v1401
        %v1406 = vmul.f32 %v1391, %v1271
        %v1407 = vmul.f32 %v1393, %v1272
        %v1408 = vadd.f32 %v1404, %v1406
        %v1409 = vadd.f32 %v1405, %v1407
        %s1410 = scalar_lea.vmem [#allocation2], 72
        %v1411 = vld [vmem:[%s1410] sm:$0xff]
        %v1412 = vld [vmem:[%s1410 + $0x8] sm:$0xff]
        %v1413 = vld [vmem:[%s1410 + $0x10] sm:$0xff]
        %v1414 = vpack.c.bf16 %v1409, %v1408
        %1415 = vmatprep.subr.bf16.mxu0 %v957
        %1416 = vmatpush1.bf16.msra.mxu0 %v956
        %1417 = vmatprep.subr.bf16.mxu0 %v960
        %1418 = vmatpush1.bf16.msra.mxu0 %v959
        %1419 = vmatprep.subr.bf16.mxu0 %v963
        %1420 = vmatpush1.bf16.msra.mxu0 %v962
        %1421 = vmatprep.subr.bf16.mxu0 %v966
        %1422 = vmatpush1.bf16.msra.mxu0 %v965
        %1423 = vmatprep.subr.bf16.mxu0 %v969
        %1424 = vmatpush1.bf16.msra.mxu0 %v968
        %1425 = vmatprep.subr.bf16.mxu0 %v972
        %1426 = vmatpush1.bf16.msra.mxu0 %v971
        %1427 = vmatprep.subr.bf16.mxu0 %v975
        %1428 = vmatpush1.bf16.msra.mxu0 %v974
        %1429 = vmatprep.subr.bf16.mxu0 %v978
        %1430 = vmatpush1.bf16.msra.mxu0 %v977
        %1431 = vmatprep.subr.bf16.mxu0 0
        %1432 = vmatpush1.bf16.msra.mxu0 0
        %1433 = vmatprep.subr.bf16.mxu0 0
        %1434 = vmatpush1.bf16.msra.mxu0 0
        %1435 = vmatprep.subr.bf16.mxu0 0
        %1436 = vmatpush1.bf16.msra.mxu0 0
        %1437 = vmatprep.subr.bf16.mxu0 0
        %1438 = vmatpush1.bf16.msra.mxu0 0
        %1439 = vmatprep.subr.bf16.mxu0 0
        %1440 = vmatpush1.bf16.msra.mxu0 0
        %1441 = vmatprep.subr.bf16.mxu0 0
        %1442 = vmatpush1.bf16.msra.mxu0 0
        %1443 = vmatprep.subr.bf16.mxu0 0
        %1444 = vmatpush1.bf16.msra.mxu0 0
        %1445 = vmatprep.subr.bf16.mxu0 0
        %1446 = vmatpush1.bf16.msra.mxu0 0
        %1447 = vmatprep.mubr.bf16.mxu0 0
        %1448 = vmatmul.mubr.bf16.gmra.mrb[0].mxu0 %v1414
        %v1449 = vpop.f32.mrb[0].mxu0
        %v1450 = vadd.f32 %v864, %v1449
        %v1451 = vpop.f32.mrb[0].mxu0
        %v1452 = vadd.f32 %v868, %v1451
        %v1453 = vpop.f32.mrb[0].mxu0
        %v1454 = vadd.f32 %v864, %v1453
        %v1455 = vpop.f32.mrb[0].mxu0
        %v1456 = vadd.f32 %v868, %v1455
        %1457 = vdwg.mxu0
        %1458 = vmatprep.subr.bf16.mxu0 0
        %1459 = vmatpush1.bf16.msra.mxu0 %v958
        %1460 = vmatprep.subr.bf16.mxu0 0
        %1461 = vmatpush1.bf16.msra.mxu0 %v961
        %1462 = vmatprep.subr.bf16.mxu0 0
        %1463 = vmatpush1.bf16.msra.mxu0 %v964
        %1464 = vmatprep.subr.bf16.mxu0 0
        %1465 = vmatpush1.bf16.msra.mxu0 %v967
        %1466 = vmatprep.subr.bf16.mxu0 0
        %1467 = vmatpush1.bf16.msra.mxu0 %v970
        %1468 = vmatprep.subr.bf16.mxu0 0
        %1469 = vmatpush1.bf16.msra.mxu0 %v973
        %1470 = vmatprep.subr.bf16.mxu0 0
        %1471 = vmatpush1.bf16.msra.mxu0 %v976
        %1472 = vmatprep.subr.bf16.mxu0 0
        %1473 = vmatpush1.bf16.msra.mxu0 %v979
        %1474 = vmatprep.subr.bf16.mxu0 0
        %1475 = vmatpush1.bf16.msra.mxu0 0
        %1476 = vmatprep.subr.bf16.mxu0 0
        %1477 = vmatpush1.bf16.msra.mxu0 0
        %1478 = vmatprep.subr.bf16.mxu0 0
        %1479 = vmatpush1.bf16.msra.mxu0 0
        %1480 = vmatprep.subr.bf16.mxu0 0
        %1481 = vmatpush1.bf16.msra.mxu0 0
        %1482 = vmatprep.subr.bf16.mxu0 0
        %1483 = vmatpush1.bf16.msra.mxu0 0
        %1484 = vmatprep.subr.bf16.mxu0 0
        %1485 = vmatpush1.bf16.msra.mxu0 0
        %1486 = vmatprep.subr.bf16.mxu0 0
        %1487 = vmatpush1.bf16.msra.mxu0 0
        %1488 = vmatprep.subr.bf16.mxu0 0
        %1489 = vmatpush1.bf16.msra.mxu0 0
        %1490 = vmatprep.mubr.bf16.mxu0 0
        %1491 = vmatmul.mubr.bf16.gmra.mrb[0].mxu0 %v1414
        %v1492 = vpop.f32.mrb[0].mxu0
        %v1493 = vadd.f32 %v872, %v1492
        %v1494 = vpop.f32.mrb[0].mxu0
        %v1495 = vpop.f32.mrb[0].mxu0
        %v1496 = vadd.f32 %v872, %v1495
        %v1497 = vpop.f32.mrb[0].mxu0
        %1498 = vdwg.mxu0
        %v1499 = vunpack.c.l.bf16 %v1411
        %v1500 = vunpack.c.h.bf16 %v1411
        %v1501 = vadd.f32 %v1499, %v1450
        %v1502 = vadd.f32 %v1500, %v1454
        %v1503 = vxor.u32 %v1501, 2147483648
        %v1504 = vxor.u32 %v1502, 2147483648
        %v1505 = vmul.f32 %v1503, 1.442695
        %v1506 = vpow.pop %v1505
        %v1507 = vmul.f32 %v1504, 1.442695
        %v1508 = vpow.pop %v1507
        %v1509 = vadd.f32 %v1506, 1.0
        %v1510 = vadd.f32 %v1508, 1.0
        %v1511 = vrcp.pop %v1509
        %v1512 = vmul.f32 1.0, %v1511
        %v1513 = vrcp.pop %v1510
        %v1514 = vmul.f32 1.0, %v1513
        %v1515 = vunpack.c.l.bf16 %v1412
        %v1516 = vunpack.c.h.bf16 %v1412
        %v1517 = vadd.f32 %v1515, %v1452
        %v1518 = vadd.f32 %v1516, %v1456
        %v1519 = vxor.u32 %v1517, 2147483648
        %v1520 = vxor.u32 %v1518, 2147483648
        %v1521 = vmul.f32 %v1519, 1.442695
        %v1522 = vpow.pop %v1521
        %v1523 = vmul.f32 %v1520, 1.442695
        %v1524 = vpow.pop %v1523
        %v1525 = vadd.f32 %v1522, 1.0
        %v1526 = vadd.f32 %v1524, 1.0
        %v1527 = vrcp.pop %v1525
        %v1528 = vmul.f32 1.0, %v1527
        %v1529 = vrcp.pop %v1526
        %v1530 = vmul.f32 1.0, %v1529
        %v1531 = vmul.f32 %v1512, %v1493
        %v1532 = vmul.f32 %v1514, %v1496
        %v1533 = vunpack.c.l.bf16 %v1413
        %v1534 = vunpack.c.h.bf16 %v1413
        %v1535 = vadd.f32 %v1533, %v1531
        %v1536 = vadd.f32 %v1534, %v1532
        %v1537 = vtanh.pop %v1535
        %v1538 = vtanh.pop %v1536
        %v1539 = vsub.f32 1.0, %v1528
        %v1540 = vsub.f32 1.0, %v1530
        %v1541 = vmul.f32 %v1539, %v1537
        %v1542 = vmul.f32 %v1540, %v1538
        %v1543 = vmul.f32 %v1528, %v1408
        %v1544 = vmul.f32 %v1530, %v1409
        %v1545 = vadd.f32 %v1541, %v1543
        %v1546 = vadd.f32 %v1542, %v1544
        %s1547 = scalar_lea.vmem [#allocation2], 96
        %v1548 = vld [vmem:[%s1547] sm:$0xff]
        %v1549 = vld [vmem:[%s1547 + $0x8] sm:$0xff]
        %v1550 = vld [vmem:[%s1547 + $0x10] sm:$0xff]
        %v1551 = vpack.c.bf16 %v1546, %v1545
        %1552 = vmatprep.subr.bf16.mxu0 %v957
        %1553 = vmatpush1.bf16.msra.mxu0 %v956
        %1554 = vmatprep.subr.bf16.mxu0 %v960
        %1555 = vmatpush1.bf16.msra.mxu0 %v959
        %1556 = vmatprep.subr.bf16.mxu0 %v963
        %1557 = vmatpush1.bf16.msra.mxu0 %v962
        %1558 = vmatprep.subr.bf16.mxu0 %v966
        %1559 = vmatpush1.bf16.msra.mxu0 %v965
        %1560 = vmatprep.subr.bf16.mxu0 %v969
        %1561 = vmatpush1.bf16.msra.mxu0 %v968
        %1562 = vmatprep.subr.bf16.mxu0 %v972
        %1563 = vmatpush1.bf16.msra.mxu0 %v971
        %1564 = vmatprep.subr.bf16.mxu0 %v975
        %1565 = vmatpush1.bf16.msra.mxu0 %v974
        %1566 = vmatprep.subr.bf16.mxu0 %v978
        %1567 = vmatpush1.bf16.msra.mxu0 %v977
        %1568 = vmatprep.subr.bf16.mxu0 0
        %1569 = vmatpush1.bf16.msra.mxu0 0
        %1570 = vmatprep.subr.bf16.mxu0 0
        %1571 = vmatpush1.bf16.msra.mxu0 0
        %1572 = vmatprep.subr.bf16.mxu0 0
        %1573 = vmatpush1.bf16.msra.mxu0 0
        %1574 = vmatprep.subr.bf16.mxu0 0
        %1575 = vmatpush1.bf16.msra.mxu0 0
        %1576 = vmatprep.subr.bf16.mxu0 0
        %1577 = vmatpush1.bf16.msra.mxu0 0
        %1578 = vmatprep.subr.bf16.mxu0 0
        %1579 = vmatpush1.bf16.msra.mxu0 0
        %1580 = vmatprep.subr.bf16.mxu0 0
        %1581 = vmatpush1.bf16.msra.mxu0 0
        %1582 = vmatprep.subr.bf16.mxu0 0
        %1583 = vmatpush1.bf16.msra.mxu0 0
        %1584 = vmatprep.mubr.bf16.mxu0 0
        %1585 = vmatmul.mubr.bf16.gmra.mrb[0].mxu0 %v1551
        %v1586 = vpop.f32.mrb[0].mxu0
        %v1587 = vadd.f32 %v864, %v1586
        %v1588 = vpop.f32.mrb[0].mxu0
        %v1589 = vadd.f32 %v868, %v1588
        %v1590 = vpop.f32.mrb[0].mxu0
        %v1591 = vadd.f32 %v864, %v1590
        %v1592 = vpop.f32.mrb[0].mxu0
        %v1593 = vadd.f32 %v868, %v1592
        %1594 = vdwg.mxu0
        %1595 = vmatprep.subr.bf16.mxu0 0
        %1596 = vmatpush1.bf16.msra.mxu0 %v958
        %1597 = vmatprep.subr.bf16.mxu0 0
        %1598 = vmatpush1.bf16.msra.mxu0 %v961
        %1599 = vmatprep.subr.bf16.mxu0 0
        %1600 = vmatpush1.bf16.msra.mxu0 %v964
        %1601 = vmatprep.subr.bf16.mxu0 0
        %1602 = vmatpush1.bf16.msra.mxu0 %v967
        %1603 = vmatprep.subr.bf16.mxu0 0
        %1604 = vmatpush1.bf16.msra.mxu0 %v970
        %1605 = vmatprep.subr.bf16.mxu0 0
        %1606 = vmatpush1.bf16.msra.mxu0 %v973
        %1607 = vmatprep.subr.bf16.mxu0 0
        %1608 = vmatpush1.bf16.msra.mxu0 %v976
        %1609 = vmatprep.subr.bf16.mxu0 0
        %1610 = vmatpush1.bf16.msra.mxu0 %v979
        %1611 = vmatprep.subr.bf16.mxu0 0
        %1612 = vmatpush1.bf16.msra.mxu0 0
        %1613 = vmatprep.subr.bf16.mxu0 0
        %1614 = vmatpush1.bf16.msra.mxu0 0
        %1615 = vmatprep.subr.bf16.mxu0 0
        %1616 = vmatpush1.bf16.msra.mxu0 0
        %1617 = vmatprep.subr.bf16.mxu0 0
        %1618 = vmatpush1.bf16.msra.mxu0 0
        %1619 = vmatprep.subr.bf16.mxu0 0
        %1620 = vmatpush1.bf16.msra.mxu0 0
        %1621 = vmatprep.subr.bf16.mxu0 0
        %1622 = vmatpush1.bf16.msra.mxu0 0
        %1623 = vmatprep.subr.bf16.mxu0 0
        %1624 = vmatpush1.bf16.msra.mxu0 0
        %1625 = vmatprep.subr.bf16.mxu0 0
        %1626 = vmatpush1.bf16.msra.mxu0 0
        %1627 = vmatprep.mubr.bf16.mxu0 0
        %1628 = vmatmul.mubr.bf16.gmra.mrb[0].mxu0 %v1551
        %v1629 = vpop.f32.mrb[0].mxu0
        %v1630 = vadd.f32 %v872, %v1629
        %v1631 = vpop.f32.mrb[0].mxu0
        %v1632 = vpop.f32.mrb[0].mxu0
        %v1633 = vadd.f32 %v872, %v1632
        %v1634 = vpop.f32.mrb[0].mxu0
        %1635 = vdwg.mxu0
        %v1636 = vunpack.c.l.bf16 %v1548
        %v1637 = vunpack.c.h.bf16 %v1548
        %v1638 = vadd.f32 %v1636, %v1587
        %v1639 = vadd.f32 %v1637, %v1591
        %v1640 = vxor.u32 %v1638, 2147483648
        %v1641 = vxor.u32 %v1639, 2147483648
        %v1642 = vmul.f32 %v1640, 1.442695
        %v1643 = vpow.pop %v1642
        %v1644 = vmul.f32 %v1641, 1.442695
        %v1645 = vpow.pop %v1644
        %v1646 = vadd.f32 %v1643, 1.0
        %v1647 = vadd.f32 %v1645, 1.0
        %v1648 = vrcp.pop %v1646
        %v1649 = vmul.f32 1.0, %v1648
        %v1650 = vrcp.pop %v1647
        %v1651 = vmul.f32 1.0, %v1650
        %v1652 = vunpack.c.l.bf16 %v1549
        %v1653 = vunpack.c.h.bf16 %v1549
        %v1654 = vadd.f32 %v1652, %v1589
        %v1655 = vadd.f32 %v1653, %v1593
        %v1656 = vxor.u32 %v1654, 2147483648
        %v1657 = vxor.u32 %v1655, 2147483648
        %v1658 = vmul.f32 %v1656, 1.442695
        %v1659 = vpow.pop %v1658
        %v1660 = vmul.f32 %v1657, 1.442695
        %v1661 = vpow.pop %v1660
        %v1662 = vadd.f32 %v1659, 1.0
        %v1663 = vadd.f32 %v1661, 1.0
        %v1664 = vrcp.pop %v1662
        %v1665 = vmul.f32 1.0, %v1664
        %v1666 = vrcp.pop %v1663
        %v1667 = vmul.f32 1.0, %v1666
        %v1668 = vmul.f32 %v1649, %v1630
        %v1669 = vmul.f32 %v1651, %v1633
        %v1670 = vunpack.c.l.bf16 %v1550
        %v1671 = vunpack.c.h.bf16 %v1550
        %v1672 = vadd.f32 %v1670, %v1668
        %v1673 = vadd.f32 %v1671, %v1669
        %v1674 = vtanh.pop %v1672
        %v1675 = vtanh.pop %v1673
        %v1676 = vsub.f32 1.0, %v1665
        %v1677 = vsub.f32 1.0, %v1667
        %v1678 = vmul.f32 %v1676, %v1674
        %v1679 = vmul.f32 %v1677, %v1675
        %v1680 = vmul.f32 %v1665, %v1545
        %v1681 = vmul.f32 %v1667, %v1546
        %v1682 = vadd.f32 %v1678, %v1680
        %v1683 = vadd.f32 %v1679, %v1681
        %s1684 = scalar_lea.vmem [#allocation2], 120
        %v1685 = vld [vmem:[%s1684] sm:$0xff]
        %v1686 = vld [vmem:[%s1684 + $0x8] sm:$0xff]
        %v1687 = vld [vmem:[%s1684 + $0x10] sm:$0xff]
        %v1688 = vpack.c.bf16 %v1683, %v1682
        %1689 = vmatprep.subr.bf16.mxu0 %v957
        %1690 = vmatpush1.bf16.msra.mxu0 %v956
        %1691 = vmatprep.subr.bf16.mxu0 %v960
        %1692 = vmatpush1.bf16.msra.mxu0 %v959
        %1693 = vmatprep.subr.bf16.mxu0 %v963
        %1694 = vmatpush1.bf16.msra.mxu0 %v962
        %1695 = vmatprep.subr.bf16.mxu0 %v966
        %1696 = vmatpush1.bf16.msra.mxu0 %v965
        %1697 = vmatprep.subr.bf16.mxu0 %v969
        %1698 = vmatpush1.bf16.msra.mxu0 %v968
        %1699 = vmatprep.subr.bf16.mxu0 %v972
        %1700 = vmatpush1.bf16.msra.mxu0 %v971
        %1701 = vmatprep.subr.bf16.mxu0 %v975
        %1702 = vmatpush1.bf16.msra.mxu0 %v974
        %1703 = vmatprep.subr.bf16.mxu0 %v978
        %1704 = vmatpush1.bf16.msra.mxu0 %v977
        %1705 = vmatprep.subr.bf16.mxu0 0
        %1706 = vmatpush1.bf16.msra.mxu0 0
        %1707 = vmatprep.subr.bf16.mxu0 0
        %1708 = vmatpush1.bf16.msra.mxu0 0
        %1709 = vmatprep.subr.bf16.mxu0 0
        %1710 = vmatpush1.bf16.msra.mxu0 0
        %1711 = vmatprep.subr.bf16.mxu0 0
        %1712 = vmatpush1.bf16.msra.mxu0 0
        %1713 = vmatprep.subr.bf16.mxu0 0
        %1714 = vmatpush1.bf16.msra.mxu0 0
        %1715 = vmatprep.subr.bf16.mxu0 0
        %1716 = vmatpush1.bf16.msra.mxu0 0
        %1717 = vmatprep.subr.bf16.mxu0 0
        %1718 = vmatpush1.bf16.msra.mxu0 0
        %1719 = vmatprep.subr.bf16.mxu0 0
        %1720 = vmatpush1.bf16.msra.mxu0 0
        %1721 = vmatprep.mubr.bf16.mxu0 0
        %1722 = vmatmul.mubr.bf16.gmra.mrb[0].mxu0 %v1688
        %v1723 = vpop.f32.mrb[0].mxu0
        %v1724 = vadd.f32 %v864, %v1723
        %v1725 = vpop.f32.mrb[0].mxu0
        %v1726 = vadd.f32 %v868, %v1725
        %v1727 = vpop.f32.mrb[0].mxu0
        %v1728 = vadd.f32 %v864, %v1727
        %v1729 = vpop.f32.mrb[0].mxu0
        %v1730 = vadd.f32 %v868, %v1729
        %1731 = vdwg.mxu0
        %1732 = vmatprep.subr.bf16.mxu0 0
        %1733 = vmatpush1.bf16.msra.mxu0 %v958
        %1734 = vmatprep.subr.bf16.mxu0 0
        %1735 = vmatpush1.bf16.msra.mxu0 %v961
        %1736 = vmatprep.subr.bf16.mxu0 0
        %1737 = vmatpush1.bf16.msra.mxu0 %v964
        %1738 = vmatprep.subr.bf16.mxu0 0
        %1739 = vmatpush1.bf16.msra.mxu0 %v967
        %1740 = vmatprep.subr.bf16.mxu0 0
        %1741 = vmatpush1.bf16.msra.mxu0 %v970
        %1742 = vmatprep.subr.bf16.mxu0 0
        %1743 = vmatpush1.bf16.msra.mxu0 %v973
        %1744 = vmatprep.subr.bf16.mxu0 0
        %1745 = vmatpush1.bf16.msra.mxu0 %v976
        %1746 = vmatprep.subr.bf16.mxu0 0
        %1747 = vmatpush1.bf16.msra.mxu0 %v979
        %1748 = vmatprep.subr.bf16.mxu0 0
        %1749 = vmatpush1.bf16.msra.mxu0 0
        %1750 = vmatprep.subr.bf16.mxu0 0
        %1751 = vmatpush1.bf16.msra.mxu0 0
        %1752 = vmatprep.subr.bf16.mxu0 0
        %1753 = vmatpush1.bf16.msra.mxu0 0
        %1754 = vmatprep.subr.bf16.mxu0 0
        %1755 = vmatpush1.bf16.msra.mxu0 0
        %1756 = vmatprep.subr.bf16.mxu0 0
        %1757 = vmatpush1.bf16.msra.mxu0 0
        %1758 = vmatprep.subr.bf16.mxu0 0
        %1759 = vmatpush1.bf16.msra.mxu0 0
        %1760 = vmatprep.subr.bf16.mxu0 0
        %1761 = vmatpush1.bf16.msra.mxu0 0
        %1762 = vmatprep.subr.bf16.mxu0 0
        %1763 = vmatpush1.bf16.msra.mxu0 0
        %1764 = vmatprep.mubr.bf16.mxu0 0
        %1765 = vmatmul.mubr.bf16.gmra.mrb[0].mxu0 %v1688
        %v1766 = vpop.f32.mrb[0].mxu0
        %v1767 = vadd.f32 %v872, %v1766
        %v1768 = vpop.f32.mrb[0].mxu0
        %v1769 = vpop.f32.mrb[0].mxu0
        %v1770 = vadd.f32 %v872, %v1769
        %v1771 = vpop.f32.mrb[0].mxu0
        %1772 = vdwg.mxu0
        %v1773 = vunpack.c.l.bf16 %v1685
        %v1774 = vunpack.c.h.bf16 %v1685
        %v1775 = vadd.f32 %v1773, %v1724
        %v1776 = vadd.f32 %v1774, %v1728
        %v1777 = vxor.u32 %v1775, 2147483648
        %v1778 = vxor.u32 %v1776, 2147483648
        %v1779 = vmul.f32 %v1777, 1.442695
        %v1780 = vpow.pop %v1779
        %v1781 = vmul.f32 %v1778, 1.442695
        %v1782 = vpow.pop %v1781
        %v1783 = vadd.f32 %v1780, 1.0
        %v1784 = vadd.f32 %v1782, 1.0
        %v1785 = vrcp.pop %v1783
        %v1786 = vmul.f32 1.0, %v1785
        %v1787 = vrcp.pop %v1784
        %v1788 = vmul.f32 1.0, %v1787
        %v1789 = vunpack.c.l.bf16 %v1686
        %v1790 = vunpack.c.h.bf16 %v1686
        %v1791 = vadd.f32 %v1789, %v1726
        %v1792 = vadd.f32 %v1790, %v1730
        %v1793 = vxor.u32 %v1791, 2147483648
        %v1794 = vxor.u32 %v1792, 2147483648
        %v1795 = vmul.f32 %v1793, 1.442695
        %v1796 = vpow.pop %v1795
        %v1797 = vmul.f32 %v1794, 1.442695
        %v1798 = vpow.pop %v1797
        %v1799 = vadd.f32 %v1796, 1.0
        %v1800 = vadd.f32 %v1798, 1.0
        %v1801 = vrcp.pop %v1799
        %v1802 = vmul.f32 1.0, %v1801
        %v1803 = vrcp.pop %v1800
        %v1804 = vmul.f32 1.0, %v1803
        %v1805 = vmul.f32 %v1786, %v1767
        %v1806 = vmul.f32 %v1788, %v1770
        %v1807 = vunpack.c.l.bf16 %v1687
        %v1808 = vunpack.c.h.bf16 %v1687
        %v1809 = vadd.f32 %v1807, %v1805
        %v1810 = vadd.f32 %v1808, %v1806
        %v1811 = vtanh.pop %v1809
        %v1812 = vtanh.pop %v1810
        %v1813 = vsub.f32 1.0, %v1802
        %v1814 = vsub.f32 1.0, %v1804
        %v1815 = vmul.f32 %v1813, %v1811
        %v1816 = vmul.f32 %v1814, %v1812
        %v1817 = vmul.f32 %v1802, %v1682
        %v1818 = vmul.f32 %v1804, %v1683
        %v1819 = vadd.f32 %v1815, %v1817
        %v1820 = vadd.f32 %v1816, %v1818
        %s1821 = scalar_lea.vmem [#allocation2], 144
        %v1822 = vld [vmem:[%s1821] sm:$0xff]
        %v1823 = vld [vmem:[%s1821 + $0x8] sm:$0xff]
        %v1824 = vld [vmem:[%s1821 + $0x10] sm:$0xff]
        %v1825 = vpack.c.bf16 %v1820, %v1819
        %1826 = vmatprep.subr.bf16.mxu0 %v957
        %1827 = vmatpush1.bf16.msra.mxu0 %v956
        %1828 = vmatprep.subr.bf16.mxu0 %v960
        %1829 = vmatpush1.bf16.msra.mxu0 %v959
        %1830 = vmatprep.subr.bf16.mxu0 %v963
        %1831 = vmatpush1.bf16.msra.mxu0 %v962
        %1832 = vmatprep.subr.bf16.mxu0 %v966
        %1833 = vmatpush1.bf16.msra.mxu0 %v965
        %1834 = vmatprep.subr.bf16.mxu0 %v969
        %1835 = vmatpush1.bf16.msra.mxu0 %v968
        %1836 = vmatprep.subr.bf16.mxu0 %v972
        %1837 = vmatpush1.bf16.msra.mxu0 %v971
        %1838 = vmatprep.subr.bf16.mxu0 %v975
        %1839 = vmatpush1.bf16.msra.mxu0 %v974
        %1840 = vmatprep.subr.bf16.mxu0 %v978
        %1841 = vmatpush1.bf16.msra.mxu0 %v977
        %1842 = vmatprep.subr.bf16.mxu0 0
        %1843 = vmatpush1.bf16.msra.mxu0 0
        %1844 = vmatprep.subr.bf16.mxu0 0
        %1845 = vmatpush1.bf16.msra.mxu0 0
        %1846 = vmatprep.subr.bf16.mxu0 0
        %1847 = vmatpush1.bf16.msra.mxu0 0
        %1848 = vmatprep.subr.bf16.mxu0 0
        %1849 = vmatpush1.bf16.msra.mxu0 0
        %1850 = vmatprep.subr.bf16.mxu0 0
        %1851 = vmatpush1.bf16.msra.mxu0 0
        %1852 = vmatprep.subr.bf16.mxu0 0
        %1853 = vmatpush1.bf16.msra.mxu0 0
        %1854 = vmatprep.subr.bf16.mxu0 0
        %1855 = vmatpush1.bf16.msra.mxu0 0
        %1856 = vmatprep.subr.bf16.mxu0 0
        %1857 = vmatpush1.bf16.msra.mxu0 0
        %1858 = vmatprep.mubr.bf16.mxu0 0
        %1859 = vmatmul.mubr.bf16.gmra.mrb[0].mxu0 %v1825
        %v1860 = vpop.f32.mrb[0].mxu0
        %v1861 = vadd.f32 %v864, %v1860
        %v1862 = vpop.f32.mrb[0].mxu0
        %v1863 = vadd.f32 %v868, %v1862
        %v1864 = vpop.f32.mrb[0].mxu0
        %v1865 = vadd.f32 %v864, %v1864
        %v1866 = vpop.f32.mrb[0].mxu0
        %v1867 = vadd.f32 %v868, %v1866
        %1868 = vdwg.mxu0
        %1869 = vmatprep.subr.bf16.mxu0 0
        %1870 = vmatpush1.bf16.msra.mxu0 %v958
        %1871 = vmatprep.subr.bf16.mxu0 0
        %1872 = vmatpush1.bf16.msra.mxu0 %v961
        %1873 = vmatprep.subr.bf16.mxu0 0
        %1874 = vmatpush1.bf16.msra.mxu0 %v964
        %1875 = vmatprep.subr.bf16.mxu0 0
        %1876 = vmatpush1.bf16.msra.mxu0 %v967
        %1877 = vmatprep.subr.bf16.mxu0 0
        %1878 = vmatpush1.bf16.msra.mxu0 %v970
        %1879 = vmatprep.subr.bf16.mxu0 0
        %1880 = vmatpush1.bf16.msra.mxu0 %v973
        %1881 = vmatprep.subr.bf16.mxu0 0
        %1882 = vmatpush1.bf16.msra.mxu0 %v976
        %1883 = vmatprep.subr.bf16.mxu0 0
        %1884 = vmatpush1.bf16.msra.mxu0 %v979
        %1885 = vmatprep.subr.bf16.mxu0 0
        %1886 = vmatpush1.bf16.msra.mxu0 0
        %1887 = vmatprep.subr.bf16.mxu0 0
        %1888 = vmatpush1.bf16.msra.mxu0 0
        %1889 = vmatprep.subr.bf16.mxu0 0
        %1890 = vmatpush1.bf16.msra.mxu0 0
        %1891 = vmatprep.subr.bf16.mxu0 0
        %1892 = vmatpush1.bf16.msra.mxu0 0
        %1893 = vmatprep.subr.bf16.mxu0 0
        %1894 = vmatpush1.bf16.msra.mxu0 0
        %1895 = vmatprep.subr.bf16.mxu0 0
        %1896 = vmatpush1.bf16.msra.mxu0 0
        %1897 = vmatprep.subr.bf16.mxu0 0
        %1898 = vmatpush1.bf16.msra.mxu0 0
        %1899 = vmatprep.subr.bf16.mxu0 0
        %1900 = vmatpush1.bf16.msra.mxu0 0
        %1901 = vmatprep.mubr.bf16.mxu0 0
        %1902 = vmatmul.mubr.bf16.gmra.mrb[0].mxu0 %v1825
        %v1903 = vpop.f32.mrb[0].mxu0
        %v1904 = vadd.f32 %v872, %v1903
        %v1905 = vpop.f32.mrb[0].mxu0
        %v1906 = vpop.f32.mrb[0].mxu0
        %v1907 = vadd.f32 %v872, %v1906
        %v1908 = vpop.f32.mrb[0].mxu0
        %1909 = vdwg.mxu0
        %v1910 = vunpack.c.l.bf16 %v1822
        %v1911 = vunpack.c.h.bf16 %v1822
        %v1912 = vadd.f32 %v1910, %v1861
        %v1913 = vadd.f32 %v1911, %v1865
        %v1914 = vxor.u32 %v1912, 2147483648
        %v1915 = vxor.u32 %v1913, 2147483648
        %v1916 = vmul.f32 %v1914, 1.442695
        %v1917 = vpow.pop %v1916
        %v1918 = vmul.f32 %v1915, 1.442695
        %v1919 = vpow.pop %v1918
        %v1920 = vadd.f32 %v1917, 1.0
        %v1921 = vadd.f32 %v1919, 1.0
        %v1922 = vrcp.pop %v1920
        %v1923 = vmul.f32 1.0, %v1922
        %v1924 = vrcp.pop %v1921
        %v1925 = vmul.f32 1.0, %v1924
        %v1926 = vunpack.c.l.bf16 %v1823
        %v1927 = vunpack.c.h.bf16 %v1823
        %v1928 = vadd.f32 %v1926, %v1863
        %v1929 = vadd.f32 %v1927, %v1867
        %v1930 = vxor.u32 %v1928, 2147483648
        %v1931 = vxor.u32 %v1929, 2147483648
        %v1932 = vmul.f32 %v1930, 1.442695
        %v1933 = vpow.pop %v1932
        %v1934 = vmul.f32 %v1931, 1.442695
        %v1935 = vpow.pop %v1934
        %v1936 = vadd.f32 %v1933, 1.0
        %v1937 = vadd.f32 %v1935, 1.0
        %v1938 = vrcp.pop %v1936
        %v1939 = vmul.f32 1.0, %v1938
        %v1940 = vrcp.pop %v1937
        %v1941 = vmul.f32 1.0, %v1940
        %v1942 = vmul.f32 %v1923, %v1904
        %v1943 = vmul.f32 %v1925, %v1907
        %v1944 = vunpack.c.l.bf16 %v1824
        %v1945 = vunpack.c.h.bf16 %v1824
        %v1946 = vadd.f32 %v1944, %v1942
        %v1947 = vadd.f32 %v1945, %v1943
        %v1948 = vtanh.pop %v1946
        %v1949 = vtanh.pop %v1947
        %v1950 = vsub.f32 1.0, %v1939
        %v1951 = vsub.f32 1.0, %v1941
        %v1952 = vmul.f32 %v1950, %v1948
        %v1953 = vmul.f32 %v1951, %v1949
        %v1954 = vmul.f32 %v1939, %v1819
        %v1955 = vmul.f32 %v1941, %v1820
        %v1956 = vadd.f32 %v1952, %v1954
        %v1957 = vadd.f32 %v1953, %v1955
        %s1958 = scalar_lea.vmem [#allocation2], 168
        %v1959 = vld [vmem:[%s1958] sm:$0xff]
        %v1960 = vld [vmem:[%s1958 + $0x8] sm:$0xff]
        %v1961 = vld [vmem:[%s1958 + $0x10] sm:$0xff]
        %v1962 = vpack.c.bf16 %v1957, %v1956
        %1963 = vmatprep.subr.bf16.mxu0 %v957
        %1964 = vmatpush1.bf16.msra.mxu0 %v956
        %1965 = vmatprep.subr.bf16.mxu0 %v960
        %1966 = vmatpush1.bf16.msra.mxu0 %v959
        %1967 = vmatprep.subr.bf16.mxu0 %v963
        %1968 = vmatpush1.bf16.msra.mxu0 %v962
        %1969 = vmatprep.subr.bf16.mxu0 %v966
        %1970 = vmatpush1.bf16.msra.mxu0 %v965
        %1971 = vmatprep.subr.bf16.mxu0 %v969
        %1972 = vmatpush1.bf16.msra.mxu0 %v968
        %1973 = vmatprep.subr.bf16.mxu0 %v972
        %1974 = vmatpush1.bf16.msra.mxu0 %v971
        %1975 = vmatprep.subr.bf16.mxu0 %v975
        %1976 = vmatpush1.bf16.msra.mxu0 %v974
        %1977 = vmatprep.subr.bf16.mxu0 %v978
        %1978 = vmatpush1.bf16.msra.mxu0 %v977
        %1979 = vmatprep.subr.bf16.mxu0 0
        %1980 = vmatpush1.bf16.msra.mxu0 0
        %1981 = vmatprep.subr.bf16.mxu0 0
        %1982 = vmatpush1.bf16.msra.mxu0 0
        %1983 = vmatprep.subr.bf16.mxu0 0
        %1984 = vmatpush1.bf16.msra.mxu0 0
        %1985 = vmatprep.subr.bf16.mxu0 0
        %1986 = vmatpush1.bf16.msra.mxu0 0
        %1987 = vmatprep.subr.bf16.mxu0 0
        %1988 = vmatpush1.bf16.msra.mxu0 0
        %1989 = vmatprep.subr.bf16.mxu0 0
        %1990 = vmatpush1.bf16.msra.mxu0 0
        %1991 = vmatprep.subr.bf16.mxu0 0
        %1992 = vmatpush1.bf16.msra.mxu0 0
        %1993 = vmatprep.subr.bf16.mxu0 0
        %1994 = vmatpush1.bf16.msra.mxu0 0
        %1995 = vmatprep.mubr.bf16.mxu0 0
        %1996 = vmatmul.mubr.bf16.gmra.mrb[0].mxu0 %v1962
        %v1997 = vpop.f32.mrb[0].mxu0
        %v1998 = vadd.f32 %v864, %v1997
        %v1999 = vpop.f32.mrb[0].mxu0
        %v2000 = vadd.f32 %v868, %v1999
        %v2001 = vpop.f32.mrb[0].mxu0
        %v2002 = vadd.f32 %v864, %v2001
        %v2003 = vpop.f32.mrb[0].mxu0
        %v2004 = vadd.f32 %v868, %v2003
        %2005 = vdwg.mxu0
        %2006 = vmatprep.subr.bf16.mxu0 0
        %2007 = vmatpush1.bf16.msra.mxu0 %v958
        %2008 = vmatprep.subr.bf16.mxu0 0
        %2009 = vmatpush1.bf16.msra.mxu0 %v961
        %2010 = vmatprep.subr.bf16.mxu0 0
        %2011 = vmatpush1.bf16.msra.mxu0 %v964
        %2012 = vmatprep.subr.bf16.mxu0 0
        %2013 = vmatpush1.bf16.msra.mxu0 %v967
        %2014 = vmatprep.subr.bf16.mxu0 0
        %2015 = vmatpush1.bf16.msra.mxu0 %v970
        %2016 = vmatprep.subr.bf16.mxu0 0
        %2017 = vmatpush1.bf16.msra.mxu0 %v973
        %2018 = vmatprep.subr.bf16.mxu0 0
        %2019 = vmatpush1.bf16.msra.mxu0 %v976
        %2020 = vmatprep.subr.bf16.mxu0 0
        %2021 = vmatpush1.bf16.msra.mxu0 %v979
        %2022 = vmatprep.subr.bf16.mxu0 0
        %2023 = vmatpush1.bf16.msra.mxu0 0
        %2024 = vmatprep.subr.bf16.mxu0 0
        %2025 = vmatpush1.bf16.msra.mxu0 0
        %2026 = vmatprep.subr.bf16.mxu0 0
        %2027 = vmatpush1.bf16.msra.mxu0 0
        %2028 = vmatprep.subr.bf16.mxu0 0
        %2029 = vmatpush1.bf16.msra.mxu0 0
        %2030 = vmatprep.subr.bf16.mxu0 0
        %2031 = vmatpush1.bf16.msra.mxu0 0
        %2032 = vmatprep.subr.bf16.mxu0 0
        %2033 = vmatpush1.bf16.msra.mxu0 0
        %2034 = vmatprep.subr.bf16.mxu0 0
        %2035 = vmatpush1.bf16.msra.mxu0 0
        %2036 = vmatprep.subr.bf16.mxu0 0
        %2037 = vmatpush1.bf16.msra.mxu0 0
        %2038 = vmatprep.mubr.bf16.mxu0 0
        %2039 = vmatmul.mubr.bf16.gmra.mrb[0].mxu0 %v1962
        %v2040 = vpop.f32.mrb[0].mxu0
        %v2041 = vadd.f32 %v872, %v2040
        %v2042 = vpop.f32.mrb[0].mxu0
        %v2043 = vpop.f32.mrb[0].mxu0
        %v2044 = vadd.f32 %v872, %v2043
        %v2045 = vpop.f32.mrb[0].mxu0
        %2046 = vdwg.mxu0
        %v2047 = vunpack.c.l.bf16 %v1959
        %v2048 = vunpack.c.h.bf16 %v1959
        %v2049 = vadd.f32 %v2047, %v1998
        %v2050 = vadd.f32 %v2048, %v2002
        %v2051 = vxor.u32 %v2049, 2147483648
        %v2052 = vxor.u32 %v2050, 2147483648
        %v2053 = vmul.f32 %v2051, 1.442695
        %v2054 = vpow.pop %v2053
        %v2055 = vmul.f32 %v2052, 1.442695
        %v2056 = vpow.pop %v2055
        %v2057 = vadd.f32 %v2054, 1.0
        %v2058 = vadd.f32 %v2056, 1.0
        %v2059 = vrcp.pop %v2057
        %v2060 = vmul.f32 1.0, %v2059
        %v2061 = vrcp.pop %v2058
        %v2062 = vmul.f32 1.0, %v2061
        %v2063 = vunpack.c.l.bf16 %v1960
        %v2064 = vunpack.c.h.bf16 %v1960
        %v2065 = vadd.f32 %v2063, %v2000
        %v2066 = vadd.f32 %v2064, %v2004
        %v2067 = vxor.u32 %v2065, 2147483648
        %v2068 = vxor.u32 %v2066, 2147483648
        %v2069 = vmul.f32 %v2067, 1.442695
        %v2070 = vpow.pop %v2069
        %v2071 = vmul.f32 %v2068, 1.442695
        %v2072 = vpow.pop %v2071
        %v2073 = vadd.f32 %v2070, 1.0
        %v2074 = vadd.f32 %v2072, 1.0
        %v2075 = vrcp.pop %v2073
        %v2076 = vmul.f32 1.0, %v2075
        %v2077 = vrcp.pop %v2074
        %v2078 = vmul.f32 1.0, %v2077
        %v2079 = vmul.f32 %v2060, %v2041
        %v2080 = vmul.f32 %v2062, %v2044
        %v2081 = vunpack.c.l.bf16 %v1961
        %v2082 = vunpack.c.h.bf16 %v1961
        %v2083 = vadd.f32 %v2081, %v2079
        %v2084 = vadd.f32 %v2082, %v2080
        %v2085 = vtanh.pop %v2083
        %v2086 = vtanh.pop %v2084
        %v2087 = vsub.f32 1.0, %v2076
        %v2088 = vsub.f32 1.0, %v2078
        %v2089 = vmul.f32 %v2087, %v2085
        %v2090 = vmul.f32 %v2088, %v2086
        %v2091 = vmul.f32 %v2076, %v1956
        %v2092 = vmul.f32 %v2078, %v1957
        %v2093 = vadd.f32 %v2089, %v2091
        %v2094 = vadd.f32 %v2090, %v2092
        %2095 = vst [vmem:[%s321] sm:$0xff] %v2093
        %2096 = vst [vmem:[%s321 + $0x8] sm:$0xff] %v2094
        %s2097 = sand.u32 %s142, 1
        %s2098 = scalar_lea.sflag [#allocation5], %s2097
        %s2099 = sand.u32 %s142, 1
        %s2100 = smul.addr %s2099, 16
        %s2101 = scalar_lea.vmem [#allocation12], %s2100
        // Predicated region
        $region61: #{_lambda_.2} parent=39 // pred_check
          %p2102 = pneg %p152
        $region62: #{_lambda_.2} parent=39 // pred_check_branch
          %2104 = sbr.rel (%p2102) target = $region64
        $region63: #{_lambda_.2} parent=39 // pred_region
          %s2105 = smul.u32 2, %s24
          %s2107 = ssub.s32 256, 256
          %2108 = vsyncadd %s2098, %s2107
          %s2109 = smul.addr %s2105, 128
          %s2110 = scalar_lea.hbm %s5, %s2109
          %s2111 = sshll.u32 %s2101, 4
          %s2112 = int_to_ptr.vmem [resolvable:$true] %s2111
          %2117 = dma.vmem_to_hbm [thread:$0]  %s2112, 256, %s2110, %s2098, 128, 128, 8
        $region64: #{_lambda_.2} parent=39 // pred_fallthru
          _
      $region40: #{_lambda_.2} parent=5 // pred_fallthru
        _
      %p2118 = scmp.le.s32.totalorder 2, %s19
      // Predicated region
      $region65: #{_lambda_.2} parent=5 // pred_check
        %p2119 = pneg %p2118
      $region66: #{_lambda_.2} parent=5 // pred_check_branch
        %2121 = sbr.rel (%p2119) target = $region68
      $region67: #{_lambda_.2} parent=5 // pred_region
        %s2122 = ssub.s32 %s19, 2
        // Predicated region
        $region69: #{_lambda_.2} parent=67 // pred_check
          %p2123 = pneg %p158
        $region70: #{_lambda_.2} parent=67 // pred_check_branch
          %2125 = sbr.rel (%p2123) target = $region72
        $region71: #{_lambda_.2} parent=67 // pred_region
          %s2126 = sand.u32 %s143, 1
          %s2127 = scalar_lea.sflag [#allocation5], %s2126
          %s2128 = sand.u32 %s143, 1
          %s2129 = smul.addr %s2128, 16
          %s2130 = scalar_lea.vmem [#allocation12], %s2129
          %2131 = dma.done %s2127, 256
        $region72: #{_lambda_.2} parent=67 // pred_fallthru
          _
      $region68: #{_lambda_.2} parent=5 // pred_fallthru
        _
    $region6: #{_lambda_.2} parent=1 // loop_footer
      %s23 = sadd.s32 1, %s19
    $region7: #{_lambda_.2} parent=1 // loop_footer_branch
      %18 = sbr.rel target = $region3
    $region8: #{_lambda_.2} parent=1 // loop_exit
      _
    %2132 = vsyncpa [#allocation4], 1
    %s2133 = scalar_lea.sflag [#allocation4], 1
    %2134 = vsyncpa %s2133, 1
    %2135 = vsyncpa [#allocation7], 1
    %2136 = vsyncpa [#allocation10], 1
    %2137 = vsyncpa [#allocation5], 1
    %s2138 = scalar_lea.sflag [#allocation5], 1
    %2139 = vsyncpa %s2138, 1

// kernel: _lambda_.3
$region0: #{_lambda_.3}
  #allocation0 [shape = 'u32[]', space=smem, size = 0x4, offset = 0x4, fixed_abs, tag = 'smem constant byte address 0x4 - core index']
  #allocation1 [shape = 'u32[144,128]{1,0:T(1,128)}', space=vmem, size = 0x12000, scoped, tag = 'internal scratch']
  #allocation2 [shape = 'f32[1,1]{1,0:T(1,128)S(6)}', space=smem, size = 0x200, scoped, tag = 'scoped memory for _lambda_.3']
  %s0 = inlined_call_operand.hbm [shape: bf16[48,16,128], index: 0, kind: input, shape index: {}]
  %s1 = inlined_call_operand.hbm [shape: bf16[48,128], index: 1, kind: input, shape index: {}]
  %s2 = inlined_call_operand.hbm [shape: bf16[128,128], index: 2, kind: input, shape index: {}]
  %s3 = inlined_call_operand.hbm [shape: f32[1,128], index: 3, kind: input, shape index: {}]
  %s4 = inlined_call_operand.hbm [shape: bf16[128,128], index: 4, kind: input, shape index: {}]
  %s5 = inlined_call_operand.hbm [shape: f32[1,128], index: 5, kind: input, shape index: {}]
  %s6 = inlined_call_operand.hbm [shape: f32[1,128], index: 6, kind: input, shape index: {}]
  %s7 = inlined_call_operand.<no memory space> [shape: f32[1,1], index: 7, kind: input, shape index: {}]
  %s8 = inlined_call_operand.hbm [shape: bf16[128,128], index: 8, kind: input, shape index: {}]
  %s9 = inlined_call_operand.hbm [shape: f32[1,128], index: 9, kind: input, shape index: {}]
  %s10 = inlined_call_operand.hbm [shape: bf16[128,128], index: 10, kind: input, shape index: {}]
  %s11 = inlined_call_operand.hbm [shape: f32[1,128], index: 11, kind: input, shape index: {}]
  %s12 = inlined_call_operand.hbm [shape: bf16[128,256], index: 12, kind: input, shape index: {}]
  %s13 = inlined_call_operand.hbm [shape: f32[1,256], index: 13, kind: input, shape index: {}]
  %s14 = inlined_call_operand.hbm [shape: bf16[256,128], index: 14, kind: input, shape index: {}]
  %s15 = inlined_call_operand.hbm [shape: f32[1,128], index: 15, kind: input, shape index: {}]
  %s16 = inlined_call_operand.hbm [shape: f32[48,128], index: 16, kind: output, shape index: {}]
  %s17 = sld [smem:[#allocation0]]
  $region157: #{_lambda_.3} parent=0
    _
  %s19 = ssub.s32 1, %s17
  %s20 = scalar_select 0, %s19, %s17
  %21 = sst [smem:[#allocation2]] %s7
  $region1: #{_lambda_.3} parent=0
    #allocation3 [shape = 'u8[131072]{0}', space=vmem, size = 0x20000, scoped, tag = 'input window, operand 0']
    #allocation4 [shape = 's32[2]{0}', space=sflag, size = 0x8, scoped, tag = 'scoped memory for _lambda_.3']
    #allocation5 [shape = 's32[2]{0}', space=sflag, size = 0x8, scoped, tag = 'scoped memory for _lambda_.3']
    #allocation6 [shape = 'u8[8192]{0}', space=vmem, size = 0x2000, scoped, tag = 'input window, operand 1']
    #allocation7 [shape = 's32[2]{0}', space=sflag, size = 0x8, scoped, tag = 'scoped memory for _lambda_.3']
    #allocation8 [shape = 'u8[32768]{0}', space=vmem, size = 0x8000, scoped, tag = 'input window, operand 2, single buffered']
    #allocation9 [shape = 'u8[512]{0}', space=vmem, size = 0x400, scoped, tag = 'input window, operand 3, single buffered']
    #allocation10 [shape = 's32[1]{0}', space=sflag, size = 0x4, scoped, tag = 'scoped memory for _lambda_.3']
    #allocation11 [shape = 'u8[32768]{0}', space=vmem, size = 0x8000, scoped, tag = 'input window, operand 4, single buffered']
    #allocation12 [shape = 'u8[512]{0}', space=vmem, size = 0x400, scoped, tag = 'input window, operand 5, single buffered']
    #allocation13 [shape = 's32[1]{0}', space=sflag, size = 0x4, scoped, tag = 'scoped memory for _lambda_.3']
    #allocation14 [shape = 'u8[512]{0}', space=vmem, size = 0x400, scoped, tag = 'input window, operand 6, single buffered']
    #allocation15 [shape = 'u8[32768]{0}', space=vmem, size = 0x8000, scoped, tag = 'input window, operand 8, single buffered']
    #allocation16 [shape = 's32[1]{0}', space=sflag, size = 0x4, scoped, tag = 'scoped memory for _lambda_.3']
    #allocation17 [shape = 'u8[512]{0}', space=vmem, size = 0x400, scoped, tag = 'input window, operand 9, single buffered']
    #allocation18 [shape = 'u8[32768]{0}', space=vmem, size = 0x8000, scoped, tag = 'input window, operand 10, single buffered']
    #allocation19 [shape = 's32[1]{0}', space=sflag, size = 0x4, scoped, tag = 'scoped memory for _lambda_.3']
    #allocation20 [shape = 'u8[512]{0}', space=vmem, size = 0x400, scoped, tag = 'input window, operand 11, single buffered']
    #allocation21 [shape = 'u8[65536]{0}', space=vmem, size = 0x10000, scoped, tag = 'input window, operand 12, single buffered']
    #allocation22 [shape = 's32[1]{0}', space=sflag, size = 0x4, scoped, tag = 'scoped memory for _lambda_.3']
    #allocation23 [shape = 'u8[1024]{0}', space=vmem, size = 0x400, scoped, tag = 'input window, operand 13, single buffered']
    #allocation24 [shape = 'u8[65536]{0}', space=vmem, size = 0x10000, scoped, tag = 'input window, operand 14, single buffered']
    #allocation25 [shape = 's32[1]{0}', space=sflag, size = 0x4, scoped, tag = 'scoped memory for _lambda_.3']
    #allocation26 [shape = 'u8[512]{0}', space=vmem, size = 0x400, scoped, tag = 'input window, operand 15, single buffered']
    #allocation27 [shape = 'u8[16384]{0}', space=vmem, size = 0x4000, scoped, tag = 'output window, operand 0']
    %22 = vsyncpa [#allocation4], 0
    %s23 = scalar_lea.sflag [#allocation4], 1
    %24 = vsyncpa %s23, 0
    %25 = vsyncpa [#allocation7], 0
    %s26 = scalar_lea.sflag [#allocation7], 1
    %27 = vsyncpa %s26, 0
    %28 = vsyncpa [#allocation10], 0
    %29 = vsyncpa [#allocation13], 0
    %30 = vsyncpa [#allocation16], 0
    %31 = vsyncpa [#allocation19], 0
    %32 = vsyncpa [#allocation22], 0
    %33 = vsyncpa [#allocation25], 0
    %34 = vsyncpa [#allocation5], 0
    %s35 = scalar_lea.sflag [#allocation5], 1
    %36 = vsyncpa %s35, 0
    loop: start=0, step=1, limit=5
    $region2: #{_lambda_.3} parent=1 // loop_pre_header
      _
    $region3: #{_lambda_.3} parent=1 // loop_header
      %s38 = sphi 0, %s42
      %p39 = scmp.ge.s32.totalorder %s38, 5
      %s48 = sphi 0, %s50
      %s51 = sphi 0, %s48
      %s52 = sphi 0, %s51
      %s68 = sphi 0, %s52
      %s74 = sphi 0, %s76
      %s77 = sphi 0, %s74
      %s78 = sphi 0, %s77
      %s94 = sphi 0, %s78
      %s98 = sphi 0, %s98
      %s100 = sphi 0, %s98
      %s101 = sphi 0, %s100
      %s115 = sphi 0, %s101
      %s119 = sphi 0, %s119
      %s121 = sphi 0, %s119
      %s122 = sphi 0, %s121
      %s136 = sphi 0, %s122
      %s140 = sphi 0, %s140
      %s142 = sphi 0, %s140
      %s143 = sphi 0, %s142
      %s157 = sphi 0, %s143
      %s161 = sphi 0, %s161
      %s163 = sphi 0, %s161
      %s164 = sphi 0, %s163
      %s178 = sphi 0, %s164
      %s182 = sphi 0, %s182
      %s184 = sphi 0, %s182
      %s185 = sphi 0, %s184
      %s199 = sphi 0, %s185
      %s203 = sphi 0, %s203
      %s205 = sphi 0, %s203
      %s206 = sphi 0, %s205
      %s220 = sphi 0, %s206
      %s224 = sphi 0, %s224
      %s226 = sphi 0, %s224
      %s227 = sphi 0, %s226
      %s241 = sphi 0, %s227
      %s245 = sphi 0, %s245
      %s247 = sphi 0, %s245
      %s248 = sphi 0, %s247
      %s262 = sphi 0, %s248
      %s266 = sphi 0, %s266
      %s268 = sphi 0, %s266
      %s269 = sphi 0, %s268
      %s283 = sphi 0, %s269
      %s287 = sphi 0, %s287
      %s289 = sphi 0, %s287
      %s290 = sphi 0, %s289
      %s304 = sphi 0, %s290
      %s308 = sphi 0, %s308
      %s310 = sphi 0, %s308
      %s311 = sphi 0, %s310
      %s325 = sphi 0, %s311
      %s329 = sphi 0, %s329
      %s331 = sphi 0, %s329
      %s332 = sphi 0, %s331
      %s346 = sphi 0, %s332
      %s350 = sphi 0, %s350
      %s352 = sphi 0, %s350
      %s353 = sphi 0, %s352
      %s367 = sphi 0, %s353
      %s371 = sphi 0, %s371
      %s373 = sphi 0, %s371
      %s374 = sphi 0, %s373
      %s388 = sphi 0, %s374
      %s394 = sphi 0, %s396
      %s397 = sphi 0, %s394
      %s398 = sphi 0, %s397
      %s414 = sphi 0, %s398
    $region4: #{_lambda_.3} parent=1 // loop_header_branch
      %41 = sbr.rel (%p39) target = $region8
    $region5: #{_lambda_.3} parent=1 // loop_body
      %s43 = ssub.s32 %s38, 1
      %s44 = ssub.s32 %s38, 2
      %s45 = sadd.s32 %s38, 1
      %s46 = ssub.s32 %s38, %s45
      %p47 = scmp.eq.s32.totalorder %s46, 0
      %s49 = sadd.s32 %s48, 1
      %s50 = scalar_select %p47, %s48, %s49
      %p53 = pneg %p47
      %p54 = scmp.eq.s32.totalorder %s38, 2
      %p55 = por %p53, %p54
      %p56 = scmp.ne.s32.totalorder %s48, %s51
      %p57 = scmp.eq.s32.totalorder %s38, 0
      %p58 = por %p56, %p57
      %p59 = scmp.ne.s32.totalorder %s48, %s51
      %p60 = scmp.eq.s32.totalorder %s43, 2
      %p61 = por %p59, %p60
      %p62 = scmp.ne.s32.totalorder %s51, %s52
      %p63 = scmp.eq.s32.totalorder %s43, 0
      %p64 = por %p62, %p63
      %p65 = scmp.ne.s32.totalorder %s51, %s52
      %p66 = scmp.eq.s32.totalorder %s44, 2
      %p67 = por %p65, %p66
      %p69 = scmp.ne.s32.totalorder %s52, %s68
      %p70 = scmp.eq.s32.totalorder %s44, 0
      %p71 = por %p69, %p70
      %s72 = ssub.s32 %s38, %s45
      %p73 = scmp.eq.s32.totalorder %s72, 0
      %s75 = sadd.s32 %s74, 1
      %s76 = scalar_select %p73, %s74, %s75
      %p79 = pneg %p73
      %p80 = scmp.eq.s32.totalorder %s38, 2
      %p81 = por %p79, %p80
      %p82 = scmp.ne.s32.totalorder %s74, %s77
      %p83 = scmp.eq.s32.totalorder %s38, 0
      %p84 = por %p82, %p83
      %p85 = scmp.ne.s32.totalorder %s74, %s77
      %p86 = scmp.eq.s32.totalorder %s43, 2
      %p87 = por %p85, %p86
      %p88 = scmp.ne.s32.totalorder %s77, %s78
      %p89 = scmp.eq.s32.totalorder %s43, 0
      %p90 = por %p88, %p89
      %p91 = scmp.ne.s32.totalorder %s77, %s78
      %p92 = scmp.eq.s32.totalorder %s44, 2
      %p93 = por %p91, %p92
      %p95 = scmp.ne.s32.totalorder %s78, %s94
      %p96 = scmp.eq.s32.totalorder %s44, 0
      %p97 = por %p95, %p96
      %s99 = sadd.s32 %s98, 1
      %p102 = scmp.eq.s32.totalorder %s38, 2
      %p103 = scmp.ne.s32.totalorder %s98, %s100
      %p104 = scmp.eq.s32.totalorder %s38, 0
      %p105 = por %p103, %p104
      %p106 = scmp.ne.s32.totalorder %s98, %s100
      %p107 = scmp.eq.s32.totalorder %s43, 2
      %p108 = por %p106, %p107
      %p109 = scmp.ne.s32.totalorder %s100, %s101
      %p110 = scmp.eq.s32.totalorder %s43, 0
      %p111 = por %p109, %p110
      %p112 = scmp.ne.s32.totalorder %s100, %s101
      %p113 = scmp.eq.s32.totalorder %s44, 2
      %p114 = por %p112, %p113
      %p116 = scmp.ne.s32.totalorder %s101, %s115
      %p117 = scmp.eq.s32.totalorder %s44, 0
      %p118 = por %p116, %p117
      %s120 = sadd.s32 %s119, 1
      %p123 = scmp.eq.s32.totalorder %s38, 2
      %p124 = scmp.ne.s32.totalorder %s119, %s121
      %p125 = scmp.eq.s32.totalorder %s38, 0
      %p126 = por %p124, %p125
      %p127 = scmp.ne.s32.totalorder %s119, %s121
      %p128 = scmp.eq.s32.totalorder %s43, 2
      %p129 = por %p127, %p128
      %p130 = scmp.ne.s32.totalorder %s121, %s122
      %p131 = scmp.eq.s32.totalorder %s43, 0
      %p132 = por %p130, %p131
      %p133 = scmp.ne.s32.totalorder %s121, %s122
      %p134 = scmp.eq.s32.totalorder %s44, 2
      %p135 = por %p133, %p134
      %p137 = scmp.ne.s32.totalorder %s122, %s136
      %p138 = scmp.eq.s32.totalorder %s44, 0
      %p139 = por %p137, %p138
      %s141 = sadd.s32 %s140, 1
      %p144 = scmp.eq.s32.totalorder %s38, 2
      %p145 = scmp.ne.s32.totalorder %s140, %s142
      %p146 = scmp.eq.s32.totalorder %s38, 0
      %p147 = por %p145, %p146
      %p148 = scmp.ne.s32.totalorder %s140, %s142
      %p149 = scmp.eq.s32.totalorder %s43, 2
      %p150 = por %p148, %p149
      %p151 = scmp.ne.s32.totalorder %s142, %s143
      %p152 = scmp.eq.s32.totalorder %s43, 0
      %p153 = por %p151, %p152
      %p154 = scmp.ne.s32.totalorder %s142, %s143
      %p155 = scmp.eq.s32.totalorder %s44, 2
      %p156 = por %p154, %p155
      %p158 = scmp.ne.s32.totalorder %s143, %s157
      %p159 = scmp.eq.s32.totalorder %s44, 0
      %p160 = por %p158, %p159
      %s162 = sadd.s32 %s161, 1
      %p165 = scmp.eq.s32.totalorder %s38, 2
      %p166 = scmp.ne.s32.totalorder %s161, %s163
      %p167 = scmp.eq.s32.totalorder %s38, 0
      %p168 = por %p166, %p167
      %p169 = scmp.ne.s32.totalorder %s161, %s163
      %p170 = scmp.eq.s32.totalorder %s43, 2
      %p171 = por %p169, %p170
      %p172 = scmp.ne.s32.totalorder %s163, %s164
      %p173 = scmp.eq.s32.totalorder %s43, 0
      %p174 = por %p172, %p173
      %p175 = scmp.ne.s32.totalorder %s163, %s164
      %p176 = scmp.eq.s32.totalorder %s44, 2
      %p177 = por %p175, %p176
      %p179 = scmp.ne.s32.totalorder %s164, %s178
      %p180 = scmp.eq.s32.totalorder %s44, 0
      %p181 = por %p179, %p180
      %s183 = sadd.s32 %s182, 1
      %p186 = scmp.eq.s32.totalorder %s38, 2
      %p187 = scmp.ne.s32.totalorder %s182, %s184
      %p188 = scmp.eq.s32.totalorder %s38, 0
      %p189 = por %p187, %p188
      %p190 = scmp.ne.s32.totalorder %s182, %s184
      %p191 = scmp.eq.s32.totalorder %s43, 2
      %p192 = por %p190, %p191
      %p193 = scmp.ne.s32.totalorder %s184, %s185
      %p194 = scmp.eq.s32.totalorder %s43, 0
      %p195 = por %p193, %p194
      %p196 = scmp.ne.s32.totalorder %s184, %s185
      %p197 = scmp.eq.s32.totalorder %s44, 2
      %p198 = por %p196, %p197
      %p200 = scmp.ne.s32.totalorder %s185, %s199
      %p201 = scmp.eq.s32.totalorder %s44, 0
      %p202 = por %p200, %p201
      %s204 = sadd.s32 %s203, 1
      %p207 = scmp.eq.s32.totalorder %s38, 2
      %p208 = scmp.ne.s32.totalorder %s203, %s205
      %p209 = scmp.eq.s32.totalorder %s38, 0
      %p210 = por %p208, %p209
      %p211 = scmp.ne.s32.totalorder %s203, %s205
      %p212 = scmp.eq.s32.totalorder %s43, 2
      %p213 = por %p211, %p212
      %p214 = scmp.ne.s32.totalorder %s205, %s206
      %p215 = scmp.eq.s32.totalorder %s43, 0
      %p216 = por %p214, %p215
      %p217 = scmp.ne.s32.totalorder %s205, %s206
      %p218 = scmp.eq.s32.totalorder %s44, 2
      %p219 = por %p217, %p218
      %p221 = scmp.ne.s32.totalorder %s206, %s220
      %p222 = scmp.eq.s32.totalorder %s44, 0
      %p223 = por %p221, %p222
      %s225 = sadd.s32 %s224, 1
      %p228 = scmp.eq.s32.totalorder %s38, 2
      %p229 = scmp.ne.s32.totalorder %s224, %s226
      %p230 = scmp.eq.s32.totalorder %s38, 0
      %p231 = por %p229, %p230
      %p232 = scmp.ne.s32.totalorder %s224, %s226
      %p233 = scmp.eq.s32.totalorder %s43, 2
      %p234 = por %p232, %p233
      %p235 = scmp.ne.s32.totalorder %s226, %s227
      %p236 = scmp.eq.s32.totalorder %s43, 0
      %p237 = por %p235, %p236
      %p238 = scmp.ne.s32.totalorder %s226, %s227
      %p239 = scmp.eq.s32.totalorder %s44, 2
      %p240 = por %p238, %p239
      %p242 = scmp.ne.s32.totalorder %s227, %s241
      %p243 = scmp.eq.s32.totalorder %s44, 0
      %p244 = por %p242, %p243
      %s246 = sadd.s32 %s245, 1
      %p249 = scmp.eq.s32.totalorder %s38, 2
      %p250 = scmp.ne.s32.totalorder %s245, %s247
      %p251 = scmp.eq.s32.totalorder %s38, 0
      %p252 = por %p250, %p251
      %p253 = scmp.ne.s32.totalorder %s245, %s247
      %p254 = scmp.eq.s32.totalorder %s43, 2
      %p255 = por %p253, %p254
      %p256 = scmp.ne.s32.totalorder %s247, %s248
      %p257 = scmp.eq.s32.totalorder %s43, 0
      %p258 = por %p256, %p257
      %p259 = scmp.ne.s32.totalorder %s247, %s248
      %p260 = scmp.eq.s32.totalorder %s44, 2
      %p261 = por %p259, %p260
      %p263 = scmp.ne.s32.totalorder %s248, %s262
      %p264 = scmp.eq.s32.totalorder %s44, 0
      %p265 = por %p263, %p264
      %s267 = sadd.s32 %s266, 1
      %p270 = scmp.eq.s32.totalorder %s38, 2
      %p271 = scmp.ne.s32.totalorder %s266, %s268
      %p272 = scmp.eq.s32.totalorder %s38, 0
      %p273 = por %p271, %p272
      %p274 = scmp.ne.s32.totalorder %s266, %s268
      %p275 = scmp.eq.s32.totalorder %s43, 2
      %p276 = por %p274, %p275
      %p277 = scmp.ne.s32.totalorder %s268, %s269
      %p278 = scmp.eq.s32.totalorder %s43, 0
      %p279 = por %p277, %p278
      %p280 = scmp.ne.s32.totalorder %s268, %s269
      %p281 = scmp.eq.s32.totalorder %s44, 2
      %p282 = por %p280, %p281
      %p284 = scmp.ne.s32.totalorder %s269, %s283
      %p285 = scmp.eq.s32.totalorder %s44, 0
      %p286 = por %p284, %p285
      %s288 = sadd.s32 %s287, 1
      %p291 = scmp.eq.s32.totalorder %s38, 2
      %p292 = scmp.ne.s32.totalorder %s287, %s289
      %p293 = scmp.eq.s32.totalorder %s38, 0
      %p294 = por %p292, %p293
      %p295 = scmp.ne.s32.totalorder %s287, %s289
      %p296 = scmp.eq.s32.totalorder %s43, 2
      %p297 = por %p295, %p296
      %p298 = scmp.ne.s32.totalorder %s289, %s290
      %p299 = scmp.eq.s32.totalorder %s43, 0
      %p300 = por %p298, %p299
      %p301 = scmp.ne.s32.totalorder %s289, %s290
      %p302 = scmp.eq.s32.totalorder %s44, 2
      %p303 = por %p301, %p302
      %p305 = scmp.ne.s32.totalorder %s290, %s304
      %p306 = scmp.eq.s32.totalorder %s44, 0
      %p307 = por %p305, %p306
      %s309 = sadd.s32 %s308, 1
      %p312 = scmp.eq.s32.totalorder %s38, 2
      %p313 = scmp.ne.s32.totalorder %s308, %s310
      %p314 = scmp.eq.s32.totalorder %s38, 0
      %p315 = por %p313, %p314
      %p316 = scmp.ne.s32.totalorder %s308, %s310
      %p317 = scmp.eq.s32.totalorder %s43, 2
      %p318 = por %p316, %p317
      %p319 = scmp.ne.s32.totalorder %s310, %s311
      %p320 = scmp.eq.s32.totalorder %s43, 0
      %p321 = por %p319, %p320
      %p322 = scmp.ne.s32.totalorder %s310, %s311
      %p323 = scmp.eq.s32.totalorder %s44, 2
      %p324 = por %p322, %p323
      %p326 = scmp.ne.s32.totalorder %s311, %s325
      %p327 = scmp.eq.s32.totalorder %s44, 0
      %p328 = por %p326, %p327
      %s330 = sadd.s32 %s329, 1
      %p333 = scmp.eq.s32.totalorder %s38, 2
      %p334 = scmp.ne.s32.totalorder %s329, %s331
      %p335 = scmp.eq.s32.totalorder %s38, 0
      %p336 = por %p334, %p335
      %p337 = scmp.ne.s32.totalorder %s329, %s331
      %p338 = scmp.eq.s32.totalorder %s43, 2
      %p339 = por %p337, %p338
      %p340 = scmp.ne.s32.totalorder %s331, %s332
      %p341 = scmp.eq.s32.totalorder %s43, 0
      %p342 = por %p340, %p341
      %p343 = scmp.ne.s32.totalorder %s331, %s332
      %p344 = scmp.eq.s32.totalorder %s44, 2
      %p345 = por %p343, %p344
      %p347 = scmp.ne.s32.totalorder %s332, %s346
      %p348 = scmp.eq.s32.totalorder %s44, 0
      %p349 = por %p347, %p348
      %s351 = sadd.s32 %s350, 1
      %p354 = scmp.eq.s32.totalorder %s38, 2
      %p355 = scmp.ne.s32.totalorder %s350, %s352
      %p356 = scmp.eq.s32.totalorder %s38, 0
      %p357 = por %p355, %p356
      %p358 = scmp.ne.s32.totalorder %s350, %s352
      %p359 = scmp.eq.s32.totalorder %s43, 2
      %p360 = por %p358, %p359
      %p361 = scmp.ne.s32.totalorder %s352, %s353
      %p362 = scmp.eq.s32.totalorder %s43, 0
      %p363 = por %p361, %p362
      %p364 = scmp.ne.s32.totalorder %s352, %s353
      %p365 = scmp.eq.s32.totalorder %s44, 2
      %p366 = por %p364, %p365
      %p368 = scmp.ne.s32.totalorder %s353, %s367
      %p369 = scmp.eq.s32.totalorder %s44, 0
      %p370 = por %p368, %p369
      %s372 = sadd.s32 %s371, 1
      %p375 = scmp.eq.s32.totalorder %s38, 2
      %p376 = scmp.ne.s32.totalorder %s371, %s373
      %p377 = scmp.eq.s32.totalorder %s38, 0
      %p378 = por %p376, %p377
      %p379 = scmp.ne.s32.totalorder %s371, %s373
      %p380 = scmp.eq.s32.totalorder %s43, 2
      %p381 = por %p379, %p380
      %p382 = scmp.ne.s32.totalorder %s373, %s374
      %p383 = scmp.eq.s32.totalorder %s43, 0
      %p384 = por %p382, %p383
      %p385 = scmp.ne.s32.totalorder %s373, %s374
      %p386 = scmp.eq.s32.totalorder %s44, 2
      %p387 = por %p385, %p386
      %p389 = scmp.ne.s32.totalorder %s374, %s388
      %p390 = scmp.eq.s32.totalorder %s44, 0
      %p391 = por %p389, %p390
      %s392 = ssub.s32 %s38, %s45
      %p393 = scmp.eq.s32.totalorder %s392, 0
      %s395 = sadd.s32 %s394, 1
      %s396 = scalar_select %p393, %s394, %s395
      %p399 = pneg %p393
      %p400 = scmp.eq.s32.totalorder %s38, 2
      %p401 = por %p399, %p400
      %p402 = scmp.ne.s32.totalorder %s394, %s397
      %p403 = scmp.eq.s32.totalorder %s38, 0
      %p404 = por %p402, %p403
      %p405 = scmp.ne.s32.totalorder %s394, %s397
      %p406 = scmp.eq.s32.totalorder %s43, 2
      %p407 = por %p405, %p406
      %p408 = scmp.ne.s32.totalorder %s397, %s398
      %p409 = scmp.eq.s32.totalorder %s43, 0
      %p410 = por %p408, %p409
      %p411 = scmp.ne.s32.totalorder %s397, %s398
      %p412 = scmp.eq.s32.totalorder %s44, 2
      %p413 = por %p411, %p412
      %p415 = scmp.ne.s32.totalorder %s398, %s414
      %p416 = scmp.eq.s32.totalorder %s44, 0
      %p417 = por %p415, %p416
      %p418 = scmp.le.s32.totalorder 1, %s38
      %p419 = scmp.lt.s32.totalorder %s38, 4
      %p420 = pnand %p418, %p419
      %p421 = pneg %p420
      // Predicated region
      $region9: #{_lambda_.3} parent=5 // pred_check
        _
      $region10: #{_lambda_.3} parent=5 // pred_check_branch
        %423 = sbr.rel (%p420) target = $region12
      $region11: #{_lambda_.3} parent=5 // pred_region
        %s424 = ssub.s32 %s38, 1
        // Predicated region
        $region13: #{_lambda_.3} parent=11 // pred_check
          %p425 = pneg %p111
        $region14: #{_lambda_.3} parent=11 // pred_check_branch
          %427 = sbr.rel (%p425) target = $region16
        $region15: #{_lambda_.3} parent=11 // pred_region
          %s429 = ssub.s32 1024, 1024
          %430 = vsyncadd [#allocation7], %s429
          %s431 = sshll.u32 [#allocation8], 4
          %s432 = int_to_ptr.vmem [resolvable:$true] %s431
          %437 = dma.hbm_to_vmem [thread:$0]  %s2, 1024, %s432, [#allocation7], 64, 64, 4
        $region16: #{_lambda_.3} parent=11 // pred_fallthru
          _
        // Predicated region
        $region17: #{_lambda_.3} parent=11 // pred_check
          %p438 = pneg %p132
        $region18: #{_lambda_.3} parent=11 // pred_check_branch
          %440 = sbr.rel (%p438) target = $region20
        $region19: #{_lambda_.3} parent=11 // pred_region
          %s442 = ssub.s32 16, 16
          %443 = vsyncadd [#allocation10], %s442
          %s445 = sshll.u32 [#allocation9], 4
          %s446 = int_to_ptr.vmem [resolvable:$true] %s445
          %448 = dma.hbm_to_vmem [thread:$0]  %s3, 16, %s446, [#allocation10]
        $region20: #{_lambda_.3} parent=11 // pred_fallthru
          _
        // Predicated region
        $region21: #{_lambda_.3} parent=11 // pred_check
          %p449 = pneg %p153
        $region22: #{_lambda_.3} parent=11 // pred_check_branch
          %451 = sbr.rel (%p449) target = $region24
        $region23: #{_lambda_.3} parent=11 // pred_region
          %s453 = ssub.s32 1024, 1024
          %454 = vsyncadd [#allocation10], %s453
          %s455 = sshll.u32 [#allocation11], 4
          %s456 = int_to_ptr.vmem [resolvable:$true] %s455
          %461 = dma.hbm_to_vmem [thread:$0]  %s4, 1024, %s456, [#allocation10], 64, 64, 4
        $region24: #{_lambda_.3} parent=11 // pred_fallthru
          _
        // Predicated region
        $region25: #{_lambda_.3} parent=11 // pred_check
          %p462 = pneg %p174
        $region26: #{_lambda_.3} parent=11 // pred_check_branch
          %464 = sbr.rel (%p462) target = $region28
        $region27: #{_lambda_.3} parent=11 // pred_region
          %s466 = ssub.s32 16, 16
          %467 = vsyncadd [#allocation13], %s466
          %s469 = sshll.u32 [#allocation12], 4
          %s470 = int_to_ptr.vmem [resolvable:$true] %s469
          %472 = dma.hbm_to_vmem [thread:$0]  %s5, 16, %s470, [#allocation13]
        $region28: #{_lambda_.3} parent=11 // pred_fallthru
          _
        // Predicated region
        $region29: #{_lambda_.3} parent=11 // pred_check
          %p473 = pneg %p195
        $region30: #{_lambda_.3} parent=11 // pred_check_branch
          %475 = sbr.rel (%p473) target = $region32
        $region31: #{_lambda_.3} parent=11 // pred_region
          %s477 = ssub.s32 16, 16
          %478 = vsyncadd [#allocation13], %s477
          %s480 = sshll.u32 [#allocation14], 4
          %s481 = int_to_ptr.vmem [resolvable:$true] %s480
          %483 = dma.hbm_to_vmem [thread:$0]  %s6, 16, %s481, [#allocation13]
        $region32: #{_lambda_.3} parent=11 // pred_fallthru
          _
        // Predicated region
        $region33: #{_lambda_.3} parent=11 // pred_check
          %p484 = pneg %p216
        $region34: #{_lambda_.3} parent=11 // pred_check_branch
          %486 = sbr.rel (%p484) target = $region36
        $region35: #{_lambda_.3} parent=11 // pred_region
          _
        $region36: #{_lambda_.3} parent=11 // pred_fallthru
          _
        // Predicated region
        $region37: #{_lambda_.3} parent=11 // pred_check
          %p487 = pneg %p237
        $region38: #{_lambda_.3} parent=11 // pred_check_branch
          %489 = sbr.rel (%p487) target = $region40
        $region39: #{_lambda_.3} parent=11 // pred_region
          %s491 = ssub.s32 1024, 1024
          %492 = vsyncadd [#allocation16], %s491
          %s493 = sshll.u32 [#allocation15], 4
          %s494 = int_to_ptr.vmem [resolvable:$true] %s493
          %499 = dma.hbm_to_vmem [thread:$0]  %s8, 1024, %s494, [#allocation16], 64, 64, 4
        $region40: #{_lambda_.3} parent=11 // pred_fallthru
          _
        // Predicated region
        $region41: #{_lambda_.3} parent=11 // pred_check
          %p500 = pneg %p258
        $region42: #{_lambda_.3} parent=11 // pred_check_branch
          %502 = sbr.rel (%p500) target = $region44
        $region43: #{_lambda_.3} parent=11 // pred_region
          %s504 = ssub.s32 16, 16
          %505 = vsyncadd [#allocation16], %s504
          %s507 = sshll.u32 [#allocation17], 4
          %s508 = int_to_ptr.vmem [resolvable:$true] %s507
          %510 = dma.hbm_to_vmem [thread:$0]  %s9, 16, %s508, [#allocation16]
        $region44: #{_lambda_.3} parent=11 // pred_fallthru
          _
        // Predicated region
        $region45: #{_lambda_.3} parent=11 // pred_check
          %p511 = pneg %p279
        $region46: #{_lambda_.3} parent=11 // pred_check_branch
          %513 = sbr.rel (%p511) target = $region48
        $region47: #{_lambda_.3} parent=11 // pred_region
          %s515 = ssub.s32 1024, 1024
          %516 = vsyncadd [#allocation19], %s515
          %s517 = sshll.u32 [#allocation18], 4
          %s518 = int_to_ptr.vmem [resolvable:$true] %s517
          %523 = dma.hbm_to_vmem [thread:$0]  %s10, 1024, %s518, [#allocation19], 64, 64, 4
        $region48: #{_lambda_.3} parent=11 // pred_fallthru
          _
        // Predicated region
        $region49: #{_lambda_.3} parent=11 // pred_check
          %p524 = pneg %p300
        $region50: #{_lambda_.3} parent=11 // pred_check_branch
          %526 = sbr.rel (%p524) target = $region52
        $region51: #{_lambda_.3} parent=11 // pred_region
          %s528 = ssub.s32 16, 16
          %529 = vsyncadd [#allocation19], %s528
          %s531 = sshll.u32 [#allocation20], 4
          %s532 = int_to_ptr.vmem [resolvable:$true] %s531
          %534 = dma.hbm_to_vmem [thread:$0]  %s11, 16, %s532, [#allocation19]
        $region52: #{_lambda_.3} parent=11 // pred_fallthru
          _
        // Predicated region
        $region53: #{_lambda_.3} parent=11 // pred_check
          %p535 = pneg %p321
        $region54: #{_lambda_.3} parent=11 // pred_check_branch
          %537 = sbr.rel (%p535) target = $region56
        $region55: #{_lambda_.3} parent=11 // pred_region
          %s539 = ssub.s32 2048, 2048
          %540 = vsyncadd [#allocation22], %s539
          %s541 = sshll.u32 [#allocation21], 4
          %s542 = int_to_ptr.vmem [resolvable:$true] %s541
          %547 = dma.hbm_to_vmem [thread:$0]  %s12, 2048, %s542, [#allocation22], 128, 128, 8
        $region56: #{_lambda_.3} parent=11 // pred_fallthru
          _
        // Predicated region
        $region57: #{_lambda_.3} parent=11 // pred_check
          %p548 = pneg %p342
        $region58: #{_lambda_.3} parent=11 // pred_check_branch
          %550 = sbr.rel (%p548) target = $region60
        $region59: #{_lambda_.3} parent=11 // pred_region
          %s552 = ssub.s32 32, 32
          %553 = vsyncadd [#allocation22], %s552
          %s555 = sshll.u32 [#allocation23], 4
          %s556 = int_to_ptr.vmem [resolvable:$true] %s555
          %558 = dma.hbm_to_vmem [thread:$0]  %s13, 32, %s556, [#allocation22]
        $region60: #{_lambda_.3} parent=11 // pred_fallthru
          _
        // Predicated region
        $region61: #{_lambda_.3} parent=11 // pred_check
          %p559 = pneg %p363
        $region62: #{_lambda_.3} parent=11 // pred_check_branch
          %561 = sbr.rel (%p559) target = $region64
        $region63: #{_lambda_.3} parent=11 // pred_region
          %s563 = ssub.s32 2048, 2048
          %564 = vsyncadd [#allocation25], %s563
          %s565 = sshll.u32 [#allocation24], 4
          %s566 = int_to_ptr.vmem [resolvable:$true] %s565
          %571 = dma.hbm_to_vmem [thread:$0]  %s14, 2048, %s566, [#allocation25], 64, 64, 4
        $region64: #{_lambda_.3} parent=11 // pred_fallthru
          _
        // Predicated region
        $region65: #{_lambda_.3} parent=11 // pred_check
          %p572 = pneg %p384
        $region66: #{_lambda_.3} parent=11 // pred_check_branch
          %574 = sbr.rel (%p572) target = $region68
        $region67: #{_lambda_.3} parent=11 // pred_region
          %s576 = ssub.s32 16, 16
          %577 = vsyncadd [#allocation25], %s576
          %s579 = sshll.u32 [#allocation26], 4
          %s580 = int_to_ptr.vmem [resolvable:$true] %s579
          %582 = dma.hbm_to_vmem [thread:$0]  %s15, 16, %s580, [#allocation25]
        $region68: #{_lambda_.3} parent=11 // pred_fallthru
          _
      $region12: #{_lambda_.3} parent=5 // pred_fallthru
        _
      %p583 = scmp.lt.s32.totalorder %s38, 3
      // Predicated region
      $region69: #{_lambda_.3} parent=5 // pred_check
        %p584 = pneg %p583
      $region70: #{_lambda_.3} parent=5 // pred_check_branch
        %586 = sbr.rel (%p584) target = $region72
      $region71: #{_lambda_.3} parent=5 // pred_region
        // Predicated region
        $region73: #{_lambda_.3} parent=71 // pred_check
          %p587 = pneg %p58
        $region74: #{_lambda_.3} parent=71 // pred_check_branch
          %589 = sbr.rel (%p587) target = $region76
        $region75: #{_lambda_.3} parent=71 // pred_region
          %s590 = sand.u32 %s48, 1
          %s591 = scalar_lea.sflag [#allocation4], %s590
          %s592 = sand.u32 %s48, 1
          %s593 = smul.addr %s592, 128
          %s594 = scalar_lea.vmem [#allocation3], %s593
          %s595 = smul.u32 16, %s38
          %s597 = ssub.s32 2048, 2048
          %598 = vsyncadd %s591, %s597
          %s599 = smul.addr %s595, 2
          %s600 = smul.addr %s599, 64
          %s601 = scalar_lea.hbm %s0, %s600
          %s602 = sshll.u32 %s594, 4
          %s603 = int_to_ptr.vmem [resolvable:$true] %s602
          %608 = dma.hbm_to_vmem [thread:$0]  %s601, 2048, %s603, %s591, 64, 64, 4
        $region76: #{_lambda_.3} parent=71 // pred_fallthru
          _
        // Predicated region
        $region77: #{_lambda_.3} parent=71 // pred_check
          %p609 = pneg %p84
        $region78: #{_lambda_.3} parent=71 // pred_check_branch
          %611 = sbr.rel (%p609) target = $region80
        $region79: #{_lambda_.3} parent=71 // pred_region
          %s612 = sand.u32 %s38, 1
          %s613 = scalar_lea.sflag [#allocation7], %s612
          %s614 = sand.u32 %s74, 1
          %s615 = smul.addr %s614, 8
          %s616 = scalar_lea.vmem [#allocation6], %s615
          %s617 = smul.u32 2, %s38
          %s619 = ssub.s32 128, 128
          %620 = vsyncadd %s613, %s619
          %s621 = smul.addr %s617, 64
          %s622 = scalar_lea.hbm %s1, %s621
          %s623 = sshll.u32 %s616, 4
          %s624 = int_to_ptr.vmem [resolvable:$true] %s623
          %629 = dma.hbm_to_vmem [thread:$0]  %s622, 128, %s624, %s613, 64, 64, 4
        $region80: #{_lambda_.3} parent=71 // pred_fallthru
          _
      $region72: #{_lambda_.3} parent=5 // pred_fallthru
        _
      %p630 = scmp.le.s32.totalorder 1, %s38
      %p631 = scmp.lt.s32.totalorder %s38, 4
      %p632 = pnand %p630, %p631
      %p633 = pneg %p632
      // Predicated region
      $region81: #{_lambda_.3} parent=5 // pred_check
        _
      $region82: #{_lambda_.3} parent=5 // pred_check_branch
        %635 = sbr.rel (%p632) target = $region84
      $region83: #{_lambda_.3} parent=5 // pred_region
        %s636 = ssub.s32 %s38, 1
        %s637 = sand.u32 %s51, 1
        %s638 = scalar_lea.sflag [#allocation4], %s637
        %s639 = sand.u32 %s51, 1
        %s640 = smul.addr %s639, 128
        %s641 = scalar_lea.vmem [#allocation3], %s640
        // Predicated region
        $region85: #{_lambda_.3} parent=83 // pred_check
          %p642 = pneg %p64
        $region86: #{_lambda_.3} parent=83 // pred_check_branch
          %644 = sbr.rel (%p642) target = $region88
        $region87: #{_lambda_.3} parent=83 // pred_region
          %645 = dma.done %s638, 2048
        $region88: #{_lambda_.3} parent=83 // pred_fallthru
          _
        %s646 = sand.u32 %s43, 1
        %s647 = scalar_lea.sflag [#allocation7], %s646
        %s648 = sand.u32 %s77, 1
        %s649 = smul.addr %s648, 8
        %s650 = scalar_lea.vmem [#allocation6], %s649
        // Predicated region
        $region89: #{_lambda_.3} parent=83 // pred_check
          %p651 = pneg %p90
        $region90: #{_lambda_.3} parent=83 // pred_check_branch
          %653 = sbr.rel (%p651) target = $region92
        $region91: #{_lambda_.3} parent=83 // pred_region
          %654 = dma.done %s647, 128
        $region92: #{_lambda_.3} parent=83 // pred_fallthru
          _
        // Predicated region
        $region93: #{_lambda_.3} parent=83 // pred_check
          %p655 = pneg %p111
        $region94: #{_lambda_.3} parent=83 // pred_check_branch
          %657 = sbr.rel (%p655) target = $region96
        $region95: #{_lambda_.3} parent=83 // pred_region
          %658 = dma.done [#allocation7], 1024
        $region96: #{_lambda_.3} parent=83 // pred_fallthru
          _
        // Predicated region
        $region97: #{_lambda_.3} parent=83 // pred_check
          %p659 = pneg %p132
        $region98: #{_lambda_.3} parent=83 // pred_check_branch
          %661 = sbr.rel (%p659) target = $region100
        $region99: #{_lambda_.3} parent=83 // pred_region
          %662 = dma.done [#allocation10], 16
        $region100: #{_lambda_.3} parent=83 // pred_fallthru
          _
        // Predicated region
        $region101: #{_lambda_.3} parent=83 // pred_check
          %p663 = pneg %p153
        $region102: #{_lambda_.3} parent=83 // pred_check_branch
          %665 = sbr.rel (%p663) target = $region104
        $region103: #{_lambda_.3} parent=83 // pred_region
          %666 = dma.done [#allocation10], 1024
        $region104: #{_lambda_.3} parent=83 // pred_fallthru
          _
        // Predicated region
        $region105: #{_lambda_.3} parent=83 // pred_check
          %p667 = pneg %p174
        $region106: #{_lambda_.3} parent=83 // pred_check_branch
          %669 = sbr.rel (%p667) target = $region108
        $region107: #{_lambda_.3} parent=83 // pred_region
          %670 = dma.done [#allocation13], 16
        $region108: #{_lambda_.3} parent=83 // pred_fallthru
          _
        // Predicated region
        $region109: #{_lambda_.3} parent=83 // pred_check
          %p671 = pneg %p195
        $region110: #{_lambda_.3} parent=83 // pred_check_branch
          %673 = sbr.rel (%p671) target = $region112
        $region111: #{_lambda_.3} parent=83 // pred_region
          %674 = dma.done [#allocation13], 16
        $region112: #{_lambda_.3} parent=83 // pred_fallthru
          _
        // Predicated region
        $region113: #{_lambda_.3} parent=83 // pred_check
          %p675 = pneg %p237
        $region114: #{_lambda_.3} parent=83 // pred_check_branch
          %677 = sbr.rel (%p675) target = $region116
        $region115: #{_lambda_.3} parent=83 // pred_region
          %678 = dma.done [#allocation16], 1024
        $region116: #{_lambda_.3} parent=83 // pred_fallthru
          _
        // Predicated region
        $region117: #{_lambda_.3} parent=83 // pred_check
          %p679 = pneg %p258
        $region118: #{_lambda_.3} parent=83 // pred_check_branch
          %681 = sbr.rel (%p679) target = $region120
        $region119: #{_lambda_.3} parent=83 // pred_region
          %682 = dma.done [#allocation16], 16
        $region120: #{_lambda_.3} parent=83 // pred_fallthru
          _
        // Predicated region
        $region121: #{_lambda_.3} parent=83 // pred_check
          %p683 = pneg %p279
        $region122: #{_lambda_.3} parent=83 // pred_check_branch
          %685 = sbr.rel (%p683) target = $region124
        $region123: #{_lambda_.3} parent=83 // pred_region
          %686 = dma.done [#allocation19], 1024
        $region124: #{_lambda_.3} parent=83 // pred_fallthru
          _
        // Predicated region
        $region125: #{_lambda_.3} parent=83 // pred_check
          %p687 = pneg %p300
        $region126: #{_lambda_.3} parent=83 // pred_check_branch
          %689 = sbr.rel (%p687) target = $region128
        $region127: #{_lambda_.3} parent=83 // pred_region
          %690 = dma.done [#allocation19], 16
        $region128: #{_lambda_.3} parent=83 // pred_fallthru
          _
        // Predicated region
        $region129: #{_lambda_.3} parent=83 // pred_check
          %p691 = pneg %p321
        $region130: #{_lambda_.3} parent=83 // pred_check_branch
          %693 = sbr.rel (%p691) target = $region132
        $region131: #{_lambda_.3} parent=83 // pred_region
          %694 = dma.done [#allocation22], 2048
        $region132: #{_lambda_.3} parent=83 // pred_fallthru
          _
        // Predicated region
        $region133: #{_lambda_.3} parent=83 // pred_check
          %p695 = pneg %p342
        $region134: #{_lambda_.3} parent=83 // pred_check_branch
          %697 = sbr.rel (%p695) target = $region136
        $region135: #{_lambda_.3} parent=83 // pred_region
          %698 = dma.done [#allocation22], 32
        $region136: #{_lambda_.3} parent=83 // pred_fallthru
          _
        // Predicated region
        $region137: #{_lambda_.3} parent=83 // pred_check
          %p699 = pneg %p363
        $region138: #{_lambda_.3} parent=83 // pred_check_branch
          %701 = sbr.rel (%p699) target = $region140
        $region139: #{_lambda_.3} parent=83 // pred_region
          %702 = dma.done [#allocation25], 2048
        $region140: #{_lambda_.3} parent=83 // pred_fallthru
          _
        // Predicated region
        $region141: #{_lambda_.3} parent=83 // pred_check
          %p703 = pneg %p384
        $region142: #{_lambda_.3} parent=83 // pred_check_branch
          %705 = sbr.rel (%p703) target = $region144
        $region143: #{_lambda_.3} parent=83 // pred_region
          %706 = dma.done [#allocation25], 16
        $region144: #{_lambda_.3} parent=83 // pred_fallthru
          _
        %s707 = sand.u32 %s51, 1
        %s708 = scalar_lea.sflag [#allocation4], %s707
        %s709 = sand.u32 %s51, 1
        %s710 = smul.addr %s709, 128
        %s711 = scalar_lea.vmem [#allocation3], %s710
        %p712 = pneg %p64
        %p713 = pneg %p61
        %s714 = sand.u32 %s43, 1
        %s715 = scalar_lea.sflag [#allocation7], %s714
        %s716 = sand.u32 %s77, 1
        %s717 = smul.addr %s716, 8
        %s718 = scalar_lea.vmem [#allocation6], %s717
        %p719 = pneg %p90
        %p720 = pneg %p87
        %p721 = pneg %p111
        %p722 = pneg %p108
        %p723 = pneg %p132
        %p724 = pneg %p129
        %p725 = pneg %p153
        %p726 = pneg %p150
        %p727 = pneg %p174
        %p728 = pneg %p171
        %p729 = pneg %p195
        %p730 = pneg %p192
        %p731 = pneg %p216
        %p732 = pneg %p213
        %p733 = pneg %p237
        %p734 = pneg %p234
        %p735 = pneg %p258
        %p736 = pneg %p255
        %p737 = pneg %p279
        %p738 = pneg %p276
        %p739 = pneg %p300
        %p740 = pneg %p297
        %p741 = pneg %p321
        %p742 = pneg %p318
        %p743 = pneg %p342
        %p744 = pneg %p339
        %p745 = pneg %p363
        %p746 = pneg %p360
        %p747 = pneg %p384
        %p748 = pneg %p381
        %p749 = pneg %p410
        %p750 = pneg %p407
        %s751 = sand.u32 %s397, 1
        %s752 = scalar_lea.sflag [#allocation5], %s751
        %s753 = sand.u32 %s397, 1
        %s754 = smul.addr %s753, 16
        %s755 = scalar_lea.vmem [#allocation27], %s754
        %s756 = smul.u32 16, %s43
        %s757 = smul.u32 2, %s43
        %s758 = smul.u32 2, %s43
        %v760 = vld [vmem:[%s641] sm:$0xf]
        %v761 = vld [vmem:[%s641 + $0x4] sm:$0xf]
        %v762 = vld [vmem:[%s641 + $0x8] sm:$0xf]
        %v763 = vld [vmem:[%s641 + $0xc] sm:$0xf]
        %v764 = vld [vmem:[%s641 + $0x10] sm:$0xf]
        %v765 = vld [vmem:[%s641 + $0x14] sm:$0xf]
        %v766 = vld [vmem:[%s641 + $0x18] sm:$0xf]
        %v767 = vld [vmem:[%s641 + $0x1c] sm:$0xf]
        %v768 = vld [vmem:[%s641 + $0x20] sm:$0xf]
        %v769 = vld [vmem:[%s641 + $0x24] sm:$0xf]
        %v770 = vld [vmem:[%s641 + $0x28] sm:$0xf]
        %v771 = vld [vmem:[%s641 + $0x2c] sm:$0xf]
        %v772 = vld [vmem:[%s641 + $0x30] sm:$0xf]
        %v773 = vld [vmem:[%s641 + $0x34] sm:$0xf]
        %v774 = vld [vmem:[%s641 + $0x38] sm:$0xf]
        %v775 = vld [vmem:[%s641 + $0x3c] sm:$0xf]
        %v776 = vld [vmem:[%s641 + $0x40] sm:$0xf]
        %v777 = vld [vmem:[%s641 + $0x44] sm:$0xf]
        %v778 = vld [vmem:[%s641 + $0x48] sm:$0xf]
        %v779 = vld [vmem:[%s641 + $0x4c] sm:$0xf]
        %v780 = vld [vmem:[%s641 + $0x50] sm:$0xf]
        %v781 = vld [vmem:[%s641 + $0x54] sm:$0xf]
        %v782 = vld [vmem:[%s641 + $0x58] sm:$0xf]
        %v783 = vld [vmem:[%s641 + $0x5c] sm:$0xf]
        %v784 = vld [vmem:[%s641 + $0x60] sm:$0xf]
        %v785 = vld [vmem:[%s641 + $0x64] sm:$0xf]
        %v786 = vld [vmem:[%s641 + $0x68] sm:$0xf]
        %v787 = vld [vmem:[%s641 + $0x6c] sm:$0xf]
        %v788 = vld [vmem:[%s641 + $0x70] sm:$0xf]
        %v789 = vld [vmem:[%s641 + $0x74] sm:$0xf]
        %v790 = vld [vmem:[%s641 + $0x78] sm:$0xf]
        %v791 = vld [vmem:[%s641 + $0x7c] sm:$0xf]
        %v792 = vld [vmem:[%s650] sm:$0xf]
        %v793 = vld [vmem:[%s650 + $0x4] sm:$0xf]
        %v794 = vld [vmem:[#allocation8] sm:$0xf]
        %v795 = vld [vmem:[#allocation8 + $0x4] sm:$0xf]
        %v796 = vld [vmem:[#allocation8 + $0x8] sm:$0xf]
        %v797 = vld [vmem:[#allocation8 + $0xc] sm:$0xf]
        %v798 = vld [vmem:[#allocation8 + $0x10] sm:$0xf]
        %v799 = vld [vmem:[#allocation8 + $0x14] sm:$0xf]
        %v800 = vld [vmem:[#allocation8 + $0x18] sm:$0xf]
        %v801 = vld [vmem:[#allocation8 + $0x1c] sm:$0xf]
        %v802 = vld [vmem:[#allocation8 + $0x20] sm:$0xf]
        %v803 = vld [vmem:[#allocation8 + $0x24] sm:$0xf]
        %v804 = vld [vmem:[#allocation8 + $0x28] sm:$0xf]
        %v805 = vld [vmem:[#allocation8 + $0x2c] sm:$0xf]
        %v806 = vld [vmem:[#allocation8 + $0x30] sm:$0xf]
        %v807 = vld [vmem:[#allocation8 + $0x34] sm:$0xf]
        %v808 = vld [vmem:[#allocation8 + $0x38] sm:$0xf]
        %v809 = vld [vmem:[#allocation8 + $0x3c] sm:$0xf]
        %v810 = vld [vmem:[#allocation9] sm:$0x1]
        %v812 = vlaneseq
        %v813 = vshrl.u32 %v812, 7
        %v814 = vsub.s32 0, %v813
        %v815 = vrot.slane %v810, %v814
        %v849 = vunpack.c.l.b16 %v760
        %v850 = vunpack.c.l.b16 %v761
        %v851 = vunpack.c.l.b16 %v762
        %v852 = vunpack.c.l.b16 %v763
        %v853 = vunpack.c.l.b16 %v764
        %v854 = vunpack.c.l.b16 %v765
        %v855 = vunpack.c.l.b16 %v766
        %v856 = vunpack.c.l.b16 %v767
        %v857 = vunpack.c.l.b16 %v768
        %v858 = vunpack.c.l.b16 %v769
        %v859 = vunpack.c.l.b16 %v770
        %v860 = vunpack.c.l.b16 %v771
        %v861 = vunpack.c.l.b16 %v772
        %v862 = vunpack.c.l.b16 %v773
        %v863 = vunpack.c.l.b16 %v774
        %v864 = vunpack.c.l.b16 %v775
        %v865 = vunpack.c.l.b16 %v776
        %v866 = vunpack.c.l.b16 %v777
        %v867 = vunpack.c.l.b16 %v778
        %v868 = vunpack.c.l.b16 %v779
        %v869 = vunpack.c.l.b16 %v780
        %v870 = vunpack.c.l.b16 %v781
        %v871 = vunpack.c.l.b16 %v782
        %v872 = vunpack.c.l.b16 %v783
        %v873 = vunpack.c.l.b16 %v784
        %v874 = vunpack.c.l.b16 %v785
        %v875 = vunpack.c.l.b16 %v786
        %v876 = vunpack.c.l.b16 %v787
        %v877 = vunpack.c.l.b16 %v788
        %v878 = vunpack.c.l.b16 %v789
        %v879 = vunpack.c.l.b16 %v790
        %v880 = vunpack.c.l.b16 %v791
        %v881 = vpack.c.b16 %v850, %v849
        %v882 = vpack.c.b16 %v852, %v851
        %v883 = vpack.c.b16 %v854, %v853
        %v884 = vpack.c.b16 %v856, %v855
        %v885 = vpack.c.b16 %v858, %v857
        %v886 = vpack.c.b16 %v860, %v859
        %v887 = vpack.c.b16 %v862, %v861
        %v888 = vpack.c.b16 %v864, %v863
        %v889 = vpack.c.b16 %v866, %v865
        %v890 = vpack.c.b16 %v868, %v867
        %v891 = vpack.c.b16 %v870, %v869
        %v892 = vpack.c.b16 %v872, %v871
        %v893 = vpack.c.b16 %v874, %v873
        %v894 = vpack.c.b16 %v876, %v875
        %v895 = vpack.c.b16 %v878, %v877
        %v896 = vpack.c.b16 %v880, %v879
        %v929 = vunpack.c.l.b16 %v794
        %v930 = vunpack.c.l.b16 %v795
        %v931 = vunpack.c.l.b16 %v796
        %v932 = vunpack.c.l.b16 %v797
        %v933 = vunpack.c.l.b16 %v798
        %v934 = vunpack.c.l.b16 %v799
        %v935 = vunpack.c.l.b16 %v800
        %v936 = vunpack.c.l.b16 %v801
        %v937 = vunpack.c.l.b16 %v802
        %v938 = vunpack.c.l.b16 %v803
        %v939 = vunpack.c.l.b16 %v804
        %v940 = vunpack.c.l.b16 %v805
        %v941 = vunpack.c.l.b16 %v806
        %v942 = vunpack.c.l.b16 %v807
        %v943 = vunpack.c.l.b16 %v808
        %v944 = vunpack.c.l.b16 %v809
        %v945 = vpack.c.b16 %v930, %v929
        %v946 = vpack.c.b16 %v932, %v931
        %v947 = vpack.c.b16 %v934, %v933
        %v948 = vpack.c.b16 %v936, %v935
        %v949 = vpack.c.b16 %v938, %v937
        %v950 = vpack.c.b16 %v940, %v939
        %v951 = vpack.c.b16 %v942, %v941
        %v952 = vpack.c.b16 %v944, %v943
        %961 = vmatprep.subr.bf16.mxu0 0
        %962 = vmatpush1.bf16.msra.mxu0 %v945
        %963 = vmatprep.subr.bf16.mxu0 0
        %964 = vmatpush1.bf16.msra.mxu0 %v946
        %965 = vmatprep.subr.bf16.mxu0 0
        %966 = vmatpush1.bf16.msra.mxu0 %v947
        %967 = vmatprep.subr.bf16.mxu0 0
        %968 = vmatpush1.bf16.msra.mxu0 %v948
        %969 = vmatprep.subr.bf16.mxu0 0
        %970 = vmatpush1.bf16.msra.mxu0 %v949
        %971 = vmatprep.subr.bf16.mxu0 0
        %972 = vmatpush1.bf16.msra.mxu0 %v950
        %973 = vmatprep.subr.bf16.mxu0 0
        %974 = vmatpush1.bf16.msra.mxu0 %v951
        %975 = vmatprep.subr.bf16.mxu0 0
        %976 = vmatpush1.bf16.msra.mxu0 %v952
        %977 = vmatprep.subr.bf16.mxu0 0
        %978 = vmatpush1.bf16.msra.mxu0 0
        %979 = vmatprep.subr.bf16.mxu0 0
        %980 = vmatpush1.bf16.msra.mxu0 0
        %981 = vmatprep.subr.bf16.mxu0 0
        %982 = vmatpush1.bf16.msra.mxu0 0
        %983 = vmatprep.subr.bf16.mxu0 0
        %984 = vmatpush1.bf16.msra.mxu0 0
        %985 = vmatprep.subr.bf16.mxu0 0
        %986 = vmatpush1.bf16.msra.mxu0 0
        %987 = vmatprep.subr.bf16.mxu0 0
        %988 = vmatpush1.bf16.msra.mxu0 0
        %989 = vmatprep.subr.bf16.mxu0 0
        %990 = vmatpush1.bf16.msra.mxu0 0
        %991 = vmatprep.subr.bf16.mxu0 0
        %992 = vmatpush1.bf16.msra.mxu0 0
        %993 = vmatprep.mubr.bf16.mxu0 0
        %994 = vmatmul.mubr.bf16.gmra.mrb[0].mxu0 %v881
        %v995 = vpop.f32.mrb[0].mxu0
        %v996 = vadd.f32 %v815, %v995
        %v997 = vpop.f32.mrb[0].mxu0
        %v998 = vpop.f32.mrb[0].mxu0
        %v999 = vadd.f32 %v815, %v998
        %v1000 = vpop.f32.mrb[0].mxu0
        %1001 = vmatprep.mubr.bf16.mxu0 0
        %1002 = vmatmul.mubr.bf16.gmra.mrb[0].mxu0 %v882
        %v1003 = vpop.f32.mrb[0].mxu0
        %v1004 = vadd.f32 %v815, %v1003
        %v1005 = vpop.f32.mrb[0].mxu0
        %v1006 = vpop.f32.mrb[0].mxu0
        %v1007 = vadd.f32 %v815, %v1006
        %v1008 = vpop.f32.mrb[0].mxu0
        %1009 = vmatprep.mubr.bf16.mxu0 0
        %1010 = vmatmul.mubr.bf16.gmra.mrb[0].mxu0 %v883
        %v1011 = vpop.f32.mrb[0].mxu0
        %v1012 = vadd.f32 %v815, %v1011
        %v1013 = vpop.f32.mrb[0].mxu0
        %v1014 = vpop.f32.mrb[0].mxu0
        %v1015 = vadd.f32 %v815, %v1014
        %v1016 = vpop.f32.mrb[0].mxu0
        %1017 = vmatprep.mubr.bf16.mxu0 0
        %1018 = vmatmul.mubr.bf16.gmra.mrb[0].mxu0 %v884
        %v1019 = vpop.f32.mrb[0].mxu0
        %v1020 = vadd.f32 %v815, %v1019
        %v1021 = vpop.f32.mrb[0].mxu0
        %v1022 = vpop.f32.mrb[0].mxu0
        %v1023 = vadd.f32 %v815, %v1022
        %v1024 = vpop.f32.mrb[0].mxu0
        %1025 = vmatprep.mubr.bf16.mxu0 0
        %1026 = vmatmul.mubr.bf16.gmra.mrb[0].mxu0 %v885
        %v1027 = vpop.f32.mrb[0].mxu0
        %v1028 = vadd.f32 %v815, %v1027
        %v1029 = vpop.f32.mrb[0].mxu0
        %v1030 = vpop.f32.mrb[0].mxu0
        %v1031 = vadd.f32 %v815, %v1030
        %v1032 = vpop.f32.mrb[0].mxu0
        %1033 = vmatprep.mubr.bf16.mxu0 0
        %1034 = vmatmul.mubr.bf16.gmra.mrb[0].mxu0 %v886
        %v1035 = vpop.f32.mrb[0].mxu0
        %v1036 = vadd.f32 %v815, %v1035
        %v1037 = vpop.f32.mrb[0].mxu0
        %v1038 = vpop.f32.mrb[0].mxu0
        %v1039 = vadd.f32 %v815, %v1038
        %v1040 = vpop.f32.mrb[0].mxu0
        %1041 = vmatprep.mubr.bf16.mxu0 0
        %1042 = vmatmul.mubr.bf16.gmra.mrb[0].mxu0 %v887
        %v1043 = vpop.f32.mrb[0].mxu0
        %v1044 = vadd.f32 %v815, %v1043
        %v1045 = vpop.f32.mrb[0].mxu0
        %v1046 = vpop.f32.mrb[0].mxu0
        %v1047 = vadd.f32 %v815, %v1046
        %v1048 = vpop.f32.mrb[0].mxu0
        %1049 = vmatprep.mubr.bf16.mxu0 0
        %1050 = vmatmul.mubr.bf16.gmra.mrb[0].mxu0 %v888
        %v1051 = vpop.f32.mrb[0].mxu0
        %v1052 = vadd.f32 %v815, %v1051
        %v1053 = vpop.f32.mrb[0].mxu0
        %v1054 = vpop.f32.mrb[0].mxu0
        %v1055 = vadd.f32 %v815, %v1054
        %v1056 = vpop.f32.mrb[0].mxu0
        %1057 = vmatprep.mubr.bf16.mxu0 0
        %1058 = vmatmul.mubr.bf16.gmra.mrb[0].mxu0 %v889
        %v1059 = vpop.f32.mrb[0].mxu0
        %v1060 = vadd.f32 %v815, %v1059
        %v1061 = vpop.f32.mrb[0].mxu0
        %v1062 = vpop.f32.mrb[0].mxu0
        %v1063 = vadd.f32 %v815, %v1062
        %v1064 = vpop.f32.mrb[0].mxu0
        %1065 = vmatprep.mubr.bf16.mxu0 0
        %1066 = vmatmul.mubr.bf16.gmra.mrb[0].mxu0 %v890
        %v1067 = vpop.f32.mrb[0].mxu0
        %v1068 = vadd.f32 %v815, %v1067
        %v1069 = vpop.f32.mrb[0].mxu0
        %v1070 = vpop.f32.mrb[0].mxu0
        %v1071 = vadd.f32 %v815, %v1070
        %v1072 = vpop.f32.mrb[0].mxu0
        %1073 = vmatprep.mubr.bf16.mxu0 0
        %1074 = vmatmul.mubr.bf16.gmra.mrb[0].mxu0 %v891
        %v1075 = vpop.f32.mrb[0].mxu0
        %v1076 = vadd.f32 %v815, %v1075
        %v1077 = vpop.f32.mrb[0].mxu0
        %v1078 = vpop.f32.mrb[0].mxu0
        %v1079 = vadd.f32 %v815, %v1078
        %v1080 = vpop.f32.mrb[0].mxu0
        %1081 = vmatprep.mubr.bf16.mxu0 0
        %1082 = vmatmul.mubr.bf16.gmra.mrb[0].mxu0 %v892
        %v1083 = vpop.f32.mrb[0].mxu0
        %v1084 = vadd.f32 %v815, %v1083
        %v1085 = vpop.f32.mrb[0].mxu0
        %v1086 = vpop.f32.mrb[0].mxu0
        %v1087 = vadd.f32 %v815, %v1086
        %v1088 = vpop.f32.mrb[0].mxu0
        %1089 = vmatprep.mubr.bf16.mxu0 0
        %1090 = vmatmul.mubr.bf16.gmra.mrb[0].mxu0 %v893
        %v1091 = vpop.f32.mrb[0].mxu0
        %v1092 = vadd.f32 %v815, %v1091
        %v1093 = vpop.f32.mrb[0].mxu0
        %v1094 = vpop.f32.mrb[0].mxu0
        %v1095 = vadd.f32 %v815, %v1094
        %v1096 = vpop.f32.mrb[0].mxu0
        %1097 = vmatprep.mubr.bf16.mxu0 0
        %1098 = vmatmul.mubr.bf16.gmra.mrb[0].mxu0 %v894
        %v1099 = vpop.f32.mrb[0].mxu0
        %v1100 = vadd.f32 %v815, %v1099
        %v1101 = vpop.f32.mrb[0].mxu0
        %v1102 = vpop.f32.mrb[0].mxu0
        %v1103 = vadd.f32 %v815, %v1102
        %v1104 = vpop.f32.mrb[0].mxu0
        %1105 = vmatprep.mubr.bf16.mxu0 0
        %1106 = vmatmul.mubr.bf16.gmra.mrb[0].mxu0 %v895
        %v1107 = vpop.f32.mrb[0].mxu0
        %v1108 = vadd.f32 %v815, %v1107
        %v1109 = vpop.f32.mrb[0].mxu0
        %v1110 = vpop.f32.mrb[0].mxu0
        %v1111 = vadd.f32 %v815, %v1110
        %v1112 = vpop.f32.mrb[0].mxu0
        %1113 = vmatprep.mubr.bf16.mxu0 0
        %1114 = vmatmul.mubr.bf16.gmra.mrb[0].mxu0 %v896
        %v1115 = vpop.f32.mrb[0].mxu0
        %v1116 = vadd.f32 %v815, %v1115
        %v1117 = vpop.f32.mrb[0].mxu0
        %v1118 = vpop.f32.mrb[0].mxu0
        %v1119 = vadd.f32 %v815, %v1118
        %v1120 = vpop.f32.mrb[0].mxu0
        %1121 = vdwg.mxu0
        %v1122 = vmax.f32 %v996, 0.0
        %v1123 = vmax.f32 %v999, 0.0
        %v1124 = vmax.f32 %v1004, 0.0
        %v1125 = vmax.f32 %v1007, 0.0
        %v1126 = vmax.f32 %v1012, 0.0
        %v1127 = vmax.f32 %v1015, 0.0
        %v1128 = vmax.f32 %v1020, 0.0
        %v1129 = vmax.f32 %v1023, 0.0
        %v1130 = vmax.f32 %v1028, 0.0
        %v1131 = vmax.f32 %v1031, 0.0
        %v1132 = vmax.f32 %v1036, 0.0
        %v1133 = vmax.f32 %v1039, 0.0
        %v1134 = vmax.f32 %v1044, 0.0
        %v1135 = vmax.f32 %v1047, 0.0
        %v1136 = vmax.f32 %v1052, 0.0
        %v1137 = vmax.f32 %v1055, 0.0
        %v1138 = vmax.f32 %v1060, 0.0
        %v1139 = vmax.f32 %v1063, 0.0
        %v1140 = vmax.f32 %v1068, 0.0
        %v1141 = vmax.f32 %v1071, 0.0
        %v1142 = vmax.f32 %v1076, 0.0
        %v1143 = vmax.f32 %v1079, 0.0
        %v1144 = vmax.f32 %v1084, 0.0
        %v1145 = vmax.f32 %v1087, 0.0
        %v1146 = vmax.f32 %v1092, 0.0
        %v1147 = vmax.f32 %v1095, 0.0
        %v1148 = vmax.f32 %v1100, 0.0
        %v1149 = vmax.f32 %v1103, 0.0
        %v1150 = vmax.f32 %v1108, 0.0
        %v1151 = vmax.f32 %v1111, 0.0
        %v1152 = vmax.f32 %v1116, 0.0
        %v1153 = vmax.f32 %v1119, 0.0
        %v1154 = vld [vmem:[#allocation11] sm:$0xf]
        %v1155 = vld [vmem:[#allocation11 + $0x4] sm:$0xf]
        %v1156 = vld [vmem:[#allocation11 + $0x8] sm:$0xf]
        %v1157 = vld [vmem:[#allocation11 + $0xc] sm:$0xf]
        %v1158 = vld [vmem:[#allocation11 + $0x10] sm:$0xf]
        %v1159 = vld [vmem:[#allocation11 + $0x14] sm:$0xf]
        %v1160 = vld [vmem:[#allocation11 + $0x18] sm:$0xf]
        %v1161 = vld [vmem:[#allocation11 + $0x1c] sm:$0xf]
        %v1162 = vld [vmem:[#allocation11 + $0x20] sm:$0xf]
        %v1163 = vld [vmem:[#allocation11 + $0x24] sm:$0xf]
        %v1164 = vld [vmem:[#allocation11 + $0x28] sm:$0xf]
        %v1165 = vld [vmem:[#allocation11 + $0x2c] sm:$0xf]
        %v1166 = vld [vmem:[#allocation11 + $0x30] sm:$0xf]
        %v1167 = vld [vmem:[#allocation11 + $0x34] sm:$0xf]
        %v1168 = vld [vmem:[#allocation11 + $0x38] sm:$0xf]
        %v1169 = vld [vmem:[#allocation11 + $0x3c] sm:$0xf]
        %v1170 = vld [vmem:[#allocation12] sm:$0x1]
        %v1172 = vlaneseq
        %v1173 = vshrl.u32 %v1172, 7
        %v1174 = vsub.s32 0, %v1173
        %v1175 = vrot.slane %v1170, %v1174
        %v1179 = vunpack.c.l.b16 %v792
        %v1180 = vunpack.c.l.b16 %v793
        %v1181 = vpack.c.b16 %v1180, %v1179
        %v1199 = vunpack.c.l.b16 %v1154
        %v1200 = vunpack.c.l.b16 %v1155
        %v1201 = vunpack.c.l.b16 %v1156
        %v1202 = vunpack.c.l.b16 %v1157
        %v1203 = vunpack.c.l.b16 %v1158
        %v1204 = vunpack.c.l.b16 %v1159
        %v1205 = vunpack.c.l.b16 %v1160
        %v1206 = vunpack.c.l.b16 %v1161
        %v1207 = vunpack.c.l.b16 %v1162
        %v1208 = vunpack.c.l.b16 %v1163
        %v1209 = vunpack.c.l.b16 %v1164
        %v1210 = vunpack.c.l.b16 %v1165
        %v1211 = vunpack.c.l.b16 %v1166
        %v1212 = vunpack.c.l.b16 %v1167
        %v1213 = vunpack.c.l.b16 %v1168
        %v1214 = vunpack.c.l.b16 %v1169
        %v1215 = vpack.c.b16 %v1200, %v1199
        %v1216 = vpack.c.b16 %v1202, %v1201
        %v1217 = vpack.c.b16 %v1204, %v1203
        %v1218 = vpack.c.b16 %v1206, %v1205
        %v1219 = vpack.c.b16 %v1208, %v1207
        %v1220 = vpack.c.b16 %v1210, %v1209
        %v1221 = vpack.c.b16 %v1212, %v1211
        %v1222 = vpack.c.b16 %v1214, %v1213
        %1231 = vmatprep.subr.bf16.mxu0 0
        %1232 = vmatpush1.bf16.msra.mxu0 %v1215
        %1233 = vmatprep.subr.bf16.mxu0 0
        %1234 = vmatpush1.bf16.msra.mxu0 %v1216
        %1235 = vmatprep.subr.bf16.mxu0 0
        %1236 = vmatpush1.bf16.msra.mxu0 %v1217
        %1237 = vmatprep.subr.bf16.mxu0 0
        %1238 = vmatpush1.bf16.msra.mxu0 %v1218
        %1239 = vmatprep.subr.bf16.mxu0 0
        %1240 = vmatpush1.bf16.msra.mxu0 %v1219
        %1241 = vmatprep.subr.bf16.mxu0 0
        %1242 = vmatpush1.bf16.msra.mxu0 %v1220
        %1243 = vmatprep.subr.bf16.mxu0 0
        %1244 = vmatpush1.bf16.msra.mxu0 %v1221
        %1245 = vmatprep.subr.bf16.mxu0 0
        %1246 = vmatpush1.bf16.msra.mxu0 %v1222
        %1247 = vmatprep.subr.bf16.mxu0 0
        %1248 = vmatpush1.bf16.msra.mxu0 0
        %1249 = vmatprep.subr.bf16.mxu0 0
        %1250 = vmatpush1.bf16.msra.mxu0 0
        %1251 = vmatprep.subr.bf16.mxu0 0
        %1252 = vmatpush1.bf16.msra.mxu0 0
        %1253 = vmatprep.subr.bf16.mxu0 0
        %1254 = vmatpush1.bf16.msra.mxu0 0
        %1255 = vmatprep.subr.bf16.mxu0 0
        %1256 = vmatpush1.bf16.msra.mxu0 0
        %1257 = vmatprep.subr.bf16.mxu0 0
        %1258 = vmatpush1.bf16.msra.mxu0 0
        %1259 = vmatprep.subr.bf16.mxu0 0
        %1260 = vmatpush1.bf16.msra.mxu0 0
        %1261 = vmatprep.subr.bf16.mxu0 0
        %1262 = vmatpush1.bf16.msra.mxu0 0
        %1263 = vmatprep.mubr.bf16.mxu0 0
        %1264 = vmatmul.mubr.bf16.gmra.mrb[0].mxu0 %v1181
        %v1265 = vpop.f32.mrb[0].mxu0
        %v1266 = vadd.f32 %v1175, %v1265
        %v1267 = vpop.f32.mrb[0].mxu0
        %v1268 = vpop.f32.mrb[0].mxu0
        %v1269 = vadd.f32 %v1175, %v1268
        %v1270 = vpop.f32.mrb[0].mxu0
        %1271 = vdwg.mxu0
        %v1272 = vmax.f32 %v1266, 0.0
        %v1273 = vmax.f32 %v1269, 0.0
        %v1274 = vld [vmem:[#allocation14] sm:$0x1]
        %v1276 = vlaneseq
        %v1277 = vshrl.u32 %v1276, 7
        %v1278 = vsub.s32 0, %v1277
        %v1279 = vrot.slane %v1274, %v1278
        %v1281 = vmul.f32 %v1272, %v1279
        %v1282 = vmul.f32 %v1273, %v1279
        %v1285 = vcombine.high %v1281, %v1281
        %v1287 = vunpack.c.l.s4 1966171168
        %v1288 = vunpack.c.0.s8 %v1287
        %v1289 = vlaneseq
        %v1290 = vshrl.u32 %v1289, 7
        %v1291 = vsub.s32 %v1288, %v1290
        %v1292 = vrot.slane %v1281, %v1291
        %v1294 = vunpack.c.l.s4 1966171168
        %v1295 = vunpack.c.0.s8 %v1294
        %v1296 = vlaneseq
        %v1297 = vshrl.u32 %v1296, 7
        %v1298 = vsub.s32 %v1295, %v1297
        %v1299 = vrot.slane %v1285, %v1298
        %v1300 = vcombine.high %v1292, %v1292
        %v1301 = vcombine.high %v1299, %v1299
        %v1303 = vunpack.c.l.s4 1966171168
        %v1304 = vunpack.c.0.s8 %v1303
        %v1305 = vlaneseq
        %v1306 = vshrl.u32 %v1305, 7
        %v1307 = vsub.s32 %v1304, %v1306
        %v1308 = vrot.slane %v1292, %v1307
        %v1310 = vunpack.c.l.s4 1966171168
        %v1311 = vunpack.c.0.s8 %v1310
        %v1312 = vlaneseq
        %v1313 = vshrl.u32 %v1312, 7
        %v1314 = vsub.s32 %v1311, %v1313
        %v1315 = vrot.slane %v1299, %v1314
        %v1317 = vunpack.c.l.s4 1966171168
        %v1318 = vunpack.c.0.s8 %v1317
        %v1319 = vlaneseq
        %v1320 = vshrl.u32 %v1319, 7
        %v1321 = vsub.s32 %v1318, %v1320
        %v1322 = vrot.slane %v1300, %v1321
        %v1324 = vunpack.c.l.s4 1966171168
        %v1325 = vunpack.c.0.s8 %v1324
        %v1326 = vlaneseq
        %v1327 = vshrl.u32 %v1326, 7
        %v1328 = vsub.s32 %v1325, %v1327
        %v1329 = vrot.slane %v1301, %v1328
        %v1330 = vcombine.high %v1308, %v1308
        %v1331 = vcombine.high %v1315, %v1315
        %v1332 = vcombine.high %v1322, %v1322
        %v1333 = vcombine.high %v1329, %v1329
        %v1334 = vcombine.high %v1282, %v1282
        %v1336 = vunpack.c.l.s4 1966171168
        %v1337 = vunpack.c.0.s8 %v1336
        %v1338 = vlaneseq
        %v1339 = vshrl.u32 %v1338, 7
        %v1340 = vsub.s32 %v1337, %v1339
        %v1341 = vrot.slane %v1282, %v1340
        %v1343 = vunpack.c.l.s4 1966171168
        %v1344 = vunpack.c.0.s8 %v1343
        %v1345 = vlaneseq
        %v1346 = vshrl.u32 %v1345, 7
        %v1347 = vsub.s32 %v1344, %v1346
        %v1348 = vrot.slane %v1334, %v1347
        %v1349 = vcombine.high %v1341, %v1341
        %v1350 = vcombine.high %v1348, %v1348
        %v1352 = vunpack.c.l.s4 1966171168
        %v1353 = vunpack.c.0.s8 %v1352
        %v1354 = vlaneseq
        %v1355 = vshrl.u32 %v1354, 7
        %v1356 = vsub.s32 %v1353, %v1355
        %v1357 = vrot.slane %v1341, %v1356
        %v1359 = vunpack.c.l.s4 1966171168
        %v1360 = vunpack.c.0.s8 %v1359
        %v1361 = vlaneseq
        %v1362 = vshrl.u32 %v1361, 7
        %v1363 = vsub.s32 %v1360, %v1362
        %v1364 = vrot.slane %v1348, %v1363
        %v1366 = vunpack.c.l.s4 1966171168
        %v1367 = vunpack.c.0.s8 %v1366
        %v1368 = vlaneseq
        %v1369 = vshrl.u32 %v1368, 7
        %v1370 = vsub.s32 %v1367, %v1369
        %v1371 = vrot.slane %v1349, %v1370
        %v1373 = vunpack.c.l.s4 1966171168
        %v1374 = vunpack.c.0.s8 %v1373
        %v1375 = vlaneseq
        %v1376 = vshrl.u32 %v1375, 7
        %v1377 = vsub.s32 %v1374, %v1376
        %v1378 = vrot.slane %v1350, %v1377
        %v1379 = vcombine.high %v1357, %v1357
        %v1380 = vcombine.high %v1364, %v1364
        %v1381 = vcombine.high %v1371, %v1371
        %v1382 = vcombine.high %v1378, %v1378
        %v1383 = vlaneseq
        %v1384 = vshrl.u32 %v1383, 7
        %v1385 = vsub.s32 0, %v1384
        %v1386 = vrot.slane %v1308, %v1385
        %v1387 = vlaneseq
        %v1388 = vshrl.u32 %v1387, 7
        %v1389 = vsub.s32 0, %v1388
        %v1390 = vrot.slane %v1322, %v1389
        %v1391 = vlaneseq
        %v1392 = vshrl.u32 %v1391, 7
        %v1393 = vsub.s32 0, %v1392
        %v1394 = vrot.slane %v1330, %v1393
        %v1395 = vlaneseq
        %v1396 = vshrl.u32 %v1395, 7
        %v1397 = vsub.s32 0, %v1396
        %v1398 = vrot.slane %v1332, %v1397
        %v1399 = vlaneseq
        %v1400 = vshrl.u32 %v1399, 7
        %v1401 = vsub.s32 0, %v1400
        %v1402 = vrot.slane %v1315, %v1401
        %v1403 = vlaneseq
        %v1404 = vshrl.u32 %v1403, 7
        %v1405 = vsub.s32 0, %v1404
        %v1406 = vrot.slane %v1329, %v1405
        %v1407 = vlaneseq
        %v1408 = vshrl.u32 %v1407, 7
        %v1409 = vsub.s32 0, %v1408
        %v1410 = vrot.slane %v1331, %v1409
        %v1411 = vlaneseq
        %v1412 = vshrl.u32 %v1411, 7
        %v1413 = vsub.s32 0, %v1412
        %v1414 = vrot.slane %v1333, %v1413
        %v1415 = vlaneseq
        %v1416 = vshrl.u32 %v1415, 7
        %v1417 = vsub.s32 0, %v1416
        %v1418 = vrot.slane %v1357, %v1417
        %v1419 = vlaneseq
        %v1420 = vshrl.u32 %v1419, 7
        %v1421 = vsub.s32 0, %v1420
        %v1422 = vrot.slane %v1371, %v1421
        %v1423 = vlaneseq
        %v1424 = vshrl.u32 %v1423, 7
        %v1425 = vsub.s32 0, %v1424
        %v1426 = vrot.slane %v1379, %v1425
        %v1427 = vlaneseq
        %v1428 = vshrl.u32 %v1427, 7
        %v1429 = vsub.s32 0, %v1428
        %v1430 = vrot.slane %v1381, %v1429
        %v1431 = vlaneseq
        %v1432 = vshrl.u32 %v1431, 7
        %v1433 = vsub.s32 0, %v1432
        %v1434 = vrot.slane %v1364, %v1433
        %v1435 = vlaneseq
        %v1436 = vshrl.u32 %v1435, 7
        %v1437 = vsub.s32 0, %v1436
        %v1438 = vrot.slane %v1378, %v1437
        %v1439 = vlaneseq
        %v1440 = vshrl.u32 %v1439, 7
        %v1441 = vsub.s32 0, %v1440
        %v1442 = vrot.slane %v1380, %v1441
        %v1443 = vlaneseq
        %v1444 = vshrl.u32 %v1443, 7
        %v1445 = vsub.s32 0, %v1444
        %v1446 = vrot.slane %v1382, %v1445
        %v1463 = vmul.f32 %v1122, %v1386
        %v1464 = vmul.f32 %v1123, %v1386
        %v1465 = vmul.f32 %v1124, %v1390
        %v1466 = vmul.f32 %v1125, %v1390
        %v1467 = vmul.f32 %v1126, %v1394
        %v1468 = vmul.f32 %v1127, %v1394
        %v1469 = vmul.f32 %v1128, %v1398
        %v1470 = vmul.f32 %v1129, %v1398
        %v1471 = vmul.f32 %v1130, %v1402
        %v1472 = vmul.f32 %v1131, %v1402
        %v1473 = vmul.f32 %v1132, %v1406
        %v1474 = vmul.f32 %v1133, %v1406
        %v1475 = vmul.f32 %v1134, %v1410
        %v1476 = vmul.f32 %v1135, %v1410
        %v1477 = vmul.f32 %v1136, %v1414
        %v1478 = vmul.f32 %v1137, %v1414
        %v1479 = vmul.f32 %v1138, %v1418
        %v1480 = vmul.f32 %v1139, %v1418
        %v1481 = vmul.f32 %v1140, %v1422
        %v1482 = vmul.f32 %v1141, %v1422
        %v1483 = vmul.f32 %v1142, %v1426
        %v1484 = vmul.f32 %v1143, %v1426
        %v1485 = vmul.f32 %v1144, %v1430
        %v1486 = vmul.f32 %v1145, %v1430
        %v1487 = vmul.f32 %v1146, %v1434
        %v1488 = vmul.f32 %v1147, %v1434
        %v1489 = vmul.f32 %v1148, %v1438
        %v1490 = vmul.f32 %v1149, %v1438
        %v1491 = vmul.f32 %v1150, %v1442
        %v1492 = vmul.f32 %v1151, %v1442
        %v1493 = vmul.f32 %v1152, %v1446
        %v1494 = vmul.f32 %v1153, %v1446
        %1495 = vadd.xlane.f32.xlu0 %v1463
        %v1496 = vpop.xlane.xlu0 %1495
        %1497 = vadd.xlane.f32.xlu0 %v1464
        %v1498 = vpop.xlane.xlu0 %1497
        %1499 = vadd.xlane.f32.xlu0 %v1465
        %v1500 = vpop.xlane.xlu0 %1499
        %1501 = vadd.xlane.f32.xlu0 %v1466
        %v1502 = vpop.xlane.xlu0 %1501
        %1503 = vadd.xlane.f32.xlu0 %v1467
        %v1504 = vpop.xlane.xlu0 %1503
        %1505 = vadd.xlane.f32.xlu0 %v1468
        %v1506 = vpop.xlane.xlu0 %1505
        %1507 = vadd.xlane.f32.xlu0 %v1469
        %v1508 = vpop.xlane.xlu0 %1507
        %1509 = vadd.xlane.f32.xlu0 %v1470
        %v1510 = vpop.xlane.xlu0 %1509
        %1511 = vadd.xlane.f32.xlu0 %v1471
        %v1512 = vpop.xlane.xlu0 %1511
        %1513 = vadd.xlane.f32.xlu0 %v1472
        %v1514 = vpop.xlane.xlu0 %1513
        %1515 = vadd.xlane.f32.xlu0 %v1473
        %v1516 = vpop.xlane.xlu0 %1515
        %1517 = vadd.xlane.f32.xlu0 %v1474
        %v1518 = vpop.xlane.xlu0 %1517
        %1519 = vadd.xlane.f32.xlu0 %v1475
        %v1520 = vpop.xlane.xlu0 %1519
        %1521 = vadd.xlane.f32.xlu0 %v1476
        %v1522 = vpop.xlane.xlu0 %1521
        %1523 = vadd.xlane.f32.xlu0 %v1477
        %v1524 = vpop.xlane.xlu0 %1523
        %1525 = vadd.xlane.f32.xlu0 %v1478
        %v1526 = vpop.xlane.xlu0 %1525
        %1527 = vadd.xlane.f32.xlu0 %v1479
        %v1528 = vpop.xlane.xlu0 %1527
        %1529 = vadd.xlane.f32.xlu0 %v1480
        %v1530 = vpop.xlane.xlu0 %1529
        %1531 = vadd.xlane.f32.xlu0 %v1481
        %v1532 = vpop.xlane.xlu0 %1531
        %1533 = vadd.xlane.f32.xlu0 %v1482
        %v1534 = vpop.xlane.xlu0 %1533
        %1535 = vadd.xlane.f32.xlu0 %v1483
        %v1536 = vpop.xlane.xlu0 %1535
        %1537 = vadd.xlane.f32.xlu0 %v1484
        %v1538 = vpop.xlane.xlu0 %1537
        %1539 = vadd.xlane.f32.xlu0 %v1485
        %v1540 = vpop.xlane.xlu0 %1539
        %1541 = vadd.xlane.f32.xlu0 %v1486
        %v1542 = vpop.xlane.xlu0 %1541
        %1543 = vadd.xlane.f32.xlu0 %v1487
        %v1544 = vpop.xlane.xlu0 %1543
        %1545 = vadd.xlane.f32.xlu0 %v1488
        %v1546 = vpop.xlane.xlu0 %1545
        %1547 = vadd.xlane.f32.xlu0 %v1489
        %v1548 = vpop.xlane.xlu0 %1547
        %1549 = vadd.xlane.f32.xlu0 %v1490
        %v1550 = vpop.xlane.xlu0 %1549
        %1551 = vadd.xlane.f32.xlu0 %v1491
        %v1552 = vpop.xlane.xlu0 %1551
        %1553 = vadd.xlane.f32.xlu0 %v1492
        %v1554 = vpop.xlane.xlu0 %1553
        %1555 = vadd.xlane.f32.xlu0 %v1493
        %v1556 = vpop.xlane.xlu0 %1555
        %1557 = vadd.xlane.f32.xlu0 %v1494
        %v1558 = vpop.xlane.xlu0 %1557
        %s1559 = sld [smem:[#allocation2]]
        %v1560 = vstv %s1559
        %v1561 = vadd.f32 %v1496, %v1560
        %v1562 = vadd.f32 %v1498, %v1560
        %v1563 = vadd.f32 %v1500, %v1560
        %v1564 = vadd.f32 %v1502, %v1560
        %v1565 = vadd.f32 %v1504, %v1560
        %v1566 = vadd.f32 %v1506, %v1560
        %v1567 = vadd.f32 %v1508, %v1560
        %v1568 = vadd.f32 %v1510, %v1560
        %v1569 = vadd.f32 %v1512, %v1560
        %v1570 = vadd.f32 %v1514, %v1560
        %v1571 = vadd.f32 %v1516, %v1560
        %v1572 = vadd.f32 %v1518, %v1560
        %v1573 = vadd.f32 %v1520, %v1560
        %v1574 = vadd.f32 %v1522, %v1560
        %v1575 = vadd.f32 %v1524, %v1560
        %v1576 = vadd.f32 %v1526, %v1560
        %v1577 = vadd.f32 %v1528, %v1560
        %v1578 = vadd.f32 %v1530, %v1560
        %v1579 = vadd.f32 %v1532, %v1560
        %v1580 = vadd.f32 %v1534, %v1560
        %v1581 = vadd.f32 %v1536, %v1560
        %v1582 = vadd.f32 %v1538, %v1560
        %v1583 = vadd.f32 %v1540, %v1560
        %v1584 = vadd.f32 %v1542, %v1560
        %v1585 = vadd.f32 %v1544, %v1560
        %v1586 = vadd.f32 %v1546, %v1560
        %v1587 = vadd.f32 %v1548, %v1560
        %v1588 = vadd.f32 %v1550, %v1560
        %v1589 = vadd.f32 %v1552, %v1560
        %v1590 = vadd.f32 %v1554, %v1560
        %v1591 = vadd.f32 %v1556, %v1560
        %v1592 = vadd.f32 %v1558, %v1560
        %v1625 = vlaneseq
        %v1626 = vand.u32 %v1625, 127
        %v1627 = vlaneseq
        %v1628 = vshrl.u32 %v1627, 7
        %v1629 = vsub.s32 %v1626, %v1628
        %v1630 = vrot.slane %v1561, %v1629
        %v1631 = vadd.s32 %v1626, 4294967288
        %v1632 = vlaneseq
        %v1633 = vshrl.u32 %v1632, 7
        %v1634 = vsub.s32 %v1631, %v1633
        %v1635 = vrot.slane %v1562, %v1634
        %vm1636 = vcmask 130112
        %v1637 = vsel %vm1636, %v1635, %v1630
        %v1638 = vlaneseq
        %v1639 = vshrl.u32 %v1638, 7
        %v1640 = vsub.s32 %v1626, %v1639
        %v1641 = vrot.slane %v1563, %v1640
        %v1642 = vlaneseq
        %v1643 = vshrl.u32 %v1642, 7
        %v1644 = vsub.s32 %v1631, %v1643
        %v1645 = vrot.slane %v1564, %v1644
        %v1646 = vsel %vm1636, %v1645, %v1641
        %v1647 = vlaneseq
        %v1648 = vshrl.u32 %v1647, 7
        %v1649 = vsub.s32 %v1626, %v1648
        %v1650 = vrot.slane %v1565, %v1649
        %v1651 = vlaneseq
        %v1652 = vshrl.u32 %v1651, 7
        %v1653 = vsub.s32 %v1631, %v1652
        %v1654 = vrot.slane %v1566, %v1653
        %v1655 = vsel %vm1636, %v1654, %v1650
        %v1656 = vlaneseq
        %v1657 = vshrl.u32 %v1656, 7
        %v1658 = vsub.s32 %v1626, %v1657
        %v1659 = vrot.slane %v1567, %v1658
        %v1660 = vlaneseq
        %v1661 = vshrl.u32 %v1660, 7
        %v1662 = vsub.s32 %v1631, %v1661
        %v1663 = vrot.slane %v1568, %v1662
        %v1664 = vsel %vm1636, %v1663, %v1659
        %v1665 = vlaneseq
        %v1666 = vshrl.u32 %v1665, 7
        %v1667 = vsub.s32 %v1626, %v1666
        %v1668 = vrot.slane %v1569, %v1667
        %v1669 = vlaneseq
        %v1670 = vshrl.u32 %v1669, 7
        %v1671 = vsub.s32 %v1631, %v1670
        %v1672 = vrot.slane %v1570, %v1671
        %v1673 = vsel %vm1636, %v1672, %v1668
        %v1674 = vlaneseq
        %v1675 = vshrl.u32 %v1674, 7
        %v1676 = vsub.s32 %v1626, %v1675
        %v1677 = vrot.slane %v1571, %v1676
        %v1678 = vlaneseq
        %v1679 = vshrl.u32 %v1678, 7
        %v1680 = vsub.s32 %v1631, %v1679
        %v1681 = vrot.slane %v1572, %v1680
        %v1682 = vsel %vm1636, %v1681, %v1677
        %v1683 = vlaneseq
        %v1684 = vshrl.u32 %v1683, 7
        %v1685 = vsub.s32 %v1626, %v1684
        %v1686 = vrot.slane %v1573, %v1685
        %v1687 = vlaneseq
        %v1688 = vshrl.u32 %v1687, 7
        %v1689 = vsub.s32 %v1631, %v1688
        %v1690 = vrot.slane %v1574, %v1689
        %v1691 = vsel %vm1636, %v1690, %v1686
        %v1692 = vlaneseq
        %v1693 = vshrl.u32 %v1692, 7
        %v1694 = vsub.s32 %v1626, %v1693
        %v1695 = vrot.slane %v1575, %v1694
        %v1696 = vlaneseq
        %v1697 = vshrl.u32 %v1696, 7
        %v1698 = vsub.s32 %v1631, %v1697
        %v1699 = vrot.slane %v1576, %v1698
        %v1700 = vsel %vm1636, %v1699, %v1695
        %v1701 = vlaneseq
        %v1702 = vshrl.u32 %v1701, 7
        %v1703 = vsub.s32 %v1626, %v1702
        %v1704 = vrot.slane %v1577, %v1703
        %v1705 = vlaneseq
        %v1706 = vshrl.u32 %v1705, 7
        %v1707 = vsub.s32 %v1631, %v1706
        %v1708 = vrot.slane %v1578, %v1707
        %v1709 = vsel %vm1636, %v1708, %v1704
        %v1710 = vlaneseq
        %v1711 = vshrl.u32 %v1710, 7
        %v1712 = vsub.s32 %v1626, %v1711
        %v1713 = vrot.slane %v1579, %v1712
        %v1714 = vlaneseq
        %v1715 = vshrl.u32 %v1714, 7
        %v1716 = vsub.s32 %v1631, %v1715
        %v1717 = vrot.slane %v1580, %v1716
        %v1718 = vsel %vm1636, %v1717, %v1713
        %v1719 = vlaneseq
        %v1720 = vshrl.u32 %v1719, 7
        %v1721 = vsub.s32 %v1626, %v1720
        %v1722 = vrot.slane %v1581, %v1721
        %v1723 = vlaneseq
        %v1724 = vshrl.u32 %v1723, 7
        %v1725 = vsub.s32 %v1631, %v1724
        %v1726 = vrot.slane %v1582, %v1725
        %v1727 = vsel %vm1636, %v1726, %v1722
        %v1728 = vlaneseq
        %v1729 = vshrl.u32 %v1728, 7
        %v1730 = vsub.s32 %v1626, %v1729
        %v1731 = vrot.slane %v1583, %v1730
        %v1732 = vlaneseq
        %v1733 = vshrl.u32 %v1732, 7
        %v1734 = vsub.s32 %v1631, %v1733
        %v1735 = vrot.slane %v1584, %v1734
        %v1736 = vsel %vm1636, %v1735, %v1731
        %v1737 = vlaneseq
        %v1738 = vshrl.u32 %v1737, 7
        %v1739 = vsub.s32 %v1626, %v1738
        %v1740 = vrot.slane %v1585, %v1739
        %v1741 = vlaneseq
        %v1742 = vshrl.u32 %v1741, 7
        %v1743 = vsub.s32 %v1631, %v1742
        %v1744 = vrot.slane %v1586, %v1743
        %v1745 = vsel %vm1636, %v1744, %v1740
        %v1746 = vlaneseq
        %v1747 = vshrl.u32 %v1746, 7
        %v1748 = vsub.s32 %v1626, %v1747
        %v1749 = vrot.slane %v1587, %v1748
        %v1750 = vlaneseq
        %v1751 = vshrl.u32 %v1750, 7
        %v1752 = vsub.s32 %v1631, %v1751
        %v1753 = vrot.slane %v1588, %v1752
        %v1754 = vsel %vm1636, %v1753, %v1749
        %v1755 = vlaneseq
        %v1756 = vshrl.u32 %v1755, 7
        %v1757 = vsub.s32 %v1626, %v1756
        %v1758 = vrot.slane %v1589, %v1757
        %v1759 = vlaneseq
        %v1760 = vshrl.u32 %v1759, 7
        %v1761 = vsub.s32 %v1631, %v1760
        %v1762 = vrot.slane %v1590, %v1761
        %v1763 = vsel %vm1636, %v1762, %v1758
        %v1764 = vlaneseq
        %v1765 = vshrl.u32 %v1764, 7
        %v1766 = vsub.s32 %v1626, %v1765
        %v1767 = vrot.slane %v1591, %v1766
        %v1768 = vlaneseq
        %v1769 = vshrl.u32 %v1768, 7
        %v1770 = vsub.s32 %v1631, %v1769
        %v1771 = vrot.slane %v1592, %v1770
        %v1772 = vsel %vm1636, %v1771, %v1767
        %vm1773 = vcmask 1041409
        %v1774 = vsel %vm1773, %v1646, %v1637
        %vm1775 = vcmask 1042434
        %v1776 = vsel %vm1775, %v1655, %v1774
        %vm1777 = vcmask 1043459
        %v1778 = vsel %vm1777, %v1664, %v1776
        %vm1779 = vcmask 1044484
        %v1780 = vsel %vm1779, %v1673, %v1778
        %vm1781 = vcmask 1045509
        %v1782 = vsel %vm1781, %v1682, %v1780
        %vm1783 = vcmask 1046534
        %v1784 = vsel %vm1783, %v1691, %v1782
        %vm1785 = vcmask 1047559
        %v1786 = vsel %vm1785, %v1700, %v1784
        %v1787 = vsel %vm1773, %v1718, %v1709
        %v1788 = vsel %vm1775, %v1727, %v1787
        %v1789 = vsel %vm1777, %v1736, %v1788
        %v1790 = vsel %vm1779, %v1745, %v1789
        %v1791 = vsel %vm1781, %v1754, %v1790
        %v1792 = vsel %vm1783, %v1763, %v1791
        %v1793 = vsel %vm1785, %v1772, %v1792
        %vm1796 = vcmask 130048
        %v1797 = vsel %vm1796, %v1786, -inf
        %1798 = vmax.xlane.f32.xlu0 %v1797
        %v1799 = vpop.xlane.xlu0 %1798
        %v1800 = vsel %vm1796, %v1793, -inf
        %1801 = vmax.xlane.f32.xlu0 %v1800
        %v1802 = vpop.xlane.xlu0 %1801
        %v1805 = vlaneseq
        %v1806 = vshrl.u32 %v1805, 7
        %v1807 = vsub.s32 0, %v1806
        %v1808 = vrot.slane %v1799, %v1807
        %v1809 = vlaneseq
        %v1810 = vshrl.u32 %v1809, 7
        %v1811 = vsub.s32 1, %v1810
        %v1812 = vrot.slane %v1799, %v1811
        %v1813 = vlaneseq
        %v1814 = vshrl.u32 %v1813, 7
        %v1815 = vsub.s32 2, %v1814
        %v1816 = vrot.slane %v1799, %v1815
        %v1817 = vlaneseq
        %v1818 = vshrl.u32 %v1817, 7
        %v1819 = vsub.s32 3, %v1818
        %v1820 = vrot.slane %v1799, %v1819
        %v1821 = vlaneseq
        %v1822 = vshrl.u32 %v1821, 7
        %v1823 = vsub.s32 4, %v1822
        %v1824 = vrot.slane %v1799, %v1823
        %v1825 = vlaneseq
        %v1826 = vshrl.u32 %v1825, 7
        %v1827 = vsub.s32 5, %v1826
        %v1828 = vrot.slane %v1799, %v1827
        %v1829 = vlaneseq
        %v1830 = vshrl.u32 %v1829, 7
        %v1831 = vsub.s32 6, %v1830
        %v1832 = vrot.slane %v1799, %v1831
        %v1833 = vlaneseq
        %v1834 = vshrl.u32 %v1833, 7
        %v1835 = vsub.s32 7, %v1834
        %v1836 = vrot.slane %v1799, %v1835
        %v1837 = vlaneseq
        %v1838 = vshrl.u32 %v1837, 7
        %v1839 = vsub.s32 0, %v1838
        %v1840 = vrot.slane %v1802, %v1839
        %v1841 = vlaneseq
        %v1842 = vshrl.u32 %v1841, 7
        %v1843 = vsub.s32 1, %v1842
        %v1844 = vrot.slane %v1802, %v1843
        %v1845 = vlaneseq
        %v1846 = vshrl.u32 %v1845, 7
        %v1847 = vsub.s32 2, %v1846
        %v1848 = vrot.slane %v1802, %v1847
        %v1849 = vlaneseq
        %v1850 = vshrl.u32 %v1849, 7
        %v1851 = vsub.s32 3, %v1850
        %v1852 = vrot.slane %v1802, %v1851
        %v1853 = vlaneseq
        %v1854 = vshrl.u32 %v1853, 7
        %v1855 = vsub.s32 4, %v1854
        %v1856 = vrot.slane %v1802, %v1855
        %v1857 = vlaneseq
        %v1858 = vshrl.u32 %v1857, 7
        %v1859 = vsub.s32 5, %v1858
        %v1860 = vrot.slane %v1802, %v1859
        %v1861 = vlaneseq
        %v1862 = vshrl.u32 %v1861, 7
        %v1863 = vsub.s32 6, %v1862
        %v1864 = vrot.slane %v1802, %v1863
        %v1865 = vlaneseq
        %v1866 = vshrl.u32 %v1865, 7
        %v1867 = vsub.s32 7, %v1866
        %v1868 = vrot.slane %v1802, %v1867
        %v1885 = vsub.f32 %v1561, %v1808
        %v1886 = vsub.f32 %v1562, %v1808
        %v1887 = vsub.f32 %v1563, %v1812
        %v1888 = vsub.f32 %v1564, %v1812
        %v1889 = vsub.f32 %v1565, %v1816
        %v1890 = vsub.f32 %v1566, %v1816
        %v1891 = vsub.f32 %v1567, %v1820
        %v1892 = vsub.f32 %v1568, %v1820
        %v1893 = vsub.f32 %v1569, %v1824
        %v1894 = vsub.f32 %v1570, %v1824
        %v1895 = vsub.f32 %v1571, %v1828
        %v1896 = vsub.f32 %v1572, %v1828
        %v1897 = vsub.f32 %v1573, %v1832
        %v1898 = vsub.f32 %v1574, %v1832
        %v1899 = vsub.f32 %v1575, %v1836
        %v1900 = vsub.f32 %v1576, %v1836
        %v1901 = vsub.f32 %v1577, %v1840
        %v1902 = vsub.f32 %v1578, %v1840
        %v1903 = vsub.f32 %v1579, %v1844
        %v1904 = vsub.f32 %v1580, %v1844
        %v1905 = vsub.f32 %v1581, %v1848
        %v1906 = vsub.f32 %v1582, %v1848
        %v1907 = vsub.f32 %v1583, %v1852
        %v1908 = vsub.f32 %v1584, %v1852
        %v1909 = vsub.f32 %v1585, %v1856
        %v1910 = vsub.f32 %v1586, %v1856
        %v1911 = vsub.f32 %v1587, %v1860
        %v1912 = vsub.f32 %v1588, %v1860
        %v1913 = vsub.f32 %v1589, %v1864
        %v1914 = vsub.f32 %v1590, %v1864
        %v1915 = vsub.f32 %v1591, %v1868
        %v1916 = vsub.f32 %v1592, %v1868
        %v1917 = vmul.f32 %v1885, 1.442695
        %v1918 = vpow.pop %v1917
        %v1919 = vmul.f32 %v1886, 1.442695
        %v1920 = vpow.pop %v1919
        %v1921 = vmul.f32 %v1887, 1.442695
        %v1922 = vpow.pop %v1921
        %v1923 = vmul.f32 %v1888, 1.442695
        %v1924 = vpow.pop %v1923
        %v1925 = vmul.f32 %v1889, 1.442695
        %v1926 = vpow.pop %v1925
        %v1927 = vmul.f32 %v1890, 1.442695
        %v1928 = vpow.pop %v1927
        %v1929 = vmul.f32 %v1891, 1.442695
        %v1930 = vpow.pop %v1929
        %v1931 = vmul.f32 %v1892, 1.442695
        %v1932 = vpow.pop %v1931
        %v1933 = vmul.f32 %v1893, 1.442695
        %v1934 = vpow.pop %v1933
        %v1935 = vmul.f32 %v1894, 1.442695
        %v1936 = vpow.pop %v1935
        %v1937 = vmul.f32 %v1895, 1.442695
        %v1938 = vpow.pop %v1937
        %v1939 = vmul.f32 %v1896, 1.442695
        %v1940 = vpow.pop %v1939
        %v1941 = vmul.f32 %v1897, 1.442695
        %v1942 = vpow.pop %v1941
        %v1943 = vmul.f32 %v1898, 1.442695
        %v1944 = vpow.pop %v1943
        %v1945 = vmul.f32 %v1899, 1.442695
        %v1946 = vpow.pop %v1945
        %v1947 = vmul.f32 %v1900, 1.442695
        %v1948 = vpow.pop %v1947
        %v1949 = vmul.f32 %v1901, 1.442695
        %v1950 = vpow.pop %v1949
        %v1951 = vmul.f32 %v1902, 1.442695
        %v1952 = vpow.pop %v1951
        %v1953 = vmul.f32 %v1903, 1.442695
        %v1954 = vpow.pop %v1953
        %v1955 = vmul.f32 %v1904, 1.442695
        %v1956 = vpow.pop %v1955
        %v1957 = vmul.f32 %v1905, 1.442695
        %v1958 = vpow.pop %v1957
        %v1959 = vmul.f32 %v1906, 1.442695
        %v1960 = vpow.pop %v1959
        %v1961 = vmul.f32 %v1907, 1.442695
        %v1962 = vpow.pop %v1961
        %v1963 = vmul.f32 %v1908, 1.442695
        %v1964 = vpow.pop %v1963
        %v1965 = vmul.f32 %v1909, 1.442695
        %v1966 = vpow.pop %v1965
        %v1967 = vmul.f32 %v1910, 1.442695
        %v1968 = vpow.pop %v1967
        %v1969 = vmul.f32 %v1911, 1.442695
        %v1970 = vpow.pop %v1969
        %v1971 = vmul.f32 %v1912, 1.442695
        %v1972 = vpow.pop %v1971
        %v1973 = vmul.f32 %v1913, 1.442695
        %v1974 = vpow.pop %v1973
        %v1975 = vmul.f32 %v1914, 1.442695
        %v1976 = vpow.pop %v1975
        %v1977 = vmul.f32 %v1915, 1.442695
        %v1978 = vpow.pop %v1977
        %v1979 = vmul.f32 %v1916, 1.442695
        %v1980 = vpow.pop %v1979
        %2013 = vset.pattern.permute.xlu0 0
        %2014 = vperm.xlu0 %2013, %v1918
        %v2015 = vpop.permute.xlu0 %2014
        %2016 = vset.pattern.permute.xlu0 0
        %2017 = vperm.xlu0 %2016, %v1920
        %v2018 = vpop.permute.xlu0 %2017
        %2019 = vset.pattern.permute.xlu0 0
        %2020 = vperm.xlu0 %2019, %v1922
        %v2021 = vpop.permute.xlu0 %2020
        %2022 = vset.pattern.permute.xlu0 0
        %2023 = vperm.xlu0 %2022, %v1924
        %v2024 = vpop.permute.xlu0 %2023
        %2025 = vset.pattern.permute.xlu0 0
        %2026 = vperm.xlu0 %2025, %v1926
        %v2027 = vpop.permute.xlu0 %2026
        %2028 = vset.pattern.permute.xlu0 0
        %2029 = vperm.xlu0 %2028, %v1928
        %v2030 = vpop.permute.xlu0 %2029
        %2031 = vset.pattern.permute.xlu0 0
        %2032 = vperm.xlu0 %2031, %v1930
        %v2033 = vpop.permute.xlu0 %2032
        %2034 = vset.pattern.permute.xlu0 0
        %2035 = vperm.xlu0 %2034, %v1932
        %v2036 = vpop.permute.xlu0 %2035
        %2037 = vset.pattern.permute.xlu0 0
        %2038 = vperm.xlu0 %2037, %v1934
        %v2039 = vpop.permute.xlu0 %2038
        %2040 = vset.pattern.permute.xlu0 0
        %2041 = vperm.xlu0 %2040, %v1936
        %v2042 = vpop.permute.xlu0 %2041
        %2043 = vset.pattern.permute.xlu0 0
        %2044 = vperm.xlu0 %2043, %v1938
        %v2045 = vpop.permute.xlu0 %2044
        %2046 = vset.pattern.permute.xlu0 0
        %2047 = vperm.xlu0 %2046, %v1940
        %v2048 = vpop.permute.xlu0 %2047
        %2049 = vset.pattern.permute.xlu0 0
        %2050 = vperm.xlu0 %2049, %v1942
        %v2051 = vpop.permute.xlu0 %2050
        %2052 = vset.pattern.permute.xlu0 0
        %2053 = vperm.xlu0 %2052, %v1944
        %v2054 = vpop.permute.xlu0 %2053
        %2055 = vset.pattern.permute.xlu0 0
        %2056 = vperm.xlu0 %2055, %v1946
        %v2057 = vpop.permute.xlu0 %2056
        %2058 = vset.pattern.permute.xlu0 0
        %2059 = vperm.xlu0 %2058, %v1948
        %v2060 = vpop.permute.xlu0 %2059
        %2061 = vset.pattern.permute.xlu0 0
        %2062 = vperm.xlu0 %2061, %v1950
        %v2063 = vpop.permute.xlu0 %2062
        %2064 = vset.pattern.permute.xlu0 0
        %2065 = vperm.xlu0 %2064, %v1952
        %v2066 = vpop.permute.xlu0 %2065
        %2067 = vset.pattern.permute.xlu0 0
        %2068 = vperm.xlu0 %2067, %v1954
        %v2069 = vpop.permute.xlu0 %2068
        %2070 = vset.pattern.permute.xlu0 0
        %2071 = vperm.xlu0 %2070, %v1956
        %v2072 = vpop.permute.xlu0 %2071
        %2073 = vset.pattern.permute.xlu0 0
        %2074 = vperm.xlu0 %2073, %v1958
        %v2075 = vpop.permute.xlu0 %2074
        %2076 = vset.pattern.permute.xlu0 0
        %2077 = vperm.xlu0 %2076, %v1960
        %v2078 = vpop.permute.xlu0 %2077
        %2079 = vset.pattern.permute.xlu0 0
        %2080 = vperm.xlu0 %2079, %v1962
        %v2081 = vpop.permute.xlu0 %2080
        %2082 = vset.pattern.permute.xlu0 0
        %2083 = vperm.xlu0 %2082, %v1964
        %v2084 = vpop.permute.xlu0 %2083
        %2085 = vset.pattern.permute.xlu0 0
        %2086 = vperm.xlu0 %2085, %v1966
        %v2087 = vpop.permute.xlu0 %2086
        %2088 = vset.pattern.permute.xlu0 0
        %2089 = vperm.xlu0 %2088, %v1968
        %v2090 = vpop.permute.xlu0 %2089
        %2091 = vset.pattern.permute.xlu0 0
        %2092 = vperm.xlu0 %2091, %v1970
        %v2093 = vpop.permute.xlu0 %2092
        %2094 = vset.pattern.permute.xlu0 0
        %2095 = vperm.xlu0 %2094, %v1972
        %v2096 = vpop.permute.xlu0 %2095
        %2097 = vset.pattern.permute.xlu0 0
        %2098 = vperm.xlu0 %2097, %v1974
        %v2099 = vpop.permute.xlu0 %2098
        %2100 = vset.pattern.permute.xlu0 0
        %2101 = vperm.xlu0 %2100, %v1976
        %v2102 = vpop.permute.xlu0 %2101
        %2103 = vset.pattern.permute.xlu0 0
        %2104 = vperm.xlu0 %2103, %v1978
        %v2105 = vpop.permute.xlu0 %2104
        %2106 = vset.pattern.permute.xlu0 0
        %2107 = vperm.xlu0 %2106, %v1980
        %v2108 = vpop.permute.xlu0 %2107
        %v2109 = vlaneseq
        %v2110 = vshrl.u32 %v2109, 7
        %v2111 = vsub.s32 %v1626, %v2110
        %v2112 = vrot.slane %v2015, %v2111
        %v2113 = vlaneseq
        %v2114 = vshrl.u32 %v2113, 7
        %v2115 = vsub.s32 %v1631, %v2114
        %v2116 = vrot.slane %v2018, %v2115
        %v2117 = vsel %vm1636, %v2116, %v2112
        %v2118 = vlaneseq
        %v2119 = vshrl.u32 %v2118, 7
        %v2120 = vsub.s32 %v1626, %v2119
        %v2121 = vrot.slane %v2021, %v2120
        %v2122 = vlaneseq
        %v2123 = vshrl.u32 %v2122, 7
        %v2124 = vsub.s32 %v1631, %v2123
        %v2125 = vrot.slane %v2024, %v2124
        %v2126 = vsel %vm1636, %v2125, %v2121
        %v2127 = vlaneseq
        %v2128 = vshrl.u32 %v2127, 7
        %v2129 = vsub.s32 %v1626, %v2128
        %v2130 = vrot.slane %v2027, %v2129
        %v2131 = vlaneseq
        %v2132 = vshrl.u32 %v2131, 7
        %v2133 = vsub.s32 %v1631, %v2132
        %v2134 = vrot.slane %v2030, %v2133
        %v2135 = vsel %vm1636, %v2134, %v2130
        %v2136 = vlaneseq
        %v2137 = vshrl.u32 %v2136, 7
        %v2138 = vsub.s32 %v1626, %v2137
        %v2139 = vrot.slane %v2033, %v2138
        %v2140 = vlaneseq
        %v2141 = vshrl.u32 %v2140, 7
        %v2142 = vsub.s32 %v1631, %v2141
        %v2143 = vrot.slane %v2036, %v2142
        %v2144 = vsel %vm1636, %v2143, %v2139
        %v2145 = vlaneseq
        %v2146 = vshrl.u32 %v2145, 7
        %v2147 = vsub.s32 %v1626, %v2146
        %v2148 = vrot.slane %v2039, %v2147
        %v2149 = vlaneseq
        %v2150 = vshrl.u32 %v2149, 7
        %v2151 = vsub.s32 %v1631, %v2150
        %v2152 = vrot.slane %v2042, %v2151
        %v2153 = vsel %vm1636, %v2152, %v2148
        %v2154 = vlaneseq
        %v2155 = vshrl.u32 %v2154, 7
        %v2156 = vsub.s32 %v1626, %v2155
        %v2157 = vrot.slane %v2045, %v2156
        %v2158 = vlaneseq
        %v2159 = vshrl.u32 %v2158, 7
        %v2160 = vsub.s32 %v1631, %v2159
        %v2161 = vrot.slane %v2048, %v2160
        %v2162 = vsel %vm1636, %v2161, %v2157
        %v2163 = vlaneseq
        %v2164 = vshrl.u32 %v2163, 7
        %v2165 = vsub.s32 %v1626, %v2164
        %v2166 = vrot.slane %v2051, %v2165
        %v2167 = vlaneseq
        %v2168 = vshrl.u32 %v2167, 7
        %v2169 = vsub.s32 %v1631, %v2168
        %v2170 = vrot.slane %v2054, %v2169
        %v2171 = vsel %vm1636, %v2170, %v2166
        %v2172 = vlaneseq
        %v2173 = vshrl.u32 %v2172, 7
        %v2174 = vsub.s32 %v1626, %v2173
        %v2175 = vrot.slane %v2057, %v2174
        %v2176 = vlaneseq
        %v2177 = vshrl.u32 %v2176, 7
        %v2178 = vsub.s32 %v1631, %v2177
        %v2179 = vrot.slane %v2060, %v2178
        %v2180 = vsel %vm1636, %v2179, %v2175
        %v2181 = vlaneseq
        %v2182 = vshrl.u32 %v2181, 7
        %v2183 = vsub.s32 %v1626, %v2182
        %v2184 = vrot.slane %v2063, %v2183
        %v2185 = vlaneseq
        %v2186 = vshrl.u32 %v2185, 7
        %v2187 = vsub.s32 %v1631, %v2186
        %v2188 = vrot.slane %v2066, %v2187
        %v2189 = vsel %vm1636, %v2188, %v2184
        %v2190 = vlaneseq
        %v2191 = vshrl.u32 %v2190, 7
        %v2192 = vsub.s32 %v1626, %v2191
        %v2193 = vrot.slane %v2069, %v2192
        %v2194 = vlaneseq
        %v2195 = vshrl.u32 %v2194, 7
        %v2196 = vsub.s32 %v1631, %v2195
        %v2197 = vrot.slane %v2072, %v2196
        %v2198 = vsel %vm1636, %v2197, %v2193
        %v2199 = vlaneseq
        %v2200 = vshrl.u32 %v2199, 7
        %v2201 = vsub.s32 %v1626, %v2200
        %v2202 = vrot.slane %v2075, %v2201
        %v2203 = vlaneseq
        %v2204 = vshrl.u32 %v2203, 7
        %v2205 = vsub.s32 %v1631, %v2204
        %v2206 = vrot.slane %v2078, %v2205
        %v2207 = vsel %vm1636, %v2206, %v2202
        %v2208 = vlaneseq
        %v2209 = vshrl.u32 %v2208, 7
        %v2210 = vsub.s32 %v1626, %v2209
        %v2211 = vrot.slane %v2081, %v2210
        %v2212 = vlaneseq
        %v2213 = vshrl.u32 %v2212, 7
        %v2214 = vsub.s32 %v1631, %v2213
        %v2215 = vrot.slane %v2084, %v2214
        %v2216 = vsel %vm1636, %v2215, %v2211
        %v2217 = vlaneseq
        %v2218 = vshrl.u32 %v2217, 7
        %v2219 = vsub.s32 %v1626, %v2218
        %v2220 = vrot.slane %v2087, %v2219
        %v2221 = vlaneseq
        %v2222 = vshrl.u32 %v2221, 7
        %v2223 = vsub.s32 %v1631, %v2222
        %v2224 = vrot.slane %v2090, %v2223
        %v2225 = vsel %vm1636, %v2224, %v2220
        %v2226 = vlaneseq
        %v2227 = vshrl.u32 %v2226, 7
        %v2228 = vsub.s32 %v1626, %v2227
        %v2229 = vrot.slane %v2093, %v2228
        %v2230 = vlaneseq
        %v2231 = vshrl.u32 %v2230, 7
        %v2232 = vsub.s32 %v1631, %v2231
        %v2233 = vrot.slane %v2096, %v2232
        %v2234 = vsel %vm1636, %v2233, %v2229
        %v2235 = vlaneseq
        %v2236 = vshrl.u32 %v2235, 7
        %v2237 = vsub.s32 %v1626, %v2236
        %v2238 = vrot.slane %v2099, %v2237
        %v2239 = vlaneseq
        %v2240 = vshrl.u32 %v2239, 7
        %v2241 = vsub.s32 %v1631, %v2240
        %v2242 = vrot.slane %v2102, %v2241
        %v2243 = vsel %vm1636, %v2242, %v2238
        %v2244 = vlaneseq
        %v2245 = vshrl.u32 %v2244, 7
        %v2246 = vsub.s32 %v1626, %v2245
        %v2247 = vrot.slane %v2105, %v2246
        %v2248 = vlaneseq
        %v2249 = vshrl.u32 %v2248, 7
        %v2250 = vsub.s32 %v1631, %v2249
        %v2251 = vrot.slane %v2108, %v2250
        %v2252 = vsel %vm1636, %v2251, %v2247
        %v2253 = vsel %vm1773, %v2126, %v2117
        %v2254 = vsel %vm1775, %v2135, %v2253
        %v2255 = vsel %vm1777, %v2144, %v2254
        %v2256 = vsel %vm1779, %v2153, %v2255
        %v2257 = vsel %vm1781, %v2162, %v2256
        %v2258 = vsel %vm1783, %v2171, %v2257
        %v2259 = vsel %vm1785, %v2180, %v2258
        %v2260 = vsel %vm1773, %v2198, %v2189
        %v2261 = vsel %vm1775, %v2207, %v2260
        %v2262 = vsel %vm1777, %v2216, %v2261
        %v2263 = vsel %vm1779, %v2225, %v2262
        %v2264 = vsel %vm1781, %v2234, %v2263
        %v2265 = vsel %vm1783, %v2243, %v2264
        %v2266 = vsel %vm1785, %v2252, %v2265
        %v2269 = vsel %vm1796, %v2259, 0.0
        %2270 = vadd.xlane.f32.xlu0 %v2269
        %v2271 = vpop.xlane.xlu0 %2270
        %v2272 = vsel %vm1796, %v2266, 0.0
        %2273 = vadd.xlane.f32.xlu0 %v2272
        %v2274 = vpop.xlane.xlu0 %2273
        %v2275 = vrcp.pop %v2271
        %v2276 = vrcp.pop %v2274
        %v2279 = vlaneseq
        %v2280 = vshrl.u32 %v2279, 7
        %v2281 = vsub.s32 0, %v2280
        %v2282 = vrot.slane %v2275, %v2281
        %v2283 = vlaneseq
        %v2284 = vshrl.u32 %v2283, 7
        %v2285 = vsub.s32 1, %v2284
        %v2286 = vrot.slane %v2275, %v2285
        %v2287 = vlaneseq
        %v2288 = vshrl.u32 %v2287, 7
        %v2289 = vsub.s32 2, %v2288
        %v2290 = vrot.slane %v2275, %v2289
        %v2291 = vlaneseq
        %v2292 = vshrl.u32 %v2291, 7
        %v2293 = vsub.s32 3, %v2292
        %v2294 = vrot.slane %v2275, %v2293
        %v2295 = vlaneseq
        %v2296 = vshrl.u32 %v2295, 7
        %v2297 = vsub.s32 4, %v2296
        %v2298 = vrot.slane %v2275, %v2297
        %v2299 = vlaneseq
        %v2300 = vshrl.u32 %v2299, 7
        %v2301 = vsub.s32 5, %v2300
        %v2302 = vrot.slane %v2275, %v2301
        %v2303 = vlaneseq
        %v2304 = vshrl.u32 %v2303, 7
        %v2305 = vsub.s32 6, %v2304
        %v2306 = vrot.slane %v2275, %v2305
        %v2307 = vlaneseq
        %v2308 = vshrl.u32 %v2307, 7
        %v2309 = vsub.s32 7, %v2308
        %v2310 = vrot.slane %v2275, %v2309
        %v2311 = vlaneseq
        %v2312 = vshrl.u32 %v2311, 7
        %v2313 = vsub.s32 0, %v2312
        %v2314 = vrot.slane %v2276, %v2313
        %v2315 = vlaneseq
        %v2316 = vshrl.u32 %v2315, 7
        %v2317 = vsub.s32 1, %v2316
        %v2318 = vrot.slane %v2276, %v2317
        %v2319 = vlaneseq
        %v2320 = vshrl.u32 %v2319, 7
        %v2321 = vsub.s32 2, %v2320
        %v2322 = vrot.slane %v2276, %v2321
        %v2323 = vlaneseq
        %v2324 = vshrl.u32 %v2323, 7
        %v2325 = vsub.s32 3, %v2324
        %v2326 = vrot.slane %v2276, %v2325
        %v2327 = vlaneseq
        %v2328 = vshrl.u32 %v2327, 7
        %v2329 = vsub.s32 4, %v2328
        %v2330 = vrot.slane %v2276, %v2329
        %v2331 = vlaneseq
        %v2332 = vshrl.u32 %v2331, 7
        %v2333 = vsub.s32 5, %v2332
        %v2334 = vrot.slane %v2276, %v2333
        %v2335 = vlaneseq
        %v2336 = vshrl.u32 %v2335, 7
        %v2337 = vsub.s32 6, %v2336
        %v2338 = vrot.slane %v2276, %v2337
        %v2339 = vlaneseq
        %v2340 = vshrl.u32 %v2339, 7
        %v2341 = vsub.s32 7, %v2340
        %v2342 = vrot.slane %v2276, %v2341
        %v2359 = vmul.f32 %v1918, %v2282
        %v2360 = vmul.f32 %v1920, %v2282
        %v2361 = vmul.f32 %v1922, %v2286
        %v2362 = vmul.f32 %v1924, %v2286
        %v2363 = vmul.f32 %v1926, %v2290
        %v2364 = vmul.f32 %v1928, %v2290
        %v2365 = vmul.f32 %v1930, %v2294
        %v2366 = vmul.f32 %v1932, %v2294
        %v2367 = vmul.f32 %v1934, %v2298
        %v2368 = vmul.f32 %v1936, %v2298
        %v2369 = vmul.f32 %v1938, %v2302
        %v2370 = vmul.f32 %v1940, %v2302
        %v2371 = vmul.f32 %v1942, %v2306
        %v2372 = vmul.f32 %v1944, %v2306
        %v2373 = vmul.f32 %v1946, %v2310
        %v2374 = vmul.f32 %v1948, %v2310
        %v2375 = vmul.f32 %v1950, %v2314
        %v2376 = vmul.f32 %v1952, %v2314
        %v2377 = vmul.f32 %v1954, %v2318
        %v2378 = vmul.f32 %v1956, %v2318
        %v2379 = vmul.f32 %v1958, %v2322
        %v2380 = vmul.f32 %v1960, %v2322
        %v2381 = vmul.f32 %v1962, %v2326
        %v2382 = vmul.f32 %v1964, %v2326
        %v2383 = vmul.f32 %v1966, %v2330
        %v2384 = vmul.f32 %v1968, %v2330
        %v2385 = vmul.f32 %v1970, %v2334
        %v2386 = vmul.f32 %v1972, %v2334
        %v2387 = vmul.f32 %v1974, %v2338
        %v2388 = vmul.f32 %v1976, %v2338
        %v2389 = vmul.f32 %v1978, %v2342
        %v2390 = vmul.f32 %v1980, %v2342
        %v2391 = vunpack.c.l.bf16 %v760
        %v2392 = vunpack.c.l.bf16 %v761
        %v2393 = vunpack.c.l.bf16 %v762
        %v2394 = vunpack.c.l.bf16 %v763
        %v2395 = vunpack.c.l.bf16 %v764
        %v2396 = vunpack.c.l.bf16 %v765
        %v2397 = vunpack.c.l.bf16 %v766
        %v2398 = vunpack.c.l.bf16 %v767
        %v2399 = vunpack.c.l.bf16 %v768
        %v2400 = vunpack.c.l.bf16 %v769
        %v2401 = vunpack.c.l.bf16 %v770
        %v2402 = vunpack.c.l.bf16 %v771
        %v2403 = vunpack.c.l.bf16 %v772
        %v2404 = vunpack.c.l.bf16 %v773
        %v2405 = vunpack.c.l.bf16 %v774
        %v2406 = vunpack.c.l.bf16 %v775
        %v2407 = vunpack.c.l.bf16 %v776
        %v2408 = vunpack.c.l.bf16 %v777
        %v2409 = vunpack.c.l.bf16 %v778
        %v2410 = vunpack.c.l.bf16 %v779
        %v2411 = vunpack.c.l.bf16 %v780
        %v2412 = vunpack.c.l.bf16 %v781
        %v2413 = vunpack.c.l.bf16 %v782
        %v2414 = vunpack.c.l.bf16 %v783
        %v2415 = vunpack.c.l.bf16 %v784
        %v2416 = vunpack.c.l.bf16 %v785
        %v2417 = vunpack.c.l.bf16 %v786
        %v2418 = vunpack.c.l.bf16 %v787
        %v2419 = vunpack.c.l.bf16 %v788
        %v2420 = vunpack.c.l.bf16 %v789
        %v2421 = vunpack.c.l.bf16 %v790
        %v2422 = vunpack.c.l.bf16 %v791
        %2424 = vset.pattern.permute.xlu0 0
        %2425 = vperm.xlu0 %2424, %v2359
        %v2426 = vpop.permute.xlu0 %2425
        %2429 = vset.pattern.permute.xlu0 0
        %2430 = vperm.xlu0 %2429, %v2360
        %v2431 = vpop.permute.xlu0 %2430
        %2434 = vset.pattern.permute.xlu0 0
        %2435 = vperm.xlu0 %2434, %v2361
        %v2436 = vpop.permute.xlu0 %2435
        %2439 = vset.pattern.permute.xlu0 0
        %2440 = vperm.xlu0 %2439, %v2362
        %v2441 = vpop.permute.xlu0 %2440
        %2444 = vset.pattern.permute.xlu0 0
        %2445 = vperm.xlu0 %2444, %v2363
        %v2446 = vpop.permute.xlu0 %2445
        %2449 = vset.pattern.permute.xlu0 0
        %2450 = vperm.xlu0 %2449, %v2364
        %v2451 = vpop.permute.xlu0 %2450
        %2454 = vset.pattern.permute.xlu0 0
        %2455 = vperm.xlu0 %2454, %v2365
        %v2456 = vpop.permute.xlu0 %2455
        %2459 = vset.pattern.permute.xlu0 0
        %2460 = vperm.xlu0 %2459, %v2366
        %v2461 = vpop.permute.xlu0 %2460
        %2464 = vset.pattern.permute.xlu0 0
        %2465 = vperm.xlu0 %2464, %v2367
        %v2466 = vpop.permute.xlu0 %2465
        %2469 = vset.pattern.permute.xlu0 0
        %2470 = vperm.xlu0 %2469, %v2368
        %v2471 = vpop.permute.xlu0 %2470
        %2474 = vset.pattern.permute.xlu0 0
        %2475 = vperm.xlu0 %2474, %v2369
        %v2476 = vpop.permute.xlu0 %2475
        %2479 = vset.pattern.permute.xlu0 0
        %2480 = vperm.xlu0 %2479, %v2370
        %v2481 = vpop.permute.xlu0 %2480
        %2484 = vset.pattern.permute.xlu0 0
        %2485 = vperm.xlu0 %2484, %v2371
        %v2486 = vpop.permute.xlu0 %2485
        %2489 = vset.pattern.permute.xlu0 0
        %2490 = vperm.xlu0 %2489, %v2372
        %v2491 = vpop.permute.xlu0 %2490
        %2494 = vset.pattern.permute.xlu0 0
        %2495 = vperm.xlu0 %2494, %v2373
        %v2496 = vpop.permute.xlu0 %2495
        %2499 = vset.pattern.permute.xlu0 0
        %2500 = vperm.xlu0 %2499, %v2374
        %v2501 = vpop.permute.xlu0 %2500
        %2504 = vset.pattern.permute.xlu0 0
        %2505 = vperm.xlu0 %2504, %v2375
        %v2506 = vpop.permute.xlu0 %2505
        %2509 = vset.pattern.permute.xlu0 0
        %2510 = vperm.xlu0 %2509, %v2376
        %v2511 = vpop.permute.xlu0 %2510
        %2514 = vset.pattern.permute.xlu0 0
        %2515 = vperm.xlu0 %2514, %v2377
        %v2516 = vpop.permute.xlu0 %2515
        %2519 = vset.pattern.permute.xlu0 0
        %2520 = vperm.xlu0 %2519, %v2378
        %v2521 = vpop.permute.xlu0 %2520
        %2524 = vset.pattern.permute.xlu0 0
        %2525 = vperm.xlu0 %2524, %v2379
        %v2526 = vpop.permute.xlu0 %2525
        %2529 = vset.pattern.permute.xlu0 0
        %2530 = vperm.xlu0 %2529, %v2380
        %v2531 = vpop.permute.xlu0 %2530
        %2534 = vset.pattern.permute.xlu0 0
        %2535 = vperm.xlu0 %2534, %v2381
        %v2536 = vpop.permute.xlu0 %2535
        %2539 = vset.pattern.permute.xlu0 0
        %2540 = vperm.xlu0 %2539, %v2382
        %v2541 = vpop.permute.xlu0 %2540
        %2544 = vset.pattern.permute.xlu0 0
        %2545 = vperm.xlu0 %2544, %v2383
        %v2546 = vpop.permute.xlu0 %2545
        %2549 = vset.pattern.permute.xlu0 0
        %2550 = vperm.xlu0 %2549, %v2384
        %v2551 = vpop.permute.xlu0 %2550
        %2554 = vset.pattern.permute.xlu0 0
        %2555 = vperm.xlu0 %2554, %v2385
        %v2556 = vpop.permute.xlu0 %2555
        %2559 = vset.pattern.permute.xlu0 0
        %2560 = vperm.xlu0 %2559, %v2386
        %v2561 = vpop.permute.xlu0 %2560
        %2564 = vset.pattern.permute.xlu0 0
        %2565 = vperm.xlu0 %2564, %v2387
        %v2566 = vpop.permute.xlu0 %2565
        %2569 = vset.pattern.permute.xlu0 0
        %2570 = vperm.xlu0 %2569, %v2388
        %v2571 = vpop.permute.xlu0 %2570
        %2574 = vset.pattern.permute.xlu0 0
        %2575 = vperm.xlu0 %2574, %v2389
        %v2576 = vpop.permute.xlu0 %2575
        %2579 = vset.pattern.permute.xlu0 0
        %2580 = vperm.xlu0 %2579, %v2390
        %v2581 = vpop.permute.xlu0 %2580
        %v2583 = vmul.f32 %v2426, %v2391
        %v2584 = vmul.f32 %v2431, %v2392
        %v2585 = vmul.f32 %v2436, %v2393
        %v2586 = vmul.f32 %v2441, %v2394
        %v2587 = vmul.f32 %v2446, %v2395
        %v2588 = vmul.f32 %v2451, %v2396
        %v2589 = vmul.f32 %v2456, %v2397
        %v2590 = vmul.f32 %v2461, %v2398
        %v2591 = vmul.f32 %v2466, %v2399
        %v2592 = vmul.f32 %v2471, %v2400
        %v2593 = vmul.f32 %v2476, %v2401
        %v2594 = vmul.f32 %v2481, %v2402
        %v2595 = vmul.f32 %v2486, %v2403
        %v2596 = vmul.f32 %v2491, %v2404
        %v2597 = vmul.f32 %v2496, %v2405
        %v2598 = vmul.f32 %v2501, %v2406
        %v2599 = vmul.f32 %v2506, %v2407
        %v2600 = vmul.f32 %v2511, %v2408
        %v2601 = vmul.f32 %v2516, %v2409
        %v2602 = vmul.f32 %v2521, %v2410
        %v2603 = vmul.f32 %v2526, %v2411
        %v2604 = vmul.f32 %v2531, %v2412
        %v2605 = vmul.f32 %v2536, %v2413
        %v2606 = vmul.f32 %v2541, %v2414
        %v2607 = vmul.f32 %v2546, %v2415
        %v2608 = vmul.f32 %v2551, %v2416
        %v2609 = vmul.f32 %v2556, %v2417
        %v2610 = vmul.f32 %v2561, %v2418
        %v2611 = vmul.f32 %v2566, %v2419
        %v2612 = vmul.f32 %v2571, %v2420
        %v2613 = vmul.f32 %v2576, %v2421
        %v2614 = vmul.f32 %v2581, %v2422
        %v2615 = vadd.f32 %v2583, %v2584
        %v2616 = vrot.slane %v2615, 4
        %v2617 = vadd.f32 %v2615, %v2616
        %v2618 = vrot.slane %v2617, 2
        %v2619 = vadd.f32 %v2617, %v2618
        %v2620 = vrot.slane %v2619, 1
        %v2621 = vadd.f32 %v2619, %v2620
        %v2622 = vadd.f32 %v2585, %v2586
        %v2623 = vrot.slane %v2622, 4
        %v2624 = vadd.f32 %v2622, %v2623
        %v2625 = vrot.slane %v2624, 2
        %v2626 = vadd.f32 %v2624, %v2625
        %v2627 = vrot.slane %v2626, 1
        %v2628 = vadd.f32 %v2626, %v2627
        %v2629 = vadd.f32 %v2587, %v2588
        %v2630 = vrot.slane %v2629, 4
        %v2631 = vadd.f32 %v2629, %v2630
        %v2632 = vrot.slane %v2631, 2
        %v2633 = vadd.f32 %v2631, %v2632
        %v2634 = vrot.slane %v2633, 1
        %v2635 = vadd.f32 %v2633, %v2634
        %v2636 = vadd.f32 %v2589, %v2590
        %v2637 = vrot.slane %v2636, 4
        %v2638 = vadd.f32 %v2636, %v2637
        %v2639 = vrot.slane %v2638, 2
        %v2640 = vadd.f32 %v2638, %v2639
        %v2641 = vrot.slane %v2640, 1
        %v2642 = vadd.f32 %v2640, %v2641
        %v2643 = vadd.f32 %v2591, %v2592
        %v2644 = vrot.slane %v2643, 4
        %v2645 = vadd.f32 %v2643, %v2644
        %v2646 = vrot.slane %v2645, 2
        %v2647 = vadd.f32 %v2645, %v2646
        %v2648 = vrot.slane %v2647, 1
        %v2649 = vadd.f32 %v2647, %v2648
        %v2650 = vadd.f32 %v2593, %v2594
        %v2651 = vrot.slane %v2650, 4
        %v2652 = vadd.f32 %v2650, %v2651
        %v2653 = vrot.slane %v2652, 2
        %v2654 = vadd.f32 %v2652, %v2653
        %v2655 = vrot.slane %v2654, 1
        %v2656 = vadd.f32 %v2654, %v2655
        %v2657 = vadd.f32 %v2595, %v2596
        %v2658 = vrot.slane %v2657, 4
        %v2659 = vadd.f32 %v2657, %v2658
        %v2660 = vrot.slane %v2659, 2
        %v2661 = vadd.f32 %v2659, %v2660
        %v2662 = vrot.slane %v2661, 1
        %v2663 = vadd.f32 %v2661, %v2662
        %v2664 = vadd.f32 %v2597, %v2598
        %v2665 = vrot.slane %v2664, 4
        %v2666 = vadd.f32 %v2664, %v2665
        %v2667 = vrot.slane %v2666, 2
        %v2668 = vadd.f32 %v2666, %v2667
        %v2669 = vrot.slane %v2668, 1
        %v2670 = vadd.f32 %v2668, %v2669
        %v2671 = vadd.f32 %v2599, %v2600
        %v2672 = vrot.slane %v2671, 4
        %v2673 = vadd.f32 %v2671, %v2672
        %v2674 = vrot.slane %v2673, 2
        %v2675 = vadd.f32 %v2673, %v2674
        %v2676 = vrot.slane %v2675, 1
        %v2677 = vadd.f32 %v2675, %v2676
        %v2678 = vadd.f32 %v2601, %v2602
        %v2679 = vrot.slane %v2678, 4
        %v2680 = vadd.f32 %v2678, %v2679
        %v2681 = vrot.slane %v2680, 2
        %v2682 = vadd.f32 %v2680, %v2681
        %v2683 = vrot.slane %v2682, 1
        %v2684 = vadd.f32 %v2682, %v2683
        %v2685 = vadd.f32 %v2603, %v2604
        %v2686 = vrot.slane %v2685, 4
        %v2687 = vadd.f32 %v2685, %v2686
        %v2688 = vrot.slane %v2687, 2
        %v2689 = vadd.f32 %v2687, %v2688
        %v2690 = vrot.slane %v2689, 1
        %v2691 = vadd.f32 %v2689, %v2690
        %v2692 = vadd.f32 %v2605, %v2606
        %v2693 = vrot.slane %v2692, 4
        %v2694 = vadd.f32 %v2692, %v2693
        %v2695 = vrot.slane %v2694, 2
        %v2696 = vadd.f32 %v2694, %v2695
        %v2697 = vrot.slane %v2696, 1
        %v2698 = vadd.f32 %v2696, %v2697
        %v2699 = vadd.f32 %v2607, %v2608
        %v2700 = vrot.slane %v2699, 4
        %v2701 = vadd.f32 %v2699, %v2700
        %v2702 = vrot.slane %v2701, 2
        %v2703 = vadd.f32 %v2701, %v2702
        %v2704 = vrot.slane %v2703, 1
        %v2705 = vadd.f32 %v2703, %v2704
        %v2706 = vadd.f32 %v2609, %v2610
        %v2707 = vrot.slane %v2706, 4
        %v2708 = vadd.f32 %v2706, %v2707
        %v2709 = vrot.slane %v2708, 2
        %v2710 = vadd.f32 %v2708, %v2709
        %v2711 = vrot.slane %v2710, 1
        %v2712 = vadd.f32 %v2710, %v2711
        %v2713 = vadd.f32 %v2611, %v2612
        %v2714 = vrot.slane %v2713, 4
        %v2715 = vadd.f32 %v2713, %v2714
        %v2716 = vrot.slane %v2715, 2
        %v2717 = vadd.f32 %v2715, %v2716
        %v2718 = vrot.slane %v2717, 1
        %v2719 = vadd.f32 %v2717, %v2718
        %v2720 = vadd.f32 %v2613, %v2614
        %v2721 = vrot.slane %v2720, 4
        %v2722 = vadd.f32 %v2720, %v2721
        %v2723 = vrot.slane %v2722, 2
        %v2724 = vadd.f32 %v2722, %v2723
        %v2725 = vrot.slane %v2724, 1
        %v2726 = vadd.f32 %v2724, %v2725
        %v2727 = vld [vmem:[#allocation15] sm:$0xf]
        %v2728 = vld [vmem:[#allocation15 + $0x4] sm:$0xf]
        %v2729 = vld [vmem:[#allocation15 + $0x8] sm:$0xf]
        %v2730 = vld [vmem:[#allocation15 + $0xc] sm:$0xf]
        %v2731 = vld [vmem:[#allocation15 + $0x10] sm:$0xf]
        %v2732 = vld [vmem:[#allocation15 + $0x14] sm:$0xf]
        %v2733 = vld [vmem:[#allocation15 + $0x18] sm:$0xf]
        %v2734 = vld [vmem:[#allocation15 + $0x1c] sm:$0xf]
        %v2735 = vld [vmem:[#allocation15 + $0x20] sm:$0xf]
        %v2736 = vld [vmem:[#allocation15 + $0x24] sm:$0xf]
        %v2737 = vld [vmem:[#allocation15 + $0x28] sm:$0xf]
        %v2738 = vld [vmem:[#allocation15 + $0x2c] sm:$0xf]
        %v2739 = vld [vmem:[#allocation15 + $0x30] sm:$0xf]
        %v2740 = vld [vmem:[#allocation15 + $0x34] sm:$0xf]
        %v2741 = vld [vmem:[#allocation15 + $0x38] sm:$0xf]
        %v2742 = vld [vmem:[#allocation15 + $0x3c] sm:$0xf]
        %v2743 = vld [vmem:[#allocation17] sm:$0x1]
        %v2745 = vlaneseq
        %v2746 = vshrl.u32 %v2745, 7
        %v2747 = vsub.s32 0, %v2746
        %v2748 = vrot.slane %v2743, %v2747
        %v2766 = vunpack.c.l.b16 %v2727
        %v2767 = vunpack.c.l.b16 %v2728
        %v2768 = vunpack.c.l.b16 %v2729
        %v2769 = vunpack.c.l.b16 %v2730
        %v2770 = vunpack.c.l.b16 %v2731
        %v2771 = vunpack.c.l.b16 %v2732
        %v2772 = vunpack.c.l.b16 %v2733
        %v2773 = vunpack.c.l.b16 %v2734
        %v2774 = vunpack.c.l.b16 %v2735
        %v2775 = vunpack.c.l.b16 %v2736
        %v2776 = vunpack.c.l.b16 %v2737
        %v2777 = vunpack.c.l.b16 %v2738
        %v2778 = vunpack.c.l.b16 %v2739
        %v2779 = vunpack.c.l.b16 %v2740
        %v2780 = vunpack.c.l.b16 %v2741
        %v2781 = vunpack.c.l.b16 %v2742
        %v2782 = vpack.c.b16 %v2767, %v2766
        %v2783 = vpack.c.b16 %v2769, %v2768
        %v2784 = vpack.c.b16 %v2771, %v2770
        %v2785 = vpack.c.b16 %v2773, %v2772
        %v2786 = vpack.c.b16 %v2775, %v2774
        %v2787 = vpack.c.b16 %v2777, %v2776
        %v2788 = vpack.c.b16 %v2779, %v2778
        %v2789 = vpack.c.b16 %v2781, %v2780
        %2798 = vmatprep.subr.bf16.mxu0 0
        %2799 = vmatpush1.bf16.msra.mxu0 %v2782
        %2800 = vmatprep.subr.bf16.mxu0 0
        %2801 = vmatpush1.bf16.msra.mxu0 %v2783
        %2802 = vmatprep.subr.bf16.mxu0 0
        %2803 = vmatpush1.bf16.msra.mxu0 %v2784
        %2804 = vmatprep.subr.bf16.mxu0 0
        %2805 = vmatpush1.bf16.msra.mxu0 %v2785
        %2806 = vmatprep.subr.bf16.mxu0 0
        %2807 = vmatpush1.bf16.msra.mxu0 %v2786
        %2808 = vmatprep.subr.bf16.mxu0 0
        %2809 = vmatpush1.bf16.msra.mxu0 %v2787
        %2810 = vmatprep.subr.bf16.mxu0 0
        %2811 = vmatpush1.bf16.msra.mxu0 %v2788
        %2812 = vmatprep.subr.bf16.mxu0 0
        %2813 = vmatpush1.bf16.msra.mxu0 %v2789
        %2814 = vmatprep.subr.bf16.mxu0 0
        %2815 = vmatpush1.bf16.msra.mxu0 0
        %2816 = vmatprep.subr.bf16.mxu0 0
        %2817 = vmatpush1.bf16.msra.mxu0 0
        %2818 = vmatprep.subr.bf16.mxu0 0
        %2819 = vmatpush1.bf16.msra.mxu0 0
        %2820 = vmatprep.subr.bf16.mxu0 0
        %2821 = vmatpush1.bf16.msra.mxu0 0
        %2822 = vmatprep.subr.bf16.mxu0 0
        %2823 = vmatpush1.bf16.msra.mxu0 0
        %2824 = vmatprep.subr.bf16.mxu0 0
        %2825 = vmatpush1.bf16.msra.mxu0 0
        %2826 = vmatprep.subr.bf16.mxu0 0
        %2827 = vmatpush1.bf16.msra.mxu0 0
        %2828 = vmatprep.subr.bf16.mxu0 0
        %2829 = vmatpush1.bf16.msra.mxu0 0
        %2830 = vmatprep.mubr.bf16.mxu0 0
        %2831 = vmatmul.mubr.bf16.gmra.mrb[0].mxu0 %v1181
        %v2832 = vpop.f32.mrb[0].mxu0
        %v2833 = vadd.f32 %v2748, %v2832
        %v2834 = vpop.f32.mrb[0].mxu0
        %v2835 = vpop.f32.mrb[0].mxu0
        %v2836 = vadd.f32 %v2748, %v2835
        %v2837 = vpop.f32.mrb[0].mxu0
        %2838 = vdwg.mxu0
        %v2839 = vmax.f32 %v2833, 0.0
        %v2840 = vmax.f32 %v2836, 0.0
        %v2841 = vpack.c.bf16 %v2621, %v2621
        %v2842 = vpack.c.bf16 %v2628, %v2628
        %v2843 = vpack.c.bf16 %v2635, %v2635
        %v2844 = vpack.c.bf16 %v2642, %v2642
        %v2845 = vpack.c.bf16 %v2649, %v2649
        %v2846 = vpack.c.bf16 %v2656, %v2656
        %v2847 = vpack.c.bf16 %v2663, %v2663
        %v2848 = vpack.c.bf16 %v2670, %v2670
        %v2849 = vpack.c.bf16 %v2677, %v2677
        %v2850 = vpack.c.bf16 %v2684, %v2684
        %v2851 = vpack.c.bf16 %v2691, %v2691
        %v2852 = vpack.c.bf16 %v2698, %v2698
        %v2853 = vpack.c.bf16 %v2705, %v2705
        %v2854 = vpack.c.bf16 %v2712, %v2712
        %v2855 = vpack.c.bf16 %v2719, %v2719
        %v2856 = vpack.c.bf16 %v2726, %v2726
        %v2857 = vld [vmem:[#allocation18] sm:$0xf]
        %v2858 = vld [vmem:[#allocation18 + $0x4] sm:$0xf]
        %v2859 = vld [vmem:[#allocation18 + $0x8] sm:$0xf]
        %v2860 = vld [vmem:[#allocation18 + $0xc] sm:$0xf]
        %v2861 = vld [vmem:[#allocation18 + $0x10] sm:$0xf]
        %v2862 = vld [vmem:[#allocation18 + $0x14] sm:$0xf]
        %v2863 = vld [vmem:[#allocation18 + $0x18] sm:$0xf]
        %v2864 = vld [vmem:[#allocation18 + $0x1c] sm:$0xf]
        %v2865 = vld [vmem:[#allocation18 + $0x20] sm:$0xf]
        %v2866 = vld [vmem:[#allocation18 + $0x24] sm:$0xf]
        %v2867 = vld [vmem:[#allocation18 + $0x28] sm:$0xf]
        %v2868 = vld [vmem:[#allocation18 + $0x2c] sm:$0xf]
        %v2869 = vld [vmem:[#allocation18 + $0x30] sm:$0xf]
        %v2870 = vld [vmem:[#allocation18 + $0x34] sm:$0xf]
        %v2871 = vld [vmem:[#allocation18 + $0x38] sm:$0xf]
        %v2872 = vld [vmem:[#allocation18 + $0x3c] sm:$0xf]
        %v2873 = vld [vmem:[#allocation20] sm:$0x1]
        %v2875 = vlaneseq
        %v2876 = vshrl.u32 %v2875, 7
        %v2877 = vsub.s32 0, %v2876
        %v2878 = vrot.slane %v2873, %v2877
        %v2896 = vunpack.c.l.b16 %v2841
        %v2897 = vunpack.c.l.b16 %v2842
        %v2898 = vunpack.c.l.b16 %v2843
        %v2899 = vunpack.c.l.b16 %v2844
        %v2900 = vunpack.c.l.b16 %v2845
        %v2901 = vunpack.c.l.b16 %v2846
        %v2902 = vunpack.c.l.b16 %v2847
        %v2903 = vunpack.c.l.b16 %v2848
        %v2904 = vunpack.c.l.b16 %v2849
        %v2905 = vunpack.c.l.b16 %v2850
        %v2906 = vunpack.c.l.b16 %v2851
        %v2907 = vunpack.c.l.b16 %v2852
        %v2908 = vunpack.c.l.b16 %v2853
        %v2909 = vunpack.c.l.b16 %v2854
        %v2910 = vunpack.c.l.b16 %v2855
        %v2911 = vunpack.c.l.b16 %v2856
        %v2912 = vsel %vm1773, %v2897, %v2896
        %v2913 = vsel %vm1775, %v2898, %v2912
        %v2914 = vsel %vm1777, %v2899, %v2913
        %v2915 = vsel %vm1779, %v2900, %v2914
        %v2916 = vsel %vm1781, %v2901, %v2915
        %v2917 = vsel %vm1783, %v2902, %v2916
        %v2918 = vsel %vm1785, %v2903, %v2917
        %v2919 = vsel %vm1773, %v2905, %v2904
        %v2920 = vsel %vm1775, %v2906, %v2919
        %v2921 = vsel %vm1777, %v2907, %v2920
        %v2922 = vsel %vm1779, %v2908, %v2921
        %v2923 = vsel %vm1781, %v2909, %v2922
        %v2924 = vsel %vm1783, %v2910, %v2923
        %v2925 = vsel %vm1785, %v2911, %v2924
        %v2926 = vpack.c.b16 %v2925, %v2918
        %v2944 = vunpack.c.l.b16 %v2857
        %v2945 = vunpack.c.l.b16 %v2858
        %v2946 = vunpack.c.l.b16 %v2859
        %v2947 = vunpack.c.l.b16 %v2860
        %v2948 = vunpack.c.l.b16 %v2861
        %v2949 = vunpack.c.l.b16 %v2862
        %v2950 = vunpack.c.l.b16 %v2863
        %v2951 = vunpack.c.l.b16 %v2864
        %v2952 = vunpack.c.l.b16 %v2865
        %v2953 = vunpack.c.l.b16 %v2866
        %v2954 = vunpack.c.l.b16 %v2867
        %v2955 = vunpack.c.l.b16 %v2868
        %v2956 = vunpack.c.l.b16 %v2869
        %v2957 = vunpack.c.l.b16 %v2870
        %v2958 = vunpack.c.l.b16 %v2871
        %v2959 = vunpack.c.l.b16 %v2872
        %v2960 = vpack.c.b16 %v2945, %v2944
        %v2961 = vpack.c.b16 %v2947, %v2946
        %v2962 = vpack.c.b16 %v2949, %v2948
        %v2963 = vpack.c.b16 %v2951, %v2950
        %v2964 = vpack.c.b16 %v2953, %v2952
        %v2965 = vpack.c.b16 %v2955, %v2954
        %v2966 = vpack.c.b16 %v2957, %v2956
        %v2967 = vpack.c.b16 %v2959, %v2958
        %2976 = vmatprep.subr.bf16.mxu0 0
        %2977 = vmatpush1.bf16.msra.mxu0 %v2960
        %2978 = vmatprep.subr.bf16.mxu0 0
        %2979 = vmatpush1.bf16.msra.mxu0 %v2961
        %2980 = vmatprep.subr.bf16.mxu0 0
        %2981 = vmatpush1.bf16.msra.mxu0 %v2962
        %2982 = vmatprep.subr.bf16.mxu0 0
        %2983 = vmatpush1.bf16.msra.mxu0 %v2963
        %2984 = vmatprep.subr.bf16.mxu0 0
        %2985 = vmatpush1.bf16.msra.mxu0 %v2964
        %2986 = vmatprep.subr.bf16.mxu0 0
        %2987 = vmatpush1.bf16.msra.mxu0 %v2965
        %2988 = vmatprep.subr.bf16.mxu0 0
        %2989 = vmatpush1.bf16.msra.mxu0 %v2966
        %2990 = vmatprep.subr.bf16.mxu0 0
        %2991 = vmatpush1.bf16.msra.mxu0 %v2967
        %2992 = vmatprep.subr.bf16.mxu0 0
        %2993 = vmatpush1.bf16.msra.mxu0 0
        %2994 = vmatprep.subr.bf16.mxu0 0
        %2995 = vmatpush1.bf16.msra.mxu0 0
        %2996 = vmatprep.subr.bf16.mxu0 0
        %2997 = vmatpush1.bf16.msra.mxu0 0
        %2998 = vmatprep.subr.bf16.mxu0 0
        %2999 = vmatpush1.bf16.msra.mxu0 0
        %3000 = vmatprep.subr.bf16.mxu0 0
        %3001 = vmatpush1.bf16.msra.mxu0 0
        %3002 = vmatprep.subr.bf16.mxu0 0
        %3003 = vmatpush1.bf16.msra.mxu0 0
        %3004 = vmatprep.subr.bf16.mxu0 0
        %3005 = vmatpush1.bf16.msra.mxu0 0
        %3006 = vmatprep.subr.bf16.mxu0 0
        %3007 = vmatpush1.bf16.msra.mxu0 0
        %3008 = vmatprep.mubr.bf16.mxu0 0
        %3009 = vmatmul.mubr.bf16.gmra.mrb[0].mxu0 %v2926
        %v3010 = vpop.f32.mrb[0].mxu0
        %v3011 = vadd.f32 %v2878, %v3010
        %v3012 = vpop.f32.mrb[0].mxu0
        %v3013 = vpop.f32.mrb[0].mxu0
        %v3014 = vadd.f32 %v2878, %v3013
        %v3015 = vpop.f32.mrb[0].mxu0
        %3016 = vdwg.mxu0
        %v3017 = vmax.f32 %v3011, 0.0
        %v3018 = vmax.f32 %v3014, 0.0
        %v3019 = vmul.f32 %v2839, %v3017
        %v3020 = vmul.f32 %v2840, %v3018
        %v3021 = vpack.c.bf16 %v3020, %v3019
        %v3022 = vld [vmem:[#allocation21] sm:$0xff]
        %v3023 = vld [vmem:[#allocation21 + $0x8] sm:$0xff]
        %v3024 = vld [vmem:[#allocation21 + $0x10] sm:$0xff]
        %v3025 = vld [vmem:[#allocation21 + $0x18] sm:$0xff]
        %v3026 = vld [vmem:[#allocation21 + $0x20] sm:$0xff]
        %v3027 = vld [vmem:[#allocation21 + $0x28] sm:$0xff]
        %v3028 = vld [vmem:[#allocation21 + $0x30] sm:$0xff]
        %v3029 = vld [vmem:[#allocation21 + $0x38] sm:$0xff]
        %v3030 = vld [vmem:[#allocation21 + $0x40] sm:$0xff]
        %v3031 = vld [vmem:[#allocation21 + $0x48] sm:$0xff]
        %v3032 = vld [vmem:[#allocation21 + $0x50] sm:$0xff]
        %v3033 = vld [vmem:[#allocation21 + $0x58] sm:$0xff]
        %v3034 = vld [vmem:[#allocation21 + $0x60] sm:$0xff]
        %v3035 = vld [vmem:[#allocation21 + $0x68] sm:$0xff]
        %v3036 = vld [vmem:[#allocation21 + $0x70] sm:$0xff]
        %v3037 = vld [vmem:[#allocation21 + $0x78] sm:$0xff]
        %v3038 = vld [vmem:[#allocation23] sm:$0x3]
        %v3040 = vlaneseq
        %v3041 = vshrl.u32 %v3040, 7
        %v3042 = vsub.s32 0, %v3041
        %v3043 = vrot.slane %v3038, %v3042
        %v3044 = vlaneseq
        %v3045 = vshrl.u32 %v3044, 7
        %v3046 = vsub.s32 1, %v3045
        %v3047 = vrot.slane %v3038, %v3046
        %v3066 = vunpack.c.l.b16 %v3022
        %v3067 = vunpack.c.h.b16 %v3022
        %v3068 = vunpack.c.l.b16 %v3023
        %v3069 = vunpack.c.h.b16 %v3023
        %v3070 = vunpack.c.l.b16 %v3024
        %v3071 = vunpack.c.h.b16 %v3024
        %v3072 = vunpack.c.l.b16 %v3025
        %v3073 = vunpack.c.h.b16 %v3025
        %v3074 = vunpack.c.l.b16 %v3026
        %v3075 = vunpack.c.h.b16 %v3026
        %v3076 = vunpack.c.l.b16 %v3027
        %v3077 = vunpack.c.h.b16 %v3027
        %v3078 = vunpack.c.l.b16 %v3028
        %v3079 = vunpack.c.h.b16 %v3028
        %v3080 = vunpack.c.l.b16 %v3029
        %v3081 = vunpack.c.h.b16 %v3029
        %v3082 = vunpack.c.l.b16 %v3030
        %v3083 = vunpack.c.h.b16 %v3030
        %v3084 = vunpack.c.l.b16 %v3031
        %v3085 = vunpack.c.h.b16 %v3031
        %v3086 = vunpack.c.l.b16 %v3032
        %v3087 = vunpack.c.h.b16 %v3032
        %v3088 = vunpack.c.l.b16 %v3033
        %v3089 = vunpack.c.h.b16 %v3033
        %v3090 = vunpack.c.l.b16 %v3034
        %v3091 = vunpack.c.h.b16 %v3034
        %v3092 = vunpack.c.l.b16 %v3035
        %v3093 = vunpack.c.h.b16 %v3035
        %v3094 = vunpack.c.l.b16 %v3036
        %v3095 = vunpack.c.h.b16 %v3036
        %v3096 = vunpack.c.l.b16 %v3037
        %v3097 = vunpack.c.h.b16 %v3037
        %v3098 = vpack.c.b16 %v3068, %v3066
        %v3099 = vpack.c.b16 %v3069, %v3067
        %v3100 = vpack.c.b16 %v3072, %v3070
        %v3101 = vpack.c.b16 %v3073, %v3071
        %v3102 = vpack.c.b16 %v3076, %v3074
        %v3103 = vpack.c.b16 %v3077, %v3075
        %v3104 = vpack.c.b16 %v3080, %v3078
        %v3105 = vpack.c.b16 %v3081, %v3079
        %v3106 = vpack.c.b16 %v3084, %v3082
        %v3107 = vpack.c.b16 %v3085, %v3083
        %v3108 = vpack.c.b16 %v3088, %v3086
        %v3109 = vpack.c.b16 %v3089, %v3087
        %v3110 = vpack.c.b16 %v3092, %v3090
        %v3111 = vpack.c.b16 %v3093, %v3091
        %v3112 = vpack.c.b16 %v3096, %v3094
        %v3113 = vpack.c.b16 %v3097, %v3095
        %3130 = vmatprep.subr.bf16.mxu0 %v3099
        %3131 = vmatpush1.bf16.msra.mxu0 %v3098
        %3132 = vmatprep.subr.bf16.mxu0 %v3101
        %3133 = vmatpush1.bf16.msra.mxu0 %v3100
        %3134 = vmatprep.subr.bf16.mxu0 %v3103
        %3135 = vmatpush1.bf16.msra.mxu0 %v3102
        %3136 = vmatprep.subr.bf16.mxu0 %v3105
        %3137 = vmatpush1.bf16.msra.mxu0 %v3104
        %3138 = vmatprep.subr.bf16.mxu0 %v3107
        %3139 = vmatpush1.bf16.msra.mxu0 %v3106
        %3140 = vmatprep.subr.bf16.mxu0 %v3109
        %3141 = vmatpush1.bf16.msra.mxu0 %v3108
        %3142 = vmatprep.subr.bf16.mxu0 %v3111
        %3143 = vmatpush1.bf16.msra.mxu0 %v3110
        %3144 = vmatprep.subr.bf16.mxu0 %v3113
        %3145 = vmatpush1.bf16.msra.mxu0 %v3112
        %3146 = vmatprep.subr.bf16.mxu0 0
        %3147 = vmatpush1.bf16.msra.mxu0 0
        %3148 = vmatprep.subr.bf16.mxu0 0
        %3149 = vmatpush1.bf16.msra.mxu0 0
        %3150 = vmatprep.subr.bf16.mxu0 0
        %3151 = vmatpush1.bf16.msra.mxu0 0
        %3152 = vmatprep.subr.bf16.mxu0 0
        %3153 = vmatpush1.bf16.msra.mxu0 0
        %3154 = vmatprep.subr.bf16.mxu0 0
        %3155 = vmatpush1.bf16.msra.mxu0 0
        %3156 = vmatprep.subr.bf16.mxu0 0
        %3157 = vmatpush1.bf16.msra.mxu0 0
        %3158 = vmatprep.subr.bf16.mxu0 0
        %3159 = vmatpush1.bf16.msra.mxu0 0
        %3160 = vmatprep.subr.bf16.mxu0 0
        %3161 = vmatpush1.bf16.msra.mxu0 0
        %3162 = vmatprep.mubr.bf16.mxu0 0
        %3163 = vmatmul.mubr.bf16.gmra.mrb[0].mxu0 %v3021
        %v3164 = vpop.f32.mrb[0].mxu0
        %v3165 = vadd.f32 %v3043, %v3164
        %v3166 = vpop.f32.mrb[0].mxu0
        %v3167 = vadd.f32 %v3047, %v3166
        %v3168 = vpop.f32.mrb[0].mxu0
        %v3169 = vadd.f32 %v3043, %v3168
        %v3170 = vpop.f32.mrb[0].mxu0
        %v3171 = vadd.f32 %v3047, %v3170
        %3172 = vdwg.mxu0
        %v3173 = vmax.f32 %v3165, 0.0
        %v3174 = vmax.f32 %v3167, 0.0
        %v3175 = vmax.f32 %v3169, 0.0
        %v3176 = vmax.f32 %v3171, 0.0
        %v3177 = vpack.c.bf16 %v3175, %v3173
        %v3178 = vpack.c.bf16 %v3176, %v3174
        %v3179 = vld [vmem:[#allocation24] sm:$0xf]
        %v3180 = vld [vmem:[#allocation24 + $0x4] sm:$0xf]
        %v3181 = vld [vmem:[#allocation24 + $0x8] sm:$0xf]
        %v3182 = vld [vmem:[#allocation24 + $0xc] sm:$0xf]
        %v3183 = vld [vmem:[#allocation24 + $0x10] sm:$0xf]
        %v3184 = vld [vmem:[#allocation24 + $0x14] sm:$0xf]
        %v3185 = vld [vmem:[#allocation24 + $0x18] sm:$0xf]
        %v3186 = vld [vmem:[#allocation24 + $0x1c] sm:$0xf]
        %v3187 = vld [vmem:[#allocation24 + $0x20] sm:$0xf]
        %v3188 = vld [vmem:[#allocation24 + $0x24] sm:$0xf]
        %v3189 = vld [vmem:[#allocation24 + $0x28] sm:$0xf]
        %v3190 = vld [vmem:[#allocation24 + $0x2c] sm:$0xf]
        %v3191 = vld [vmem:[#allocation24 + $0x30] sm:$0xf]
        %v3192 = vld [vmem:[#allocation24 + $0x34] sm:$0xf]
        %v3193 = vld [vmem:[#allocation24 + $0x38] sm:$0xf]
        %v3194 = vld [vmem:[#allocation24 + $0x3c] sm:$0xf]
        %v3195 = vld [vmem:[#allocation24 + $0x40] sm:$0xf]
        %v3196 = vld [vmem:[#allocation24 + $0x44] sm:$0xf]
        %v3197 = vld [vmem:[#allocation24 + $0x48] sm:$0xf]
        %v3198 = vld [vmem:[#allocation24 + $0x4c] sm:$0xf]
        %v3199 = vld [vmem:[#allocation24 + $0x50] sm:$0xf]
        %v3200 = vld [vmem:[#allocation24 + $0x54] sm:$0xf]
        %v3201 = vld [vmem:[#allocation24 + $0x58] sm:$0xf]
        %v3202 = vld [vmem:[#allocation24 + $0x5c] sm:$0xf]
        %v3203 = vld [vmem:[#allocation24 + $0x60] sm:$0xf]
        %v3204 = vld [vmem:[#allocation24 + $0x64] sm:$0xf]
        %v3205 = vld [vmem:[#allocation24 + $0x68] sm:$0xf]
        %v3206 = vld [vmem:[#allocation24 + $0x6c] sm:$0xf]
        %v3207 = vld [vmem:[#allocation24 + $0x70] sm:$0xf]
        %v3208 = vld [vmem:[#allocation24 + $0x74] sm:$0xf]
        %v3209 = vld [vmem:[#allocation24 + $0x78] sm:$0xf]
        %v3210 = vld [vmem:[#allocation24 + $0x7c] sm:$0xf]
        %v3211 = vld [vmem:[#allocation26] sm:$0x1]
        %v3213 = vlaneseq
        %v3214 = vshrl.u32 %v3213, 7
        %v3215 = vsub.s32 0, %v3214
        %v3216 = vrot.slane %v3211, %v3215
        %v3250 = vunpack.c.l.b16 %v3179
        %v3251 = vunpack.c.l.b16 %v3180
        %v3252 = vunpack.c.l.b16 %v3181
        %v3253 = vunpack.c.l.b16 %v3182
        %v3254 = vunpack.c.l.b16 %v3183
        %v3255 = vunpack.c.l.b16 %v3184
        %v3256 = vunpack.c.l.b16 %v3185
        %v3257 = vunpack.c.l.b16 %v3186
        %v3258 = vunpack.c.l.b16 %v3187
        %v3259 = vunpack.c.l.b16 %v3188
        %v3260 = vunpack.c.l.b16 %v3189
        %v3261 = vunpack.c.l.b16 %v3190
        %v3262 = vunpack.c.l.b16 %v3191
        %v3263 = vunpack.c.l.b16 %v3192
        %v3264 = vunpack.c.l.b16 %v3193
        %v3265 = vunpack.c.l.b16 %v3194
        %v3266 = vunpack.c.l.b16 %v3195
        %v3267 = vunpack.c.l.b16 %v3196
        %v3268 = vunpack.c.l.b16 %v3197
        %v3269 = vunpack.c.l.b16 %v3198
        %v3270 = vunpack.c.l.b16 %v3199
        %v3271 = vunpack.c.l.b16 %v3200
        %v3272 = vunpack.c.l.b16 %v3201
        %v3273 = vunpack.c.l.b16 %v3202
        %v3274 = vunpack.c.l.b16 %v3203
        %v3275 = vunpack.c.l.b16 %v3204
        %v3276 = vunpack.c.l.b16 %v3205
        %v3277 = vunpack.c.l.b16 %v3206
        %v3278 = vunpack.c.l.b16 %v3207
        %v3279 = vunpack.c.l.b16 %v3208
        %v3280 = vunpack.c.l.b16 %v3209
        %v3281 = vunpack.c.l.b16 %v3210
        %v3282 = vpack.c.b16 %v3251, %v3250
        %v3283 = vpack.c.b16 %v3253, %v3252
        %v3284 = vpack.c.b16 %v3255, %v3254
        %v3285 = vpack.c.b16 %v3257, %v3256
        %v3286 = vpack.c.b16 %v3259, %v3258
        %v3287 = vpack.c.b16 %v3261, %v3260
        %v3288 = vpack.c.b16 %v3263, %v3262
        %v3289 = vpack.c.b16 %v3265, %v3264
        %v3290 = vpack.c.b16 %v3267, %v3266
        %v3291 = vpack.c.b16 %v3269, %v3268
        %v3292 = vpack.c.b16 %v3271, %v3270
        %v3293 = vpack.c.b16 %v3273, %v3272
        %v3294 = vpack.c.b16 %v3275, %v3274
        %v3295 = vpack.c.b16 %v3277, %v3276
        %v3296 = vpack.c.b16 %v3279, %v3278
        %v3297 = vpack.c.b16 %v3281, %v3280
        %3314 = vmatprep.subr.bf16.mxu0 0
        %3315 = vmatpush1.bf16.msra.mxu0 %v3282
        %3316 = vmatprep.subr.bf16.mxu0 0
        %3317 = vmatpush1.bf16.msra.mxu0 %v3283
        %3318 = vmatprep.subr.bf16.mxu0 0
        %3319 = vmatpush1.bf16.msra.mxu0 %v3284
        %3320 = vmatprep.subr.bf16.mxu0 0
        %3321 = vmatpush1.bf16.msra.mxu0 %v3285
        %3322 = vmatprep.subr.bf16.mxu0 0
        %3323 = vmatpush1.bf16.msra.mxu0 %v3286
        %3324 = vmatprep.subr.bf16.mxu0 0
        %3325 = vmatpush1.bf16.msra.mxu0 %v3287
        %3326 = vmatprep.subr.bf16.mxu0 0
        %3327 = vmatpush1.bf16.msra.mxu0 %v3288
        %3328 = vmatprep.subr.bf16.mxu0 0
        %3329 = vmatpush1.bf16.msra.mxu0 %v3289
        %3330 = vmatprep.subr.bf16.mxu0 0
        %3331 = vmatpush1.bf16.msra.mxu0 %v3290
        %3332 = vmatprep.subr.bf16.mxu0 0
        %3333 = vmatpush1.bf16.msra.mxu0 %v3291
        %3334 = vmatprep.subr.bf16.mxu0 0
        %3335 = vmatpush1.bf16.msra.mxu0 %v3292
        %3336 = vmatprep.subr.bf16.mxu0 0
        %3337 = vmatpush1.bf16.msra.mxu0 %v3293
        %3338 = vmatprep.subr.bf16.mxu0 0
        %3339 = vmatpush1.bf16.msra.mxu0 %v3294
        %3340 = vmatprep.subr.bf16.mxu0 0
        %3341 = vmatpush1.bf16.msra.mxu0 %v3295
        %3342 = vmatprep.subr.bf16.mxu0 0
        %3343 = vmatpush1.bf16.msra.mxu0 %v3296
        %3344 = vmatprep.subr.bf16.mxu0 0
        %3345 = vmatpush1.bf16.msra.mxu0 %v3297
        %3346 = vmatprep.mubr.bf16.mxu0 %v3178
        %3347 = vmatmul.mubr.bf16.gmra.mrb[0].mxu0 %v3177
        %v3348 = vpop.f32.mrb[0].mxu0
        %v3349 = vadd.f32 %v3216, %v3348
        %v3350 = vpop.f32.mrb[0].mxu0
        %v3351 = vpop.f32.mrb[0].mxu0
        %v3352 = vadd.f32 %v3216, %v3351
        %v3353 = vpop.f32.mrb[0].mxu0
        %3354 = vdwg.mxu0
        %3355 = vst [vmem:[%s755] sm:$0xff] %v3349
        %3356 = vst [vmem:[%s755 + $0x8] sm:$0xff] %v3352
        %s3357 = sand.u32 %s397, 1
        %s3358 = scalar_lea.sflag [#allocation5], %s3357
        %s3359 = sand.u32 %s397, 1
        %s3360 = smul.addr %s3359, 16
        %s3361 = scalar_lea.vmem [#allocation27], %s3360
        // Predicated region
        $region145: #{_lambda_.3} parent=83 // pred_check
          %p3362 = pneg %p407
        $region146: #{_lambda_.3} parent=83 // pred_check_branch
          %3364 = sbr.rel (%p3362) target = $region148
        $region147: #{_lambda_.3} parent=83 // pred_region
          %s3365 = smul.u32 2, %s43
          %s3367 = ssub.s32 256, 256
          %3368 = vsyncadd %s3358, %s3367
          %s3369 = smul.addr %s3365, 128
          %s3370 = scalar_lea.hbm %s16, %s3369
          %s3371 = sshll.u32 %s3361, 4
          %s3372 = int_to_ptr.vmem [resolvable:$true] %s3371
          %3377 = dma.vmem_to_hbm [thread:$0]  %s3372, 256, %s3370, %s3358, 128, 128, 8
        $region148: #{_lambda_.3} parent=83 // pred_fallthru
          _
      $region84: #{_lambda_.3} parent=5 // pred_fallthru
        _
      %p3378 = scmp.le.s32.totalorder 2, %s38
      // Predicated region
      $region149: #{_lambda_.3} parent=5 // pred_check
        %p3379 = pneg %p3378
      $region150: #{_lambda_.3} parent=5 // pred_check_branch
        %3381 = sbr.rel (%p3379) target = $region152
      $region151: #{_lambda_.3} parent=5 // pred_region
        %s3382 = ssub.s32 %s38, 2
        // Predicated region
        $region153: #{_lambda_.3} parent=151 // pred_check
          %p3383 = pneg %p413
        $region154: #{_lambda_.3} parent=151 // pred_check_branch
          %3385 = sbr.rel (%p3383) target = $region156
        $region155: #{_lambda_.3} parent=151 // pred_region
          %s3386 = sand.u32 %s398, 1
          %s3387 = scalar_lea.sflag [#allocation5], %s3386
          %s3388 = sand.u32 %s398, 1
          %s3389 = smul.addr %s3388, 16
          %s3390 = scalar_lea.vmem [#allocation27], %s3389
          %3391 = dma.done %s3387, 256
        $region156: #{_lambda_.3} parent=151 // pred_fallthru
          _
      $region152: #{_lambda_.3} parent=5 // pred_fallthru
        _
    $region6: #{_lambda_.3} parent=1 // loop_footer
      %s42 = sadd.s32 1, %s38
    $region7: #{_lambda_.3} parent=1 // loop_footer_branch
      %37 = sbr.rel target = $region3
    $region8: #{_lambda_.3} parent=1 // loop_exit
      _
    %3392 = vsyncpa [#allocation4], 1
    %s3393 = scalar_lea.sflag [#allocation4], 1
    %3394 = vsyncpa %s3393, 1
    %3395 = vsyncpa [#allocation7], 1
    %s3396 = scalar_lea.sflag [#allocation7], 1
    %3397 = vsyncpa %s3396, 1
    %3398 = vsyncpa [#allocation10], 1
    %3399 = vsyncpa [#allocation13], 1
    %3400 = vsyncpa [#allocation16], 1
    %3401 = vsyncpa [#allocation19], 1
    %3402 = vsyncpa [#allocation22], 1
    %3403 = vsyncpa [#allocation25], 1
    %3404 = vsyncpa [#allocation5], 1
    %s3405 = scalar_lea.sflag [#allocation5], 1
    %3406 = vsyncpa %s3405, 1

</llo_original>
